<compile_context>
chip_gen: v5e
topology: v5e:2x2
jax: 0.10.0
libtpu: 0.0.40
codegen_flags: <defaults>
</compile_context>

<pallas_src>
import functools

import jax
import jax.numpy as jnp
import numpy as np
from jax.experimental import pallas as pl
from jax.experimental.pallas import tpu as pltpu

# ---------------- model hyper-parameters (small, consistent with the module) ---
VOCAB_SIZE = 128
EMBED_DIM = 32          # embedding_dim == d_model (required by the PyTorch forward)
D_MODEL = 32
NUM_HEADS = 4
NUM_LAYERS = 2
DIM_FEEDFORWARD = 2048  # nn.TransformerEncoderLayer default
LN_EPS = 1e-5           # nn.LayerNorm default
FF_CHUNKS = 4           # FFN hidden dim processed in chunks of 512

BATCH = 2
EXTRA = 3               # x[:, 0] selects the first of this axis
SEQ = 8


# ----------------------------- shared helper ----------------------------------
def _layer_norm(x, gamma, beta, eps=LN_EPS):
    mu = jnp.mean(x, axis=-1, keepdims=True)
    var = jnp.mean((x - mu) ** 2, axis=-1, keepdims=True)
    return (x - mu) * jax.lax.rsqrt(var + eps) * gamma + beta


# --------------------------- fused forward kernel ------------------------------
# Packed-vector row layout in `vecs_ref` (per layer, rows 0..8 of 16):
#   0 bq (pre-scaled), 1 bk, 2 bv, 3 bo, 4 g1, 5 be1, 6 b2, 7 g2, 8 be2
def _fused_forward_kernel(idx_ref, emb_ref, wattn_ref, vecs_ref,
                          w1_ref, b1_ref, w2_ref, fcw_ref, fcb_ref, out_ref,
                          *, num_layers, num_heads, seq, ff_chunks):
    vocab, d_model = emb_ref.shape
    dh = d_model // num_heads
    dim_ff = w1_ref.shape[-1]
    chunk = dim_ff // ff_chunks

    # ---- embedding gather as a one-hot bf16 MXU matmul (no dynamic gather) -------
    ids = idx_ref[...]                                                  # (S, 1) i32
    vocab_iota = jax.lax.broadcasted_iota(jnp.int32, (seq, vocab), 1)
    onehot = (vocab_iota == ids).astype(jnp.bfloat16)                   # (S, V) exact 0/1
    x = jnp.dot(onehot, emb_ref[...], preferred_element_type=jnp.float32)  # (S, D) f32

    # ---- per-head lane masks (pure VPU elementwise; replaces lane slicing) -------
    lane = jax.lax.broadcasted_iota(jnp.int32, (1, d_model), 1)
    head_masks = [((lane >= h * dh) & (lane < (h + 1) * dh)).astype(jnp.float32)
                  for h in range(num_heads)]

    for layer in range(num_layers):
        vecs = vecs_ref[layer]                                          # (16, D) f32
        bq, bk, bv, bo = vecs[0:1], vecs[1:2], vecs[2:3], vecs[3:4]
        g1, be1 = vecs[4:5], vecs[5:6]
        b2, g2, be2 = vecs[6:7], vecs[7:8], vecs[8:9]

        # ---- self-attention (post-norm, PyTorch defaults); scale folded in wq/bq --
        xb = x.astype(jnp.bfloat16)
        q = jnp.dot(xb, wattn_ref[layer, 0], preferred_element_type=jnp.float32) + bq
        k = jnp.dot(xb, wattn_ref[layer, 1], preferred_element_type=jnp.float32) + bk
        v = jnp.dot(xb, wattn_ref[layer, 2], preferred_element_type=jnp.float32) + bv
        kb = k.astype(jnp.bfloat16)

        attn = jnp.zeros((seq, d_model), jnp.float32)
        for hm in head_masks:                       # static, unrolled head loop
            qh = (q * hm).astype(jnp.bfloat16)      # zero lanes outside this head
            vh = (v * hm).astype(jnp.bfloat16)
            # q_h @ k_h^T : contraction over D picks up only this head's lanes.
            s = jax.lax.dot_general(qh, kb, (((1,), (1,)), ((), ())),
                                    preferred_element_type=jnp.float32)   # (S, S)
            s = s - jnp.max(s, axis=-1, keepdims=True)
            p = jnp.exp(s)
            p = p * pl.reciprocal(jnp.sum(p, axis=-1, keepdims=True), approx=True)
            # vh is zero outside this head's lanes, so its contribution lands in the
            # head's own output columns -> summation replaces jnp.concatenate.
            attn = attn + jnp.dot(p.astype(jnp.bfloat16), vh,
                                  preferred_element_type=jnp.float32)

        attn = jnp.dot(attn.astype(jnp.bfloat16), wattn_ref[layer, 3],
                       preferred_element_type=jnp.float32) + bo
        x1 = _layer_norm(x + attn, g1, be1)

        # ---- feed-forward, chunked over the hidden dim to bound live vregs --------
        x1b = x1.astype(jnp.bfloat16)
        ff = jnp.zeros((seq, d_model), jnp.float32)
        for c in range(ff_chunks):                  # static, unrolled chunk loop
            lo, hi = c * chunk, (c + 1) * chunk
            h = jnp.dot(x1b, w1_ref[layer, :, lo:hi],
                        preferred_element_type=jnp.float32) + b1_ref[layer, :, lo:hi]
            h = jnp.maximum(h, 0.0).astype(jnp.bfloat16)
            ff = ff + jnp.dot(h, w2_ref[layer, lo:hi, :],
                              preferred_element_type=jnp.float32)
        x = _layer_norm(x1 + ff + b2, g2, be2)

    # ---- final fc: the only HBM output, lane-dense (last dim = 128) ---------------
    out_ref[...] = jnp.dot(x.astype(jnp.bfloat16), fcw_ref[...],
                           preferred_element_type=jnp.float32) + fcb_ref[...]


@jax.jit
def model_forward(x_tokens, kp):
    b, _, s = x_tokens.shape
    # indices = x[:, 0].long(); reshaped to (B*S, 1) for the in-kernel one-hot gather.
    idx = x_tokens[:, 0].astype(jnp.int32).reshape(b * s, 1)

    kernel = functools.partial(_fused_forward_kernel, num_layers=NUM_LAYERS,
                               num_heads=NUM_HEADS, seq=s, ff_chunks=FF_CHUNKS)
    weight_spec = pl.BlockSpec(memory_space=pltpu.MemorySpace.VMEM)  # whole array, resident
    args = (idx, kp["emb"], kp["w_attn"], kp["vecs"],
            kp["w1"], kp["b1"], kp["w2"], kp["fc_w"], kp["fc_b"])

    out = pl.pallas_call(
        kernel,
        out_shape=jax.ShapeDtypeStruct((b * s, VOCAB_SIZE), jnp.float32),
        grid=(b,),                                   # one batch element per grid step
        in_specs=[pl.BlockSpec((s, 1), lambda i: (i, 0))] + [weight_spec] * (len(args) - 1),
        out_specs=pl.BlockSpec((s, VOCAB_SIZE), lambda i: (i, 0)),
        compiler_params=pltpu.CompilerParams(dimension_semantics=("parallel",)),
    )(*args)
    return out.reshape(b, s, VOCAB_SIZE)


# ------------------------------ parameter init ---------------------------------
def init_params(key):
    keys = iter(jax.random.split(key, 8 + 16 * NUM_LAYERS))   # generous; no StopIteration

    def nrm(shape, scale=0.1):
        return (scale * jax.random.normal(next(keys), shape)).astype(jnp.float32)

    params = {"embedding": nrm((VOCAB_SIZE, EMBED_DIM), scale=1.0), "layers": []}
    for _ in range(NUM_LAYERS):
        params["layers"].append({
            "wq": nrm((D_MODEL, D_MODEL)), "bq": nrm((1, D_MODEL), 0.01),
            "wk": nrm((D_MODEL, D_MODEL)), "bk": nrm((1, D_MODEL), 0.01),
            "wv": nrm((D_MODEL, D_MODEL)), "bv": nrm((1, D_MODEL), 0.01),
            "wo": nrm((D_MODEL, D_MODEL)), "bo": nrm((1, D_MODEL), 0.01),
            "g1": jnp.ones((1, D_MODEL), jnp.float32),
            "be1": jnp.zeros((1, D_MODEL), jnp.float32),
            "w1": nrm((D_MODEL, DIM_FEEDFORWARD)),
            "b1": nrm((1, DIM_FEEDFORWARD), 0.01),
            "w2": nrm((DIM_FEEDFORWARD, D_MODEL), 0.02),
            "b2": nrm((1, D_MODEL), 0.01),
            "g2": jnp.ones((1, D_MODEL), jnp.float32),
            "be2": jnp.zeros((1, D_MODEL), jnp.float32),
        })
    params["fc_w"] = nrm((D_MODEL, VOCAB_SIZE))
    params["fc_b"] = jnp.zeros((1, VOCAB_SIZE), jnp.float32)
    return params


def prepare_kernel_params(p):
    """Pack weights for the kernel: fold 1/sqrt(dh) into wq/bq, stack the 4 attention
    weights into one (L,4,D,D) bf16 array, pack the nine (1,D) vectors into one
    (L,16,D) f32 array, cast all MXU weight operands to bf16."""
    scale = 1.0 / float(np.sqrt(D_MODEL // NUM_HEADS))
    ls = p["layers"]

    w_attn = jnp.stack([jnp.stack([lp["wq"] * scale, lp["wk"], lp["wv"], lp["wo"]])
                        for lp in ls]).astype(jnp.bfloat16)              # (L,4,D,D)

    vec_rows = []
    for lp in ls:
        rows = jnp.concatenate([lp["bq"] * scale, lp["bk"], lp["bv"], lp["bo"],
                                lp["g1"], lp["be1"], lp["b2"], lp["g2"], lp["be2"]],
                               axis=0)                                   # (9, D)
        rows = jnp.concatenate([rows, jnp.zeros((16 - rows.shape[0], D_MODEL),
                                                jnp.float32)], axis=0)   # pad -> (16, D)
        vec_rows.append(rows)
    vecs = jnp.stack(vec_rows)                                           # (L,16,D)

    st = lambda name: jnp.stack([lp[name] for lp in ls])
    return {
        "emb": p["embedding"].astype(jnp.bfloat16),
        "w_attn": w_attn,
        "vecs": vecs,
        "w1": st("w1").astype(jnp.bfloat16), "b1": st("b1"),
        "w2": st("w2").astype(jnp.bfloat16),
        "fc_w": p["fc_w"].astype(jnp.bfloat16), "fc_b": p["fc_b"],
    }


# ------------------------------ pure-JAX reference ------------------------------
def ref_forward(x_tokens, p):
    idx = x_tokens[:, 0].astype(jnp.int32)
    h = jnp.take(p["embedding"], idx, axis=0)                 # (B, S, D)
    B, S, D = h.shape
    dh = D // NUM_HEADS
    for lp in p["layers"]:
        q = h @ lp["wq"] + lp["bq"]
        k = h @ lp["wk"] + lp["bk"]
        v = h @ lp["wv"] + lp["bv"]
        q = q.reshape(B, S, NUM_HEADS, dh).transpose(0, 2, 1, 3)
        k = k.reshape(B, S, NUM_HEADS, dh).transpose(0, 2, 1, 3)
        v = v.reshape(B, S, NUM_HEADS, dh).transpose(0, 2, 1, 3)
        s = jnp.einsum("bhqd,bhkd->bhqk", q, k) / np.sqrt(dh)
        pr = jax.nn.softmax(s, axis=-1)
        a = jnp.einsum("bhqk,bhkd->bhqd", pr, v).transpose(0, 2, 1, 3).reshape(B, S, D)
        a = a @ lp["wo"] + lp["bo"]
        x1 = _layer_norm(h + a, lp["g1"], lp["be1"])
        ffn = jnp.maximum(x1 @ lp["w1"] + lp["b1"], 0.0) @ lp["w2"] + lp["b2"]
        h = _layer_norm(x1 + ffn, lp["g2"], lp["be2"])
    return h @ p["fc_w"] + p["fc_b"]


# ------------------------------------ main --------------------------------------
if __name__ == "__main__":
    key = jax.random.PRNGKey(0)
    k_param, k_x = jax.random.split(key)

    params = init_params(k_param)
    kparams = prepare_kernel_params(params)

    # x: (B, EXTRA, S) integer tokens; the model uses only x[:, 0].
    x = jax.random.randint(k_x, (BATCH, EXTRA, SEQ), 0, VOCAB_SIZE, dtype=jnp.int32)

    out = jax.block_until_ready(model_forward(x, kparams))    # (B, S, VOCAB)
    assert out.shape == (BATCH, SEQ, VOCAB_SIZE), out.shape

    with jax.default_matmul_precision("highest"):
        ref = jax.block_until_ready(ref_forward(x, params))

    np.testing.assert_allclose(np.asarray(out), np.asarray(ref), rtol=5e-2, atol=5e-2)
    print("KERNEL_OK")
</pallas_src>

<mosaic_0001>
module attributes {stable_mosaic.version = 11 : i64} {
  func.func @_fused_forward_kernel(%arg0: i32, %arg1: memref<8x1xi32, #tpu.memory_space<vmem>>, %arg2: memref<128x32xbf16, #tpu.memory_space<vmem>>, %arg3: memref<2x4x32x32xbf16, #tpu.memory_space<vmem>>, %arg4: memref<2x16x32xf32, #tpu.memory_space<vmem>>, %arg5: memref<2x32x2048xbf16, #tpu.memory_space<vmem>>, %arg6: memref<2x1x2048xf32, #tpu.memory_space<vmem>>, %arg7: memref<2x2048x32xbf16, #tpu.memory_space<vmem>>, %arg8: memref<32x128xbf16, #tpu.memory_space<vmem>>, %arg9: memref<1x128xf32, #tpu.memory_space<vmem>>, %arg10: memref<8x128xf32, #tpu.memory_space<vmem>>) attributes {dimension_semantics = [#tpu.dimension_semantics<parallel>], iteration_bounds = array<i64: 2>, scalar_prefetch = 0 : i64, scratch_operands = 0 : i64, tpu.core_type = #tpu.core_type<tc>, window_params = [{transform_indices = @transform_0, window_bounds = array<i64: 8, 1>}, {pipeline_mode = #tpu.pipeline_mode<synchronous>, transform_indices = @transform_1, window_bounds = array<i64: 128, 32>}, {pipeline_mode = #tpu.pipeline_mode<synchronous>, transform_indices = @transform_2, window_bounds = array<i64: 2, 4, 32, 32>}, {pipeline_mode = #tpu.pipeline_mode<synchronous>, transform_indices = @transform_3, window_bounds = array<i64: 2, 16, 32>}, {pipeline_mode = #tpu.pipeline_mode<synchronous>, transform_indices = @transform_4, window_bounds = array<i64: 2, 32, 2048>}, {pipeline_mode = #tpu.pipeline_mode<synchronous>, transform_indices = @transform_5, window_bounds = array<i64: 2, 1, 2048>}, {pipeline_mode = #tpu.pipeline_mode<synchronous>, transform_indices = @transform_6, window_bounds = array<i64: 2, 2048, 32>}, {pipeline_mode = #tpu.pipeline_mode<synchronous>, transform_indices = @transform_7, window_bounds = array<i64: 32, 128>}, {pipeline_mode = #tpu.pipeline_mode<synchronous>, transform_indices = @transform_8, window_bounds = array<i64: 1, 128>}, {transform_indices = @transform_9, window_bounds = array<i64: 8, 128>}]} {
    %c0 = arith.constant 0 : index
    %c0_0 = arith.constant 0 : index
    %0 = vector.load %arg1[%c0, %c0_0] : memref<8x1xi32, #tpu.memory_space<vmem>>, vector<8x1xi32>
    %1 = tpu.iota {dimensions = array<i32: 1>} : vector<8x128xi32>
    %2 = vector.broadcast %0 : vector<8x1xi32> to vector<8x128xi32>
    %3 = arith.cmpi eq, %1, %2 : vector<8x128xi32>
    %4 = arith.extui %3 : vector<8x128xi1> to vector<8x128xi32>
    %5 = arith.sitofp %4 : vector<8x128xi32> to vector<8x128xf32>
    %6 = arith.truncf %5 : vector<8x128xf32> to vector<8x128xbf16>
    %c0_1 = arith.constant 0 : index
    %c0_2 = arith.constant 0 : index
    %7 = vector.load %arg2[%c0_1, %c0_2] : memref<128x32xbf16, #tpu.memory_space<vmem>>, vector<128x32xbf16>
    %cst = arith.constant dense<0.000000e+00> : vector<8x32xf32>
    %8 = tpu.matmul %6, %7, %cst {dimension_numbers = #tpu.dot_dimension_numbers<[1], [0], [0], [1], [0, 0, 1, 1], [], []>} : vector<8x128xbf16>, vector<128x32xbf16>, vector<8x32xf32> -> vector<8x32xf32>
    %9 = tpu.iota {dimensions = array<i32: 1>} : vector<1x32xi32>
    %c0_i32 = arith.constant 0 : i32
    %10 = vector.broadcast %c0_i32 : i32 to vector<1x32xi32>
    %11 = arith.cmpi sge, %9, %10 : vector<1x32xi32>
    %c8_i32 = arith.constant 8 : i32
    %12 = vector.broadcast %c8_i32 : i32 to vector<1x32xi32>
    %13 = arith.cmpi slt, %9, %12 : vector<1x32xi32>
    %14 = arith.andi %11, %13 : vector<1x32xi1>
    %15 = arith.extui %14 : vector<1x32xi1> to vector<1x32xi32>
    %16 = arith.sitofp %15 : vector<1x32xi32> to vector<1x32xf32>
    %c8_i32_3 = arith.constant 8 : i32
    %17 = vector.broadcast %c8_i32_3 : i32 to vector<1x32xi32>
    %18 = arith.cmpi sge, %9, %17 : vector<1x32xi32>
    %c16_i32 = arith.constant 16 : i32
    %19 = vector.broadcast %c16_i32 : i32 to vector<1x32xi32>
    %20 = arith.cmpi slt, %9, %19 : vector<1x32xi32>
    %21 = arith.andi %18, %20 : vector<1x32xi1>
    %22 = arith.extui %21 : vector<1x32xi1> to vector<1x32xi32>
    %23 = arith.sitofp %22 : vector<1x32xi32> to vector<1x32xf32>
    %c16_i32_4 = arith.constant 16 : i32
    %24 = vector.broadcast %c16_i32_4 : i32 to vector<1x32xi32>
    %25 = arith.cmpi sge, %9, %24 : vector<1x32xi32>
    %c24_i32 = arith.constant 24 : i32
    %26 = vector.broadcast %c24_i32 : i32 to vector<1x32xi32>
    %27 = arith.cmpi slt, %9, %26 : vector<1x32xi32>
    %28 = arith.andi %25, %27 : vector<1x32xi1>
    %29 = arith.extui %28 : vector<1x32xi1> to vector<1x32xi32>
    %30 = arith.sitofp %29 : vector<1x32xi32> to vector<1x32xf32>
    %c24_i32_5 = arith.constant 24 : i32
    %31 = vector.broadcast %c24_i32_5 : i32 to vector<1x32xi32>
    %32 = arith.cmpi sge, %9, %31 : vector<1x32xi32>
    %c32_i32 = arith.constant 32 : i32
    %33 = vector.broadcast %c32_i32 : i32 to vector<1x32xi32>
    %34 = arith.cmpi slt, %9, %33 : vector<1x32xi32>
    %35 = arith.andi %32, %34 : vector<1x32xi1>
    %36 = arith.extui %35 : vector<1x32xi1> to vector<1x32xi32>
    %37 = arith.sitofp %36 : vector<1x32xi32> to vector<1x32xf32>
    %c0_6 = arith.constant 0 : index
    %c0_7 = arith.constant 0 : index
    %c0_8 = arith.constant 0 : index
    %38 = vector.load %arg4[%c0_6, %c0_7, %c0_8] : memref<2x16x32xf32, #tpu.memory_space<vmem>>, vector<1x16x32xf32>
    %39 = vector.shape_cast %38 : vector<1x16x32xf32> to vector<16x32xf32>
    %40 = vector.extract_strided_slice %39 {offsets = [0, 0], sizes = [1, 32], strides = [1, 1]} : vector<16x32xf32> to vector<1x32xf32>
    %41 = vector.extract_strided_slice %39 {offsets = [1, 0], sizes = [1, 32], strides = [1, 1]} : vector<16x32xf32> to vector<1x32xf32>
    %42 = vector.extract_strided_slice %39 {offsets = [2, 0], sizes = [1, 32], strides = [1, 1]} : vector<16x32xf32> to vector<1x32xf32>
    %43 = vector.extract_strided_slice %39 {offsets = [3, 0], sizes = [1, 32], strides = [1, 1]} : vector<16x32xf32> to vector<1x32xf32>
    %44 = vector.extract_strided_slice %39 {offsets = [4, 0], sizes = [1, 32], strides = [1, 1]} : vector<16x32xf32> to vector<1x32xf32>
    %45 = vector.extract_strided_slice %39 {offsets = [5, 0], sizes = [1, 32], strides = [1, 1]} : vector<16x32xf32> to vector<1x32xf32>
    %46 = vector.extract_strided_slice %39 {offsets = [6, 0], sizes = [1, 32], strides = [1, 1]} : vector<16x32xf32> to vector<1x32xf32>
    %47 = vector.extract_strided_slice %39 {offsets = [7, 0], sizes = [1, 32], strides = [1, 1]} : vector<16x32xf32> to vector<1x32xf32>
    %48 = vector.extract_strided_slice %39 {offsets = [8, 0], sizes = [1, 32], strides = [1, 1]} : vector<16x32xf32> to vector<1x32xf32>
    %49 = arith.truncf %8 : vector<8x32xf32> to vector<8x32xbf16>
    %c0_9 = arith.constant 0 : index
    %c0_10 = arith.constant 0 : index
    %c0_11 = arith.constant 0 : index
    %c0_12 = arith.constant 0 : index
    %50 = vector.load %arg3[%c0_9, %c0_10, %c0_11, %c0_12] : memref<2x4x32x32xbf16, #tpu.memory_space<vmem>>, vector<1x1x32x32xbf16>
    %51 = vector.shape_cast %50 : vector<1x1x32x32xbf16> to vector<32x32xbf16>
    %cst_13 = arith.constant dense<0.000000e+00> : vector<8x32xf32>
    %52 = tpu.matmul %49, %51, %cst_13 {dimension_numbers = #tpu.dot_dimension_numbers<[1], [0], [0], [1], [0, 0, 1, 1], [], []>} : vector<8x32xbf16>, vector<32x32xbf16>, vector<8x32xf32> -> vector<8x32xf32>
    %53 = vector.broadcast %40 : vector<1x32xf32> to vector<8x32xf32>
    %54 = arith.addf %52, %53 : vector<8x32xf32>
    %c0_14 = arith.constant 0 : index
    %c1 = arith.constant 1 : index
    %c0_15 = arith.constant 0 : index
    %c0_16 = arith.constant 0 : index
    %55 = vector.load %arg3[%c0_14, %c1, %c0_15, %c0_16] : memref<2x4x32x32xbf16, #tpu.memory_space<vmem>>, vector<1x1x32x32xbf16>
    %56 = vector.shape_cast %55 : vector<1x1x32x32xbf16> to vector<32x32xbf16>
    %cst_17 = arith.constant dense<0.000000e+00> : vector<8x32xf32>
    %57 = tpu.matmul %49, %56, %cst_17 {dimension_numbers = #tpu.dot_dimension_numbers<[1], [0], [0], [1], [0, 0, 1, 1], [], []>} : vector<8x32xbf16>, vector<32x32xbf16>, vector<8x32xf32> -> vector<8x32xf32>
    %58 = vector.broadcast %41 : vector<1x32xf32> to vector<8x32xf32>
    %59 = arith.addf %57, %58 : vector<8x32xf32>
    %c0_18 = arith.constant 0 : index
    %c2 = arith.constant 2 : index
    %c0_19 = arith.constant 0 : index
    %c0_20 = arith.constant 0 : index
    %60 = vector.load %arg3[%c0_18, %c2, %c0_19, %c0_20] : memref<2x4x32x32xbf16, #tpu.memory_space<vmem>>, vector<1x1x32x32xbf16>
    %61 = vector.shape_cast %60 : vector<1x1x32x32xbf16> to vector<32x32xbf16>
    %cst_21 = arith.constant dense<0.000000e+00> : vector<8x32xf32>
    %62 = tpu.matmul %49, %61, %cst_21 {dimension_numbers = #tpu.dot_dimension_numbers<[1], [0], [0], [1], [0, 0, 1, 1], [], []>} : vector<8x32xbf16>, vector<32x32xbf16>, vector<8x32xf32> -> vector<8x32xf32>
    %63 = vector.broadcast %42 : vector<1x32xf32> to vector<8x32xf32>
    %64 = arith.addf %62, %63 : vector<8x32xf32>
    %65 = arith.truncf %59 : vector<8x32xf32> to vector<8x32xbf16>
    %cst_22 = arith.constant 0.000000e+00 : f32
    %66 = vector.broadcast %cst_22 : f32 to vector<8x32xf32>
    %67 = vector.broadcast %16 : vector<1x32xf32> to vector<8x32xf32>
    %68 = arith.mulf %54, %67 : vector<8x32xf32>
    %69 = arith.truncf %68 : vector<8x32xf32> to vector<8x32xbf16>
    %70 = vector.broadcast %16 : vector<1x32xf32> to vector<8x32xf32>
    %71 = arith.mulf %64, %70 : vector<8x32xf32>
    %72 = arith.truncf %71 : vector<8x32xf32> to vector<8x32xbf16>
    %cst_23 = arith.constant dense<0.000000e+00> : vector<8x8xf32>
    %73 = tpu.matmul %69, %65, %cst_23 {dimension_numbers = #tpu.dot_dimension_numbers<[1], [1], [0], [0], [0, 0, 1, 0], [], []>} : vector<8x32xbf16>, vector<8x32xbf16>, vector<8x8xf32> -> vector<8x8xf32>
    %cst_24 = arith.constant dense<0xFF800000> : vector<8xf32>
    %74 = vector.multi_reduction <maximumf>, %73, %cst_24 [1] : vector<8x8xf32> to vector<8xf32>
    %75 = vector.shape_cast %74 : vector<8xf32> to vector<8x1xf32>
    %76 = vector.broadcast %75 : vector<8x1xf32> to vector<8x8xf32>
    %77 = arith.subf %73, %76 : vector<8x8xf32>
    %78 = math.exp %77 : vector<8x8xf32>
    %cst_25 = arith.constant dense<0.000000e+00> : vector<8xf32>
    %79 = vector.multi_reduction <add>, %78, %cst_25 [1] : vector<8x8xf32> to vector<8xf32>
    %80 = vector.shape_cast %79 : vector<8xf32> to vector<8x1xf32>
    %81 = tpu.reciprocal %80 {approx = true} : vector<8x1xf32> -> vector<8x1xf32>
    %82 = vector.broadcast %81 : vector<8x1xf32> to vector<8x8xf32>
    %83 = arith.mulf %78, %82 : vector<8x8xf32>
    %84 = arith.truncf %83 : vector<8x8xf32> to vector<8x8xbf16>
    %cst_26 = arith.constant dense<0.000000e+00> : vector<8x32xf32>
    %85 = tpu.matmul %84, %72, %cst_26 {dimension_numbers = #tpu.dot_dimension_numbers<[1], [0], [0], [1], [0, 0, 1, 1], [], []>} : vector<8x8xbf16>, vector<8x32xbf16>, vector<8x32xf32> -> vector<8x32xf32>
    %86 = arith.addf %66, %85 : vector<8x32xf32>
    %87 = vector.broadcast %23 : vector<1x32xf32> to vector<8x32xf32>
    %88 = arith.mulf %54, %87 : vector<8x32xf32>
    %89 = arith.truncf %88 : vector<8x32xf32> to vector<8x32xbf16>
    %90 = vector.broadcast %23 : vector<1x32xf32> to vector<8x32xf32>
    %91 = arith.mulf %64, %90 : vector<8x32xf32>
    %92 = arith.truncf %91 : vector<8x32xf32> to vector<8x32xbf16>
    %cst_27 = arith.constant dense<0.000000e+00> : vector<8x8xf32>
    %93 = tpu.matmul %89, %65, %cst_27 {dimension_numbers = #tpu.dot_dimension_numbers<[1], [1], [0], [0], [0, 0, 1, 0], [], []>} : vector<8x32xbf16>, vector<8x32xbf16>, vector<8x8xf32> -> vector<8x8xf32>
    %cst_28 = arith.constant dense<0xFF800000> : vector<8xf32>
    %94 = vector.multi_reduction <maximumf>, %93, %cst_28 [1] : vector<8x8xf32> to vector<8xf32>
    %95 = vector.shape_cast %94 : vector<8xf32> to vector<8x1xf32>
    %96 = vector.broadcast %95 : vector<8x1xf32> to vector<8x8xf32>
    %97 = arith.subf %93, %96 : vector<8x8xf32>
    %98 = math.exp %97 : vector<8x8xf32>
    %cst_29 = arith.constant dense<0.000000e+00> : vector<8xf32>
    %99 = vector.multi_reduction <add>, %98, %cst_29 [1] : vector<8x8xf32> to vector<8xf32>
    %100 = vector.shape_cast %99 : vector<8xf32> to vector<8x1xf32>
    %101 = tpu.reciprocal %100 {approx = true} : vector<8x1xf32> -> vector<8x1xf32>
    %102 = vector.broadcast %101 : vector<8x1xf32> to vector<8x8xf32>
    %103 = arith.mulf %98, %102 : vector<8x8xf32>
    %104 = arith.truncf %103 : vector<8x8xf32> to vector<8x8xbf16>
    %cst_30 = arith.constant dense<0.000000e+00> : vector<8x32xf32>
    %105 = tpu.matmul %104, %92, %cst_30 {dimension_numbers = #tpu.dot_dimension_numbers<[1], [0], [0], [1], [0, 0, 1, 1], [], []>} : vector<8x8xbf16>, vector<8x32xbf16>, vector<8x32xf32> -> vector<8x32xf32>
    %106 = arith.addf %86, %105 : vector<8x32xf32>
    %107 = vector.broadcast %30 : vector<1x32xf32> to vector<8x32xf32>
    %108 = arith.mulf %54, %107 : vector<8x32xf32>
    %109 = arith.truncf %108 : vector<8x32xf32> to vector<8x32xbf16>
    %110 = vector.broadcast %30 : vector<1x32xf32> to vector<8x32xf32>
    %111 = arith.mulf %64, %110 : vector<8x32xf32>
    %112 = arith.truncf %111 : vector<8x32xf32> to vector<8x32xbf16>
    %cst_31 = arith.constant dense<0.000000e+00> : vector<8x8xf32>
    %113 = tpu.matmul %109, %65, %cst_31 {dimension_numbers = #tpu.dot_dimension_numbers<[1], [1], [0], [0], [0, 0, 1, 0], [], []>} : vector<8x32xbf16>, vector<8x32xbf16>, vector<8x8xf32> -> vector<8x8xf32>
    %cst_32 = arith.constant dense<0xFF800000> : vector<8xf32>
    %114 = vector.multi_reduction <maximumf>, %113, %cst_32 [1] : vector<8x8xf32> to vector<8xf32>
    %115 = vector.shape_cast %114 : vector<8xf32> to vector<8x1xf32>
    %116 = vector.broadcast %115 : vector<8x1xf32> to vector<8x8xf32>
    %117 = arith.subf %113, %116 : vector<8x8xf32>
    %118 = math.exp %117 : vector<8x8xf32>
    %cst_33 = arith.constant dense<0.000000e+00> : vector<8xf32>
    %119 = vector.multi_reduction <add>, %118, %cst_33 [1] : vector<8x8xf32> to vector<8xf32>
    %120 = vector.shape_cast %119 : vector<8xf32> to vector<8x1xf32>
    %121 = tpu.reciprocal %120 {approx = true} : vector<8x1xf32> -> vector<8x1xf32>
    %122 = vector.broadcast %121 : vector<8x1xf32> to vector<8x8xf32>
    %123 = arith.mulf %118, %122 : vector<8x8xf32>
    %124 = arith.truncf %123 : vector<8x8xf32> to vector<8x8xbf16>
    %cst_34 = arith.constant dense<0.000000e+00> : vector<8x32xf32>
    %125 = tpu.matmul %124, %112, %cst_34 {dimension_numbers = #tpu.dot_dimension_numbers<[1], [0], [0], [1], [0, 0, 1, 1], [], []>} : vector<8x8xbf16>, vector<8x32xbf16>, vector<8x32xf32> -> vector<8x32xf32>
    %126 = arith.addf %106, %125 : vector<8x32xf32>
    %127 = vector.broadcast %37 : vector<1x32xf32> to vector<8x32xf32>
    %128 = arith.mulf %54, %127 : vector<8x32xf32>
    %129 = arith.truncf %128 : vector<8x32xf32> to vector<8x32xbf16>
    %130 = vector.broadcast %37 : vector<1x32xf32> to vector<8x32xf32>
    %131 = arith.mulf %64, %130 : vector<8x32xf32>
    %132 = arith.truncf %131 : vector<8x32xf32> to vector<8x32xbf16>
    %cst_35 = arith.constant dense<0.000000e+00> : vector<8x8xf32>
    %133 = tpu.matmul %129, %65, %cst_35 {dimension_numbers = #tpu.dot_dimension_numbers<[1], [1], [0], [0], [0, 0, 1, 0], [], []>} : vector<8x32xbf16>, vector<8x32xbf16>, vector<8x8xf32> -> vector<8x8xf32>
    %cst_36 = arith.constant dense<0xFF800000> : vector<8xf32>
    %134 = vector.multi_reduction <maximumf>, %133, %cst_36 [1] : vector<8x8xf32> to vector<8xf32>
    %135 = vector.shape_cast %134 : vector<8xf32> to vector<8x1xf32>
    %136 = vector.broadcast %135 : vector<8x1xf32> to vector<8x8xf32>
    %137 = arith.subf %133, %136 : vector<8x8xf32>
    %138 = math.exp %137 : vector<8x8xf32>
    %cst_37 = arith.constant dense<0.000000e+00> : vector<8xf32>
    %139 = vector.multi_reduction <add>, %138, %cst_37 [1] : vector<8x8xf32> to vector<8xf32>
    %140 = vector.shape_cast %139 : vector<8xf32> to vector<8x1xf32>
    %141 = tpu.reciprocal %140 {approx = true} : vector<8x1xf32> -> vector<8x1xf32>
    %142 = vector.broadcast %141 : vector<8x1xf32> to vector<8x8xf32>
    %143 = arith.mulf %138, %142 : vector<8x8xf32>
    %144 = arith.truncf %143 : vector<8x8xf32> to vector<8x8xbf16>
    %cst_38 = arith.constant dense<0.000000e+00> : vector<8x32xf32>
    %145 = tpu.matmul %144, %132, %cst_38 {dimension_numbers = #tpu.dot_dimension_numbers<[1], [0], [0], [1], [0, 0, 1, 1], [], []>} : vector<8x8xbf16>, vector<8x32xbf16>, vector<8x32xf32> -> vector<8x32xf32>
    %146 = arith.addf %126, %145 : vector<8x32xf32>
    %147 = arith.truncf %146 : vector<8x32xf32> to vector<8x32xbf16>
    %c0_39 = arith.constant 0 : index
    %c3 = arith.constant 3 : index
    %c0_40 = arith.constant 0 : index
    %c0_41 = arith.constant 0 : index
    %148 = vector.load %arg3[%c0_39, %c3, %c0_40, %c0_41] : memref<2x4x32x32xbf16, #tpu.memory_space<vmem>>, vector<1x1x32x32xbf16>
    %149 = vector.shape_cast %148 : vector<1x1x32x32xbf16> to vector<32x32xbf16>
    %cst_42 = arith.constant dense<0.000000e+00> : vector<8x32xf32>
    %150 = tpu.matmul %147, %149, %cst_42 {dimension_numbers = #tpu.dot_dimension_numbers<[1], [0], [0], [1], [0, 0, 1, 1], [], []>} : vector<8x32xbf16>, vector<32x32xbf16>, vector<8x32xf32> -> vector<8x32xf32>
    %151 = vector.broadcast %43 : vector<1x32xf32> to vector<8x32xf32>
    %152 = arith.addf %150, %151 : vector<8x32xf32>
    %153 = arith.addf %8, %152 : vector<8x32xf32>
    %cst_43 = arith.constant dense<0.000000e+00> : vector<8xf32>
    %154 = vector.multi_reduction <add>, %153, %cst_43 [1] : vector<8x32xf32> to vector<8xf32>
    %155 = vector.shape_cast %154 : vector<8xf32> to vector<8x1xf32>
    %cst_44 = arith.constant 3.200000e+01 : f32
    %156 = vector.broadcast %cst_44 : f32 to vector<8x1xf32>
    %157 = arith.divf %155, %156 : vector<8x1xf32>
    %158 = vector.broadcast %157 : vector<8x1xf32> to vector<8x32xf32>
    %159 = arith.subf %153, %158 : vector<8x32xf32>
    %160 = arith.mulf %159, %159 : vector<8x32xf32>
    %cst_45 = arith.constant dense<0.000000e+00> : vector<8xf32>
    %161 = vector.multi_reduction <add>, %160, %cst_45 [1] : vector<8x32xf32> to vector<8xf32>
    %162 = vector.shape_cast %161 : vector<8xf32> to vector<8x1xf32>
    %cst_46 = arith.constant 3.200000e+01 : f32
    %163 = vector.broadcast %cst_46 : f32 to vector<8x1xf32>
    %164 = arith.divf %162, %163 : vector<8x1xf32>
    %165 = vector.broadcast %157 : vector<8x1xf32> to vector<8x32xf32>
    %166 = arith.subf %153, %165 : vector<8x32xf32>
    %cst_47 = arith.constant 9.99999974E-6 : f32
    %167 = vector.broadcast %cst_47 : f32 to vector<8x1xf32>
    %168 = arith.addf %164, %167 : vector<8x1xf32>
    %169 = math.rsqrt %168 : vector<8x1xf32>
    %170 = vector.broadcast %169 : vector<8x1xf32> to vector<8x32xf32>
    %171 = arith.mulf %166, %170 : vector<8x32xf32>
    %172 = vector.broadcast %44 : vector<1x32xf32> to vector<8x32xf32>
    %173 = arith.mulf %171, %172 : vector<8x32xf32>
    %174 = vector.broadcast %45 : vector<1x32xf32> to vector<8x32xf32>
    %175 = arith.addf %173, %174 : vector<8x32xf32>
    %176 = arith.truncf %175 : vector<8x32xf32> to vector<8x32xbf16>
    %cst_48 = arith.constant 0.000000e+00 : f32
    %177 = vector.broadcast %cst_48 : f32 to vector<8x32xf32>
    %c0_49 = arith.constant 0 : index
    %c0_50 = arith.constant 0 : index
    %c0_51 = arith.constant 0 : index
    %178 = vector.load %arg5[%c0_49, %c0_50, %c0_51] : memref<2x32x2048xbf16, #tpu.memory_space<vmem>>, vector<1x32x512xbf16>
    %179 = vector.shape_cast %178 : vector<1x32x512xbf16> to vector<32x512xbf16>
    %cst_52 = arith.constant dense<0.000000e+00> : vector<8x512xf32>
    %180 = tpu.matmul %176, %179, %cst_52 {dimension_numbers = #tpu.dot_dimension_numbers<[1], [0], [0], [1], [0, 0, 1, 1], [], []>} : vector<8x32xbf16>, vector<32x512xbf16>, vector<8x512xf32> -> vector<8x512xf32>
    %c0_53 = arith.constant 0 : index
    %c0_54 = arith.constant 0 : index
    %c0_55 = arith.constant 0 : index
    %181 = vector.load %arg6[%c0_53, %c0_54, %c0_55] : memref<2x1x2048xf32, #tpu.memory_space<vmem>>, vector<1x1x512xf32>
    %182 = vector.shape_cast %181 : vector<1x1x512xf32> to vector<1x512xf32>
    %183 = vector.broadcast %182 : vector<1x512xf32> to vector<8x512xf32>
    %184 = arith.addf %180, %183 : vector<8x512xf32>
    %cst_56 = arith.constant 0.000000e+00 : f32
    %185 = vector.broadcast %cst_56 : f32 to vector<8x512xf32>
    %186 = arith.maximumf %184, %185 : vector<8x512xf32>
    %187 = arith.truncf %186 : vector<8x512xf32> to vector<8x512xbf16>
    %c0_57 = arith.constant 0 : index
    %c0_58 = arith.constant 0 : index
    %c0_59 = arith.constant 0 : index
    %188 = vector.load %arg7[%c0_57, %c0_58, %c0_59] : memref<2x2048x32xbf16, #tpu.memory_space<vmem>>, vector<1x512x32xbf16>
    %189 = vector.shape_cast %188 : vector<1x512x32xbf16> to vector<512x32xbf16>
    %cst_60 = arith.constant dense<0.000000e+00> : vector<8x32xf32>
    %190 = tpu.matmul %187, %189, %cst_60 {dimension_numbers = #tpu.dot_dimension_numbers<[1], [0], [0], [1], [0, 0, 1, 1], [], []>} : vector<8x512xbf16>, vector<512x32xbf16>, vector<8x32xf32> -> vector<8x32xf32>
    %191 = arith.addf %177, %190 : vector<8x32xf32>
    %c0_61 = arith.constant 0 : index
    %c0_62 = arith.constant 0 : index
    %c512 = arith.constant 512 : index
    %192 = vector.load %arg5[%c0_61, %c0_62, %c512] : memref<2x32x2048xbf16, #tpu.memory_space<vmem>>, vector<1x32x512xbf16>
    %193 = vector.shape_cast %192 : vector<1x32x512xbf16> to vector<32x512xbf16>
    %cst_63 = arith.constant dense<0.000000e+00> : vector<8x512xf32>
    %194 = tpu.matmul %176, %193, %cst_63 {dimension_numbers = #tpu.dot_dimension_numbers<[1], [0], [0], [1], [0, 0, 1, 1], [], []>} : vector<8x32xbf16>, vector<32x512xbf16>, vector<8x512xf32> -> vector<8x512xf32>
    %c0_64 = arith.constant 0 : index
    %c0_65 = arith.constant 0 : index
    %c512_66 = arith.constant 512 : index
    %195 = vector.load %arg6[%c0_64, %c0_65, %c512_66] : memref<2x1x2048xf32, #tpu.memory_space<vmem>>, vector<1x1x512xf32>
    %196 = vector.shape_cast %195 : vector<1x1x512xf32> to vector<1x512xf32>
    %197 = vector.broadcast %196 : vector<1x512xf32> to vector<8x512xf32>
    %198 = arith.addf %194, %197 : vector<8x512xf32>
    %cst_67 = arith.constant 0.000000e+00 : f32
    %199 = vector.broadcast %cst_67 : f32 to vector<8x512xf32>
    %200 = arith.maximumf %198, %199 : vector<8x512xf32>
    %201 = arith.truncf %200 : vector<8x512xf32> to vector<8x512xbf16>
    %c0_68 = arith.constant 0 : index
    %c512_69 = arith.constant 512 : index
    %c0_70 = arith.constant 0 : index
    %202 = vector.load %arg7[%c0_68, %c512_69, %c0_70] : memref<2x2048x32xbf16, #tpu.memory_space<vmem>>, vector<1x512x32xbf16>
    %203 = vector.shape_cast %202 : vector<1x512x32xbf16> to vector<512x32xbf16>
    %cst_71 = arith.constant dense<0.000000e+00> : vector<8x32xf32>
    %204 = tpu.matmul %201, %203, %cst_71 {dimension_numbers = #tpu.dot_dimension_numbers<[1], [0], [0], [1], [0, 0, 1, 1], [], []>} : vector<8x512xbf16>, vector<512x32xbf16>, vector<8x32xf32> -> vector<8x32xf32>
    %205 = arith.addf %191, %204 : vector<8x32xf32>
    %c0_72 = arith.constant 0 : index
    %c0_73 = arith.constant 0 : index
    %c1024 = arith.constant 1024 : index
    %206 = vector.load %arg5[%c0_72, %c0_73, %c1024] : memref<2x32x2048xbf16, #tpu.memory_space<vmem>>, vector<1x32x512xbf16>
    %207 = vector.shape_cast %206 : vector<1x32x512xbf16> to vector<32x512xbf16>
    %cst_74 = arith.constant dense<0.000000e+00> : vector<8x512xf32>
    %208 = tpu.matmul %176, %207, %cst_74 {dimension_numbers = #tpu.dot_dimension_numbers<[1], [0], [0], [1], [0, 0, 1, 1], [], []>} : vector<8x32xbf16>, vector<32x512xbf16>, vector<8x512xf32> -> vector<8x512xf32>
    %c0_75 = arith.constant 0 : index
    %c0_76 = arith.constant 0 : index
    %c1024_77 = arith.constant 1024 : index
    %209 = vector.load %arg6[%c0_75, %c0_76, %c1024_77] : memref<2x1x2048xf32, #tpu.memory_space<vmem>>, vector<1x1x512xf32>
    %210 = vector.shape_cast %209 : vector<1x1x512xf32> to vector<1x512xf32>
    %211 = vector.broadcast %210 : vector<1x512xf32> to vector<8x512xf32>
    %212 = arith.addf %208, %211 : vector<8x512xf32>
    %cst_78 = arith.constant 0.000000e+00 : f32
    %213 = vector.broadcast %cst_78 : f32 to vector<8x512xf32>
    %214 = arith.maximumf %212, %213 : vector<8x512xf32>
    %215 = arith.truncf %214 : vector<8x512xf32> to vector<8x512xbf16>
    %c0_79 = arith.constant 0 : index
    %c1024_80 = arith.constant 1024 : index
    %c0_81 = arith.constant 0 : index
    %216 = vector.load %arg7[%c0_79, %c1024_80, %c0_81] : memref<2x2048x32xbf16, #tpu.memory_space<vmem>>, vector<1x512x32xbf16>
    %217 = vector.shape_cast %216 : vector<1x512x32xbf16> to vector<512x32xbf16>
    %cst_82 = arith.constant dense<0.000000e+00> : vector<8x32xf32>
    %218 = tpu.matmul %215, %217, %cst_82 {dimension_numbers = #tpu.dot_dimension_numbers<[1], [0], [0], [1], [0, 0, 1, 1], [], []>} : vector<8x512xbf16>, vector<512x32xbf16>, vector<8x32xf32> -> vector<8x32xf32>
    %219 = arith.addf %205, %218 : vector<8x32xf32>
    %c0_83 = arith.constant 0 : index
    %c0_84 = arith.constant 0 : index
    %c1536 = arith.constant 1536 : index
    %220 = vector.load %arg5[%c0_83, %c0_84, %c1536] : memref<2x32x2048xbf16, #tpu.memory_space<vmem>>, vector<1x32x512xbf16>
    %221 = vector.shape_cast %220 : vector<1x32x512xbf16> to vector<32x512xbf16>
    %cst_85 = arith.constant dense<0.000000e+00> : vector<8x512xf32>
    %222 = tpu.matmul %176, %221, %cst_85 {dimension_numbers = #tpu.dot_dimension_numbers<[1], [0], [0], [1], [0, 0, 1, 1], [], []>} : vector<8x32xbf16>, vector<32x512xbf16>, vector<8x512xf32> -> vector<8x512xf32>
    %c0_86 = arith.constant 0 : index
    %c0_87 = arith.constant 0 : index
    %c1536_88 = arith.constant 1536 : index
    %223 = vector.load %arg6[%c0_86, %c0_87, %c1536_88] : memref<2x1x2048xf32, #tpu.memory_space<vmem>>, vector<1x1x512xf32>
    %224 = vector.shape_cast %223 : vector<1x1x512xf32> to vector<1x512xf32>
    %225 = vector.broadcast %224 : vector<1x512xf32> to vector<8x512xf32>
    %226 = arith.addf %222, %225 : vector<8x512xf32>
    %cst_89 = arith.constant 0.000000e+00 : f32
    %227 = vector.broadcast %cst_89 : f32 to vector<8x512xf32>
    %228 = arith.maximumf %226, %227 : vector<8x512xf32>
    %229 = arith.truncf %228 : vector<8x512xf32> to vector<8x512xbf16>
    %c0_90 = arith.constant 0 : index
    %c1536_91 = arith.constant 1536 : index
    %c0_92 = arith.constant 0 : index
    %230 = vector.load %arg7[%c0_90, %c1536_91, %c0_92] : memref<2x2048x32xbf16, #tpu.memory_space<vmem>>, vector<1x512x32xbf16>
    %231 = vector.shape_cast %230 : vector<1x512x32xbf16> to vector<512x32xbf16>
    %cst_93 = arith.constant dense<0.000000e+00> : vector<8x32xf32>
    %232 = tpu.matmul %229, %231, %cst_93 {dimension_numbers = #tpu.dot_dimension_numbers<[1], [0], [0], [1], [0, 0, 1, 1], [], []>} : vector<8x512xbf16>, vector<512x32xbf16>, vector<8x32xf32> -> vector<8x32xf32>
    %233 = arith.addf %219, %232 : vector<8x32xf32>
    %234 = arith.addf %175, %233 : vector<8x32xf32>
    %235 = vector.broadcast %46 : vector<1x32xf32> to vector<8x32xf32>
    %236 = arith.addf %234, %235 : vector<8x32xf32>
    %cst_94 = arith.constant dense<0.000000e+00> : vector<8xf32>
    %237 = vector.multi_reduction <add>, %236, %cst_94 [1] : vector<8x32xf32> to vector<8xf32>
    %238 = vector.shape_cast %237 : vector<8xf32> to vector<8x1xf32>
    %cst_95 = arith.constant 3.200000e+01 : f32
    %239 = vector.broadcast %cst_95 : f32 to vector<8x1xf32>
    %240 = arith.divf %238, %239 : vector<8x1xf32>
    %241 = vector.broadcast %240 : vector<8x1xf32> to vector<8x32xf32>
    %242 = arith.subf %236, %241 : vector<8x32xf32>
    %243 = arith.mulf %242, %242 : vector<8x32xf32>
    %cst_96 = arith.constant dense<0.000000e+00> : vector<8xf32>
    %244 = vector.multi_reduction <add>, %243, %cst_96 [1] : vector<8x32xf32> to vector<8xf32>
    %245 = vector.shape_cast %244 : vector<8xf32> to vector<8x1xf32>
    %cst_97 = arith.constant 3.200000e+01 : f32
    %246 = vector.broadcast %cst_97 : f32 to vector<8x1xf32>
    %247 = arith.divf %245, %246 : vector<8x1xf32>
    %248 = vector.broadcast %240 : vector<8x1xf32> to vector<8x32xf32>
    %249 = arith.subf %236, %248 : vector<8x32xf32>
    %cst_98 = arith.constant 9.99999974E-6 : f32
    %250 = vector.broadcast %cst_98 : f32 to vector<8x1xf32>
    %251 = arith.addf %247, %250 : vector<8x1xf32>
    %252 = math.rsqrt %251 : vector<8x1xf32>
    %253 = vector.broadcast %252 : vector<8x1xf32> to vector<8x32xf32>
    %254 = arith.mulf %249, %253 : vector<8x32xf32>
    %255 = vector.broadcast %47 : vector<1x32xf32> to vector<8x32xf32>
    %256 = arith.mulf %254, %255 : vector<8x32xf32>
    %257 = vector.broadcast %48 : vector<1x32xf32> to vector<8x32xf32>
    %258 = arith.addf %256, %257 : vector<8x32xf32>
    %c1_99 = arith.constant 1 : index
    %c0_100 = arith.constant 0 : index
    %c0_101 = arith.constant 0 : index
    %259 = vector.load %arg4[%c1_99, %c0_100, %c0_101] : memref<2x16x32xf32, #tpu.memory_space<vmem>>, vector<1x16x32xf32>
    %260 = vector.shape_cast %259 : vector<1x16x32xf32> to vector<16x32xf32>
    %261 = vector.extract_strided_slice %260 {offsets = [0, 0], sizes = [1, 32], strides = [1, 1]} : vector<16x32xf32> to vector<1x32xf32>
    %262 = vector.extract_strided_slice %260 {offsets = [1, 0], sizes = [1, 32], strides = [1, 1]} : vector<16x32xf32> to vector<1x32xf32>
    %263 = vector.extract_strided_slice %260 {offsets = [2, 0], sizes = [1, 32], strides = [1, 1]} : vector<16x32xf32> to vector<1x32xf32>
    %264 = vector.extract_strided_slice %260 {offsets = [3, 0], sizes = [1, 32], strides = [1, 1]} : vector<16x32xf32> to vector<1x32xf32>
    %265 = vector.extract_strided_slice %260 {offsets = [4, 0], sizes = [1, 32], strides = [1, 1]} : vector<16x32xf32> to vector<1x32xf32>
    %266 = vector.extract_strided_slice %260 {offsets = [5, 0], sizes = [1, 32], strides = [1, 1]} : vector<16x32xf32> to vector<1x32xf32>
    %267 = vector.extract_strided_slice %260 {offsets = [6, 0], sizes = [1, 32], strides = [1, 1]} : vector<16x32xf32> to vector<1x32xf32>
    %268 = vector.extract_strided_slice %260 {offsets = [7, 0], sizes = [1, 32], strides = [1, 1]} : vector<16x32xf32> to vector<1x32xf32>
    %269 = vector.extract_strided_slice %260 {offsets = [8, 0], sizes = [1, 32], strides = [1, 1]} : vector<16x32xf32> to vector<1x32xf32>
    %270 = arith.truncf %258 : vector<8x32xf32> to vector<8x32xbf16>
    %c1_102 = arith.constant 1 : index
    %c0_103 = arith.constant 0 : index
    %c0_104 = arith.constant 0 : index
    %c0_105 = arith.constant 0 : index
    %271 = vector.load %arg3[%c1_102, %c0_103, %c0_104, %c0_105] : memref<2x4x32x32xbf16, #tpu.memory_space<vmem>>, vector<1x1x32x32xbf16>
    %272 = vector.shape_cast %271 : vector<1x1x32x32xbf16> to vector<32x32xbf16>
    %cst_106 = arith.constant dense<0.000000e+00> : vector<8x32xf32>
    %273 = tpu.matmul %270, %272, %cst_106 {dimension_numbers = #tpu.dot_dimension_numbers<[1], [0], [0], [1], [0, 0, 1, 1], [], []>} : vector<8x32xbf16>, vector<32x32xbf16>, vector<8x32xf32> -> vector<8x32xf32>
    %274 = vector.broadcast %261 : vector<1x32xf32> to vector<8x32xf32>
    %275 = arith.addf %273, %274 : vector<8x32xf32>
    %c1_107 = arith.constant 1 : index
    %c1_108 = arith.constant 1 : index
    %c0_109 = arith.constant 0 : index
    %c0_110 = arith.constant 0 : index
    %276 = vector.load %arg3[%c1_107, %c1_108, %c0_109, %c0_110] : memref<2x4x32x32xbf16, #tpu.memory_space<vmem>>, vector<1x1x32x32xbf16>
    %277 = vector.shape_cast %276 : vector<1x1x32x32xbf16> to vector<32x32xbf16>
    %cst_111 = arith.constant dense<0.000000e+00> : vector<8x32xf32>
    %278 = tpu.matmul %270, %277, %cst_111 {dimension_numbers = #tpu.dot_dimension_numbers<[1], [0], [0], [1], [0, 0, 1, 1], [], []>} : vector<8x32xbf16>, vector<32x32xbf16>, vector<8x32xf32> -> vector<8x32xf32>
    %279 = vector.broadcast %262 : vector<1x32xf32> to vector<8x32xf32>
    %280 = arith.addf %278, %279 : vector<8x32xf32>
    %c1_112 = arith.constant 1 : index
    %c2_113 = arith.constant 2 : index
    %c0_114 = arith.constant 0 : index
    %c0_115 = arith.constant 0 : index
    %281 = vector.load %arg3[%c1_112, %c2_113, %c0_114, %c0_115] : memref<2x4x32x32xbf16, #tpu.memory_space<vmem>>, vector<1x1x32x32xbf16>
    %282 = vector.shape_cast %281 : vector<1x1x32x32xbf16> to vector<32x32xbf16>
    %cst_116 = arith.constant dense<0.000000e+00> : vector<8x32xf32>
    %283 = tpu.matmul %270, %282, %cst_116 {dimension_numbers = #tpu.dot_dimension_numbers<[1], [0], [0], [1], [0, 0, 1, 1], [], []>} : vector<8x32xbf16>, vector<32x32xbf16>, vector<8x32xf32> -> vector<8x32xf32>
    %284 = vector.broadcast %263 : vector<1x32xf32> to vector<8x32xf32>
    %285 = arith.addf %283, %284 : vector<8x32xf32>
    %286 = arith.truncf %280 : vector<8x32xf32> to vector<8x32xbf16>
    %cst_117 = arith.constant 0.000000e+00 : f32
    %287 = vector.broadcast %cst_117 : f32 to vector<8x32xf32>
    %288 = vector.broadcast %16 : vector<1x32xf32> to vector<8x32xf32>
    %289 = arith.mulf %275, %288 : vector<8x32xf32>
    %290 = arith.truncf %289 : vector<8x32xf32> to vector<8x32xbf16>
    %291 = vector.broadcast %16 : vector<1x32xf32> to vector<8x32xf32>
    %292 = arith.mulf %285, %291 : vector<8x32xf32>
    %293 = arith.truncf %292 : vector<8x32xf32> to vector<8x32xbf16>
    %cst_118 = arith.constant dense<0.000000e+00> : vector<8x8xf32>
    %294 = tpu.matmul %290, %286, %cst_118 {dimension_numbers = #tpu.dot_dimension_numbers<[1], [1], [0], [0], [0, 0, 1, 0], [], []>} : vector<8x32xbf16>, vector<8x32xbf16>, vector<8x8xf32> -> vector<8x8xf32>
    %cst_119 = arith.constant dense<0xFF800000> : vector<8xf32>
    %295 = vector.multi_reduction <maximumf>, %294, %cst_119 [1] : vector<8x8xf32> to vector<8xf32>
    %296 = vector.shape_cast %295 : vector<8xf32> to vector<8x1xf32>
    %297 = vector.broadcast %296 : vector<8x1xf32> to vector<8x8xf32>
    %298 = arith.subf %294, %297 : vector<8x8xf32>
    %299 = math.exp %298 : vector<8x8xf32>
    %cst_120 = arith.constant dense<0.000000e+00> : vector<8xf32>
    %300 = vector.multi_reduction <add>, %299, %cst_120 [1] : vector<8x8xf32> to vector<8xf32>
    %301 = vector.shape_cast %300 : vector<8xf32> to vector<8x1xf32>
    %302 = tpu.reciprocal %301 {approx = true} : vector<8x1xf32> -> vector<8x1xf32>
    %303 = vector.broadcast %302 : vector<8x1xf32> to vector<8x8xf32>
    %304 = arith.mulf %299, %303 : vector<8x8xf32>
    %305 = arith.truncf %304 : vector<8x8xf32> to vector<8x8xbf16>
    %cst_121 = arith.constant dense<0.000000e+00> : vector<8x32xf32>
    %306 = tpu.matmul %305, %293, %cst_121 {dimension_numbers = #tpu.dot_dimension_numbers<[1], [0], [0], [1], [0, 0, 1, 1], [], []>} : vector<8x8xbf16>, vector<8x32xbf16>, vector<8x32xf32> -> vector<8x32xf32>
    %307 = arith.addf %287, %306 : vector<8x32xf32>
    %308 = vector.broadcast %23 : vector<1x32xf32> to vector<8x32xf32>
    %309 = arith.mulf %275, %308 : vector<8x32xf32>
    %310 = arith.truncf %309 : vector<8x32xf32> to vector<8x32xbf16>
    %311 = vector.broadcast %23 : vector<1x32xf32> to vector<8x32xf32>
    %312 = arith.mulf %285, %311 : vector<8x32xf32>
    %313 = arith.truncf %312 : vector<8x32xf32> to vector<8x32xbf16>
    %cst_122 = arith.constant dense<0.000000e+00> : vector<8x8xf32>
    %314 = tpu.matmul %310, %286, %cst_122 {dimension_numbers = #tpu.dot_dimension_numbers<[1], [1], [0], [0], [0, 0, 1, 0], [], []>} : vector<8x32xbf16>, vector<8x32xbf16>, vector<8x8xf32> -> vector<8x8xf32>
    %cst_123 = arith.constant dense<0xFF800000> : vector<8xf32>
    %315 = vector.multi_reduction <maximumf>, %314, %cst_123 [1] : vector<8x8xf32> to vector<8xf32>
    %316 = vector.shape_cast %315 : vector<8xf32> to vector<8x1xf32>
    %317 = vector.broadcast %316 : vector<8x1xf32> to vector<8x8xf32>
    %318 = arith.subf %314, %317 : vector<8x8xf32>
    %319 = math.exp %318 : vector<8x8xf32>
    %cst_124 = arith.constant dense<0.000000e+00> : vector<8xf32>
    %320 = vector.multi_reduction <add>, %319, %cst_124 [1] : vector<8x8xf32> to vector<8xf32>
    %321 = vector.shape_cast %320 : vector<8xf32> to vector<8x1xf32>
    %322 = tpu.reciprocal %321 {approx = true} : vector<8x1xf32> -> vector<8x1xf32>
    %323 = vector.broadcast %322 : vector<8x1xf32> to vector<8x8xf32>
    %324 = arith.mulf %319, %323 : vector<8x8xf32>
    %325 = arith.truncf %324 : vector<8x8xf32> to vector<8x8xbf16>
    %cst_125 = arith.constant dense<0.000000e+00> : vector<8x32xf32>
    %326 = tpu.matmul %325, %313, %cst_125 {dimension_numbers = #tpu.dot_dimension_numbers<[1], [0], [0], [1], [0, 0, 1, 1], [], []>} : vector<8x8xbf16>, vector<8x32xbf16>, vector<8x32xf32> -> vector<8x32xf32>
    %327 = arith.addf %307, %326 : vector<8x32xf32>
    %328 = vector.broadcast %30 : vector<1x32xf32> to vector<8x32xf32>
    %329 = arith.mulf %275, %328 : vector<8x32xf32>
    %330 = arith.truncf %329 : vector<8x32xf32> to vector<8x32xbf16>
    %331 = vector.broadcast %30 : vector<1x32xf32> to vector<8x32xf32>
    %332 = arith.mulf %285, %331 : vector<8x32xf32>
    %333 = arith.truncf %332 : vector<8x32xf32> to vector<8x32xbf16>
    %cst_126 = arith.constant dense<0.000000e+00> : vector<8x8xf32>
    %334 = tpu.matmul %330, %286, %cst_126 {dimension_numbers = #tpu.dot_dimension_numbers<[1], [1], [0], [0], [0, 0, 1, 0], [], []>} : vector<8x32xbf16>, vector<8x32xbf16>, vector<8x8xf32> -> vector<8x8xf32>
    %cst_127 = arith.constant dense<0xFF800000> : vector<8xf32>
    %335 = vector.multi_reduction <maximumf>, %334, %cst_127 [1] : vector<8x8xf32> to vector<8xf32>
    %336 = vector.shape_cast %335 : vector<8xf32> to vector<8x1xf32>
    %337 = vector.broadcast %336 : vector<8x1xf32> to vector<8x8xf32>
    %338 = arith.subf %334, %337 : vector<8x8xf32>
    %339 = math.exp %338 : vector<8x8xf32>
    %cst_128 = arith.constant dense<0.000000e+00> : vector<8xf32>
    %340 = vector.multi_reduction <add>, %339, %cst_128 [1] : vector<8x8xf32> to vector<8xf32>
    %341 = vector.shape_cast %340 : vector<8xf32> to vector<8x1xf32>
    %342 = tpu.reciprocal %341 {approx = true} : vector<8x1xf32> -> vector<8x1xf32>
    %343 = vector.broadcast %342 : vector<8x1xf32> to vector<8x8xf32>
    %344 = arith.mulf %339, %343 : vector<8x8xf32>
    %345 = arith.truncf %344 : vector<8x8xf32> to vector<8x8xbf16>
    %cst_129 = arith.constant dense<0.000000e+00> : vector<8x32xf32>
    %346 = tpu.matmul %345, %333, %cst_129 {dimension_numbers = #tpu.dot_dimension_numbers<[1], [0], [0], [1], [0, 0, 1, 1], [], []>} : vector<8x8xbf16>, vector<8x32xbf16>, vector<8x32xf32> -> vector<8x32xf32>
    %347 = arith.addf %327, %346 : vector<8x32xf32>
    %348 = vector.broadcast %37 : vector<1x32xf32> to vector<8x32xf32>
    %349 = arith.mulf %275, %348 : vector<8x32xf32>
    %350 = arith.truncf %349 : vector<8x32xf32> to vector<8x32xbf16>
    %351 = vector.broadcast %37 : vector<1x32xf32> to vector<8x32xf32>
    %352 = arith.mulf %285, %351 : vector<8x32xf32>
    %353 = arith.truncf %352 : vector<8x32xf32> to vector<8x32xbf16>
    %cst_130 = arith.constant dense<0.000000e+00> : vector<8x8xf32>
    %354 = tpu.matmul %350, %286, %cst_130 {dimension_numbers = #tpu.dot_dimension_numbers<[1], [1], [0], [0], [0, 0, 1, 0], [], []>} : vector<8x32xbf16>, vector<8x32xbf16>, vector<8x8xf32> -> vector<8x8xf32>
    %cst_131 = arith.constant dense<0xFF800000> : vector<8xf32>
    %355 = vector.multi_reduction <maximumf>, %354, %cst_131 [1] : vector<8x8xf32> to vector<8xf32>
    %356 = vector.shape_cast %355 : vector<8xf32> to vector<8x1xf32>
    %357 = vector.broadcast %356 : vector<8x1xf32> to vector<8x8xf32>
    %358 = arith.subf %354, %357 : vector<8x8xf32>
    %359 = math.exp %358 : vector<8x8xf32>
    %cst_132 = arith.constant dense<0.000000e+00> : vector<8xf32>
    %360 = vector.multi_reduction <add>, %359, %cst_132 [1] : vector<8x8xf32> to vector<8xf32>
    %361 = vector.shape_cast %360 : vector<8xf32> to vector<8x1xf32>
    %362 = tpu.reciprocal %361 {approx = true} : vector<8x1xf32> -> vector<8x1xf32>
    %363 = vector.broadcast %362 : vector<8x1xf32> to vector<8x8xf32>
    %364 = arith.mulf %359, %363 : vector<8x8xf32>
    %365 = arith.truncf %364 : vector<8x8xf32> to vector<8x8xbf16>
    %cst_133 = arith.constant dense<0.000000e+00> : vector<8x32xf32>
    %366 = tpu.matmul %365, %353, %cst_133 {dimension_numbers = #tpu.dot_dimension_numbers<[1], [0], [0], [1], [0, 0, 1, 1], [], []>} : vector<8x8xbf16>, vector<8x32xbf16>, vector<8x32xf32> -> vector<8x32xf32>
    %367 = arith.addf %347, %366 : vector<8x32xf32>
    %368 = arith.truncf %367 : vector<8x32xf32> to vector<8x32xbf16>
    %c1_134 = arith.constant 1 : index
    %c3_135 = arith.constant 3 : index
    %c0_136 = arith.constant 0 : index
    %c0_137 = arith.constant 0 : index
    %369 = vector.load %arg3[%c1_134, %c3_135, %c0_136, %c0_137] : memref<2x4x32x32xbf16, #tpu.memory_space<vmem>>, vector<1x1x32x32xbf16>
    %370 = vector.shape_cast %369 : vector<1x1x32x32xbf16> to vector<32x32xbf16>
    %cst_138 = arith.constant dense<0.000000e+00> : vector<8x32xf32>
    %371 = tpu.matmul %368, %370, %cst_138 {dimension_numbers = #tpu.dot_dimension_numbers<[1], [0], [0], [1], [0, 0, 1, 1], [], []>} : vector<8x32xbf16>, vector<32x32xbf16>, vector<8x32xf32> -> vector<8x32xf32>
    %372 = vector.broadcast %264 : vector<1x32xf32> to vector<8x32xf32>
    %373 = arith.addf %371, %372 : vector<8x32xf32>
    %374 = arith.addf %258, %373 : vector<8x32xf32>
    %cst_139 = arith.constant dense<0.000000e+00> : vector<8xf32>
    %375 = vector.multi_reduction <add>, %374, %cst_139 [1] : vector<8x32xf32> to vector<8xf32>
    %376 = vector.shape_cast %375 : vector<8xf32> to vector<8x1xf32>
    %cst_140 = arith.constant 3.200000e+01 : f32
    %377 = vector.broadcast %cst_140 : f32 to vector<8x1xf32>
    %378 = arith.divf %376, %377 : vector<8x1xf32>
    %379 = vector.broadcast %378 : vector<8x1xf32> to vector<8x32xf32>
    %380 = arith.subf %374, %379 : vector<8x32xf32>
    %381 = arith.mulf %380, %380 : vector<8x32xf32>
    %cst_141 = arith.constant dense<0.000000e+00> : vector<8xf32>
    %382 = vector.multi_reduction <add>, %381, %cst_141 [1] : vector<8x32xf32> to vector<8xf32>
    %383 = vector.shape_cast %382 : vector<8xf32> to vector<8x1xf32>
    %cst_142 = arith.constant 3.200000e+01 : f32
    %384 = vector.broadcast %cst_142 : f32 to vector<8x1xf32>
    %385 = arith.divf %383, %384 : vector<8x1xf32>
    %386 = vector.broadcast %378 : vector<8x1xf32> to vector<8x32xf32>
    %387 = arith.subf %374, %386 : vector<8x32xf32>
    %cst_143 = arith.constant 9.99999974E-6 : f32
    %388 = vector.broadcast %cst_143 : f32 to vector<8x1xf32>
    %389 = arith.addf %385, %388 : vector<8x1xf32>
    %390 = math.rsqrt %389 : vector<8x1xf32>
    %391 = vector.broadcast %390 : vector<8x1xf32> to vector<8x32xf32>
    %392 = arith.mulf %387, %391 : vector<8x32xf32>
    %393 = vector.broadcast %265 : vector<1x32xf32> to vector<8x32xf32>
    %394 = arith.mulf %392, %393 : vector<8x32xf32>
    %395 = vector.broadcast %266 : vector<1x32xf32> to vector<8x32xf32>
    %396 = arith.addf %394, %395 : vector<8x32xf32>
    %397 = arith.truncf %396 : vector<8x32xf32> to vector<8x32xbf16>
    %cst_144 = arith.constant 0.000000e+00 : f32
    %398 = vector.broadcast %cst_144 : f32 to vector<8x32xf32>
    %c1_145 = arith.constant 1 : index
    %c0_146 = arith.constant 0 : index
    %c0_147 = arith.constant 0 : index
    %399 = vector.load %arg5[%c1_145, %c0_146, %c0_147] : memref<2x32x2048xbf16, #tpu.memory_space<vmem>>, vector<1x32x512xbf16>
    %400 = vector.shape_cast %399 : vector<1x32x512xbf16> to vector<32x512xbf16>
    %cst_148 = arith.constant dense<0.000000e+00> : vector<8x512xf32>
    %401 = tpu.matmul %397, %400, %cst_148 {dimension_numbers = #tpu.dot_dimension_numbers<[1], [0], [0], [1], [0, 0, 1, 1], [], []>} : vector<8x32xbf16>, vector<32x512xbf16>, vector<8x512xf32> -> vector<8x512xf32>
    %c1_149 = arith.constant 1 : index
    %c0_150 = arith.constant 0 : index
    %c0_151 = arith.constant 0 : index
    %402 = vector.load %arg6[%c1_149, %c0_150, %c0_151] : memref<2x1x2048xf32, #tpu.memory_space<vmem>>, vector<1x1x512xf32>
    %403 = vector.shape_cast %402 : vector<1x1x512xf32> to vector<1x512xf32>
    %404 = vector.broadcast %403 : vector<1x512xf32> to vector<8x512xf32>
    %405 = arith.addf %401, %404 : vector<8x512xf32>
    %cst_152 = arith.constant 0.000000e+00 : f32
    %406 = vector.broadcast %cst_152 : f32 to vector<8x512xf32>
    %407 = arith.maximumf %405, %406 : vector<8x512xf32>
    %408 = arith.truncf %407 : vector<8x512xf32> to vector<8x512xbf16>
    %c1_153 = arith.constant 1 : index
    %c0_154 = arith.constant 0 : index
    %c0_155 = arith.constant 0 : index
    %409 = vector.load %arg7[%c1_153, %c0_154, %c0_155] : memref<2x2048x32xbf16, #tpu.memory_space<vmem>>, vector<1x512x32xbf16>
    %410 = vector.shape_cast %409 : vector<1x512x32xbf16> to vector<512x32xbf16>
    %cst_156 = arith.constant dense<0.000000e+00> : vector<8x32xf32>
    %411 = tpu.matmul %408, %410, %cst_156 {dimension_numbers = #tpu.dot_dimension_numbers<[1], [0], [0], [1], [0, 0, 1, 1], [], []>} : vector<8x512xbf16>, vector<512x32xbf16>, vector<8x32xf32> -> vector<8x32xf32>
    %412 = arith.addf %398, %411 : vector<8x32xf32>
    %c1_157 = arith.constant 1 : index
    %c0_158 = arith.constant 0 : index
    %c512_159 = arith.constant 512 : index
    %413 = vector.load %arg5[%c1_157, %c0_158, %c512_159] : memref<2x32x2048xbf16, #tpu.memory_space<vmem>>, vector<1x32x512xbf16>
    %414 = vector.shape_cast %413 : vector<1x32x512xbf16> to vector<32x512xbf16>
    %cst_160 = arith.constant dense<0.000000e+00> : vector<8x512xf32>
    %415 = tpu.matmul %397, %414, %cst_160 {dimension_numbers = #tpu.dot_dimension_numbers<[1], [0], [0], [1], [0, 0, 1, 1], [], []>} : vector<8x32xbf16>, vector<32x512xbf16>, vector<8x512xf32> -> vector<8x512xf32>
    %c1_161 = arith.constant 1 : index
    %c0_162 = arith.constant 0 : index
    %c512_163 = arith.constant 512 : index
    %416 = vector.load %arg6[%c1_161, %c0_162, %c512_163] : memref<2x1x2048xf32, #tpu.memory_space<vmem>>, vector<1x1x512xf32>
    %417 = vector.shape_cast %416 : vector<1x1x512xf32> to vector<1x512xf32>
    %418 = vector.broadcast %417 : vector<1x512xf32> to vector<8x512xf32>
    %419 = arith.addf %415, %418 : vector<8x512xf32>
    %cst_164 = arith.constant 0.000000e+00 : f32
    %420 = vector.broadcast %cst_164 : f32 to vector<8x512xf32>
    %421 = arith.maximumf %419, %420 : vector<8x512xf32>
    %422 = arith.truncf %421 : vector<8x512xf32> to vector<8x512xbf16>
    %c1_165 = arith.constant 1 : index
    %c512_166 = arith.constant 512 : index
    %c0_167 = arith.constant 0 : index
    %423 = vector.load %arg7[%c1_165, %c512_166, %c0_167] : memref<2x2048x32xbf16, #tpu.memory_space<vmem>>, vector<1x512x32xbf16>
    %424 = vector.shape_cast %423 : vector<1x512x32xbf16> to vector<512x32xbf16>
    %cst_168 = arith.constant dense<0.000000e+00> : vector<8x32xf32>
    %425 = tpu.matmul %422, %424, %cst_168 {dimension_numbers = #tpu.dot_dimension_numbers<[1], [0], [0], [1], [0, 0, 1, 1], [], []>} : vector<8x512xbf16>, vector<512x32xbf16>, vector<8x32xf32> -> vector<8x32xf32>
    %426 = arith.addf %412, %425 : vector<8x32xf32>
    %c1_169 = arith.constant 1 : index
    %c0_170 = arith.constant 0 : index
    %c1024_171 = arith.constant 1024 : index
    %427 = vector.load %arg5[%c1_169, %c0_170, %c1024_171] : memref<2x32x2048xbf16, #tpu.memory_space<vmem>>, vector<1x32x512xbf16>
    %428 = vector.shape_cast %427 : vector<1x32x512xbf16> to vector<32x512xbf16>
    %cst_172 = arith.constant dense<0.000000e+00> : vector<8x512xf32>
    %429 = tpu.matmul %397, %428, %cst_172 {dimension_numbers = #tpu.dot_dimension_numbers<[1], [0], [0], [1], [0, 0, 1, 1], [], []>} : vector<8x32xbf16>, vector<32x512xbf16>, vector<8x512xf32> -> vector<8x512xf32>
    %c1_173 = arith.constant 1 : index
    %c0_174 = arith.constant 0 : index
    %c1024_175 = arith.constant 1024 : index
    %430 = vector.load %arg6[%c1_173, %c0_174, %c1024_175] : memref<2x1x2048xf32, #tpu.memory_space<vmem>>, vector<1x1x512xf32>
    %431 = vector.shape_cast %430 : vector<1x1x512xf32> to vector<1x512xf32>
    %432 = vector.broadcast %431 : vector<1x512xf32> to vector<8x512xf32>
    %433 = arith.addf %429, %432 : vector<8x512xf32>
    %cst_176 = arith.constant 0.000000e+00 : f32
    %434 = vector.broadcast %cst_176 : f32 to vector<8x512xf32>
    %435 = arith.maximumf %433, %434 : vector<8x512xf32>
    %436 = arith.truncf %435 : vector<8x512xf32> to vector<8x512xbf16>
    %c1_177 = arith.constant 1 : index
    %c1024_178 = arith.constant 1024 : index
    %c0_179 = arith.constant 0 : index
    %437 = vector.load %arg7[%c1_177, %c1024_178, %c0_179] : memref<2x2048x32xbf16, #tpu.memory_space<vmem>>, vector<1x512x32xbf16>
    %438 = vector.shape_cast %437 : vector<1x512x32xbf16> to vector<512x32xbf16>
    %cst_180 = arith.constant dense<0.000000e+00> : vector<8x32xf32>
    %439 = tpu.matmul %436, %438, %cst_180 {dimension_numbers = #tpu.dot_dimension_numbers<[1], [0], [0], [1], [0, 0, 1, 1], [], []>} : vector<8x512xbf16>, vector<512x32xbf16>, vector<8x32xf32> -> vector<8x32xf32>
    %440 = arith.addf %426, %439 : vector<8x32xf32>
    %c1_181 = arith.constant 1 : index
    %c0_182 = arith.constant 0 : index
    %c1536_183 = arith.constant 1536 : index
    %441 = vector.load %arg5[%c1_181, %c0_182, %c1536_183] : memref<2x32x2048xbf16, #tpu.memory_space<vmem>>, vector<1x32x512xbf16>
    %442 = vector.shape_cast %441 : vector<1x32x512xbf16> to vector<32x512xbf16>
    %cst_184 = arith.constant dense<0.000000e+00> : vector<8x512xf32>
    %443 = tpu.matmul %397, %442, %cst_184 {dimension_numbers = #tpu.dot_dimension_numbers<[1], [0], [0], [1], [0, 0, 1, 1], [], []>} : vector<8x32xbf16>, vector<32x512xbf16>, vector<8x512xf32> -> vector<8x512xf32>
    %c1_185 = arith.constant 1 : index
    %c0_186 = arith.constant 0 : index
    %c1536_187 = arith.constant 1536 : index
    %444 = vector.load %arg6[%c1_185, %c0_186, %c1536_187] : memref<2x1x2048xf32, #tpu.memory_space<vmem>>, vector<1x1x512xf32>
    %445 = vector.shape_cast %444 : vector<1x1x512xf32> to vector<1x512xf32>
    %446 = vector.broadcast %445 : vector<1x512xf32> to vector<8x512xf32>
    %447 = arith.addf %443, %446 : vector<8x512xf32>
    %cst_188 = arith.constant 0.000000e+00 : f32
    %448 = vector.broadcast %cst_188 : f32 to vector<8x512xf32>
    %449 = arith.maximumf %447, %448 : vector<8x512xf32>
    %450 = arith.truncf %449 : vector<8x512xf32> to vector<8x512xbf16>
    %c1_189 = arith.constant 1 : index
    %c1536_190 = arith.constant 1536 : index
    %c0_191 = arith.constant 0 : index
    %451 = vector.load %arg7[%c1_189, %c1536_190, %c0_191] : memref<2x2048x32xbf16, #tpu.memory_space<vmem>>, vector<1x512x32xbf16>
    %452 = vector.shape_cast %451 : vector<1x512x32xbf16> to vector<512x32xbf16>
    %cst_192 = arith.constant dense<0.000000e+00> : vector<8x32xf32>
    %453 = tpu.matmul %450, %452, %cst_192 {dimension_numbers = #tpu.dot_dimension_numbers<[1], [0], [0], [1], [0, 0, 1, 1], [], []>} : vector<8x512xbf16>, vector<512x32xbf16>, vector<8x32xf32> -> vector<8x32xf32>
    %454 = arith.addf %440, %453 : vector<8x32xf32>
    %455 = arith.addf %396, %454 : vector<8x32xf32>
    %456 = vector.broadcast %267 : vector<1x32xf32> to vector<8x32xf32>
    %457 = arith.addf %455, %456 : vector<8x32xf32>
    %cst_193 = arith.constant dense<0.000000e+00> : vector<8xf32>
    %458 = vector.multi_reduction <add>, %457, %cst_193 [1] : vector<8x32xf32> to vector<8xf32>
    %459 = vector.shape_cast %458 : vector<8xf32> to vector<8x1xf32>
    %cst_194 = arith.constant 3.200000e+01 : f32
    %460 = vector.broadcast %cst_194 : f32 to vector<8x1xf32>
    %461 = arith.divf %459, %460 : vector<8x1xf32>
    %462 = vector.broadcast %461 : vector<8x1xf32> to vector<8x32xf32>
    %463 = arith.subf %457, %462 : vector<8x32xf32>
    %464 = arith.mulf %463, %463 : vector<8x32xf32>
    %cst_195 = arith.constant dense<0.000000e+00> : vector<8xf32>
    %465 = vector.multi_reduction <add>, %464, %cst_195 [1] : vector<8x32xf32> to vector<8xf32>
    %466 = vector.shape_cast %465 : vector<8xf32> to vector<8x1xf32>
    %cst_196 = arith.constant 3.200000e+01 : f32
    %467 = vector.broadcast %cst_196 : f32 to vector<8x1xf32>
    %468 = arith.divf %466, %467 : vector<8x1xf32>
    %469 = vector.broadcast %461 : vector<8x1xf32> to vector<8x32xf32>
    %470 = arith.subf %457, %469 : vector<8x32xf32>
    %cst_197 = arith.constant 9.99999974E-6 : f32
    %471 = vector.broadcast %cst_197 : f32 to vector<8x1xf32>
    %472 = arith.addf %468, %471 : vector<8x1xf32>
    %473 = math.rsqrt %472 : vector<8x1xf32>
    %474 = vector.broadcast %473 : vector<8x1xf32> to vector<8x32xf32>
    %475 = arith.mulf %470, %474 : vector<8x32xf32>
    %476 = vector.broadcast %268 : vector<1x32xf32> to vector<8x32xf32>
    %477 = arith.mulf %475, %476 : vector<8x32xf32>
    %478 = vector.broadcast %269 : vector<1x32xf32> to vector<8x32xf32>
    %479 = arith.addf %477, %478 : vector<8x32xf32>
    %480 = arith.truncf %479 : vector<8x32xf32> to vector<8x32xbf16>
    %c0_198 = arith.constant 0 : index
    %c0_199 = arith.constant 0 : index
    %481 = vector.load %arg8[%c0_198, %c0_199] : memref<32x128xbf16, #tpu.memory_space<vmem>>, vector<32x128xbf16>
    %cst_200 = arith.constant dense<0.000000e+00> : vector<8x128xf32>
    %482 = tpu.matmul %480, %481, %cst_200 {dimension_numbers = #tpu.dot_dimension_numbers<[1], [0], [0], [1], [0, 0, 1, 1], [], []>} : vector<8x32xbf16>, vector<32x128xbf16>, vector<8x128xf32> -> vector<8x128xf32>
    %c0_201 = arith.constant 0 : index
    %c0_202 = arith.constant 0 : index
    %483 = vector.load %arg9[%c0_201, %c0_202] : memref<1x128xf32, #tpu.memory_space<vmem>>, vector<1x128xf32>
    %484 = vector.broadcast %483 : vector<1x128xf32> to vector<8x128xf32>
    %485 = arith.addf %482, %484 : vector<8x128xf32>
    %c0_203 = arith.constant 0 : index
    %c0_204 = arith.constant 0 : index
    %486 = vector.load %arg10[%c0_203, %c0_204] : memref<8x128xf32, #tpu.memory_space<vmem>>, vector<8x128xf32>
    tpu.vector_store %arg10[%c0_203, %c0_204], %485 {strides = array<i32>} : memref<8x128xf32, #tpu.memory_space<vmem>>, vector<8x128xf32>,
    return
  }
  func.func @transform_0(%arg0: i32) -> (i32, i32) {
    %c0_i32 = arith.constant 0 : i32
    %c0_i32_0 = arith.constant 0 : i32
    return %arg0, %c0_i32 : i32, i32
  }
  func.func @transform_1(%arg0: i32) -> (i32, i32) {
    %c0_i32 = arith.constant 0 : i32
    %c0_i32_0 = arith.constant 0 : i32
    %c0_i32_1 = arith.constant 0 : i32
    return %c0_i32, %c0_i32_0 : i32, i32
  }
  func.func @transform_2(%arg0: i32) -> (i32, i32, i32, i32) {
    %c0_i32 = arith.constant 0 : i32
    %c0_i32_0 = arith.constant 0 : i32
    %c0_i32_1 = arith.constant 0 : i32
    %c0_i32_2 = arith.constant 0 : i32
    %c0_i32_3 = arith.constant 0 : i32
    return %c0_i32, %c0_i32_0, %c0_i32_1, %c0_i32_2 : i32, i32, i32, i32
  }
  func.func @transform_3(%arg0: i32) -> (i32, i32, i32) {
    %c0_i32 = arith.constant 0 : i32
    %c0_i32_0 = arith.constant 0 : i32
    %c0_i32_1 = arith.constant 0 : i32
    %c0_i32_2 = arith.constant 0 : i32
    return %c0_i32, %c0_i32_0, %c0_i32_1 : i32, i32, i32
  }
  func.func @transform_4(%arg0: i32) -> (i32, i32, i32) {
    %c0_i32 = arith.constant 0 : i32
    %c0_i32_0 = arith.constant 0 : i32
    %c0_i32_1 = arith.constant 0 : i32
    %c0_i32_2 = arith.constant 0 : i32
    return %c0_i32, %c0_i32_0, %c0_i32_1 : i32, i32, i32
  }
  func.func @transform_5(%arg0: i32) -> (i32, i32, i32) {
    %c0_i32 = arith.constant 0 : i32
    %c0_i32_0 = arith.constant 0 : i32
    %c0_i32_1 = arith.constant 0 : i32
    %c0_i32_2 = arith.constant 0 : i32
    return %c0_i32, %c0_i32_0, %c0_i32_1 : i32, i32, i32
  }
  func.func @transform_6(%arg0: i32) -> (i32, i32, i32) {
    %c0_i32 = arith.constant 0 : i32
    %c0_i32_0 = arith.constant 0 : i32
    %c0_i32_1 = arith.constant 0 : i32
    %c0_i32_2 = arith.constant 0 : i32
    return %c0_i32, %c0_i32_0, %c0_i32_1 : i32, i32, i32
  }
  func.func @transform_7(%arg0: i32) -> (i32, i32) {
    %c0_i32 = arith.constant 0 : i32
    %c0_i32_0 = arith.constant 0 : i32
    %c0_i32_1 = arith.constant 0 : i32
    return %c0_i32, %c0_i32_0 : i32, i32
  }
  func.func @transform_8(%arg0: i32) -> (i32, i32) {
    %c0_i32 = arith.constant 0 : i32
    %c0_i32_0 = arith.constant 0 : i32
    %c0_i32_1 = arith.constant 0 : i32
    return %c0_i32, %c0_i32_0 : i32, i32
  }
  func.func @transform_9(%arg0: i32) -> (i32, i32) {
    %c0_i32 = arith.constant 0 : i32
    %c0_i32_0 = arith.constant 0 : i32
    return %arg0, %c0_i32 : i32, i32
  }
}

</mosaic_0001>

<llo_original>
// kernel: squeeze.0
$region0: #{squeeze.0}
  %s0 = inlined_call_operand.vmem [shape: s32[2,1,8], index: 0, kind: input, shape index: {}]
  %s1 = inlined_call_operand.vmem [shape: s32[16,1], index: 1, kind: output, shape index: {}]
  $region1: #{squeeze.0} parent=0
    #allocation0 [shape = 'u8[4096]{0}', space=vmem, size = 0x1000, scoped, tag = 'scoped mem for input reshape']
    %s3 = ssub.s32 4, 1
    %v4 = vld [vmem:[%s0] sm:%s3]
    %5 = vst [vmem:[#allocation0] sm:%s3] %v4
    %v6 = vld [vmem:[#allocation0] sm:$0x3]
    %vm7 = vcmask 7168
    %8 = vst.msk [vmem:[%s1] ss:$8 sm:$0x3] %vm7, %v6
    %v9 = vld [vmem:[#allocation0] sm:$0x3]
    %10 = vrot.lane.b32.xlu0 %v9, 127
    %v11 = vpop.permute.xlu0 %10
    %vm12 = vcmask 7168
    %s13 = scalar_lea.vmem %s1, 1
    %14 = vst.msk [vmem:[%s13] ss:$8 sm:$0x3] %vm12, %v11
    %v15 = vld [vmem:[#allocation0] sm:$0x3]
    %16 = vrot.lane.b32.xlu0 %v15, 126
    %v17 = vpop.permute.xlu0 %16
    %vm18 = vcmask 7168
    %s19 = scalar_lea.vmem %s1, 2
    %20 = vst.msk [vmem:[%s19] ss:$8 sm:$0x3] %vm18, %v17
    %v21 = vld [vmem:[#allocation0] sm:$0x3]
    %22 = vrot.lane.b32.xlu0 %v21, 125
    %v23 = vpop.permute.xlu0 %22
    %vm24 = vcmask 7168
    %s25 = scalar_lea.vmem %s1, 3
    %26 = vst.msk [vmem:[%s25] ss:$8 sm:$0x3] %vm24, %v23
    %v27 = vld [vmem:[#allocation0] sm:$0x3]
    %28 = vrot.lane.b32.xlu0 %v27, 124
    %v29 = vpop.permute.xlu0 %28
    %vm30 = vcmask 7168
    %s31 = scalar_lea.vmem %s1, 4
    %32 = vst.msk [vmem:[%s31] ss:$8 sm:$0x3] %vm30, %v29
    %v33 = vld [vmem:[#allocation0] sm:$0x3]
    %34 = vrot.lane.b32.xlu0 %v33, 123
    %v35 = vpop.permute.xlu0 %34
    %vm36 = vcmask 7168
    %s37 = scalar_lea.vmem %s1, 5
    %38 = vst.msk [vmem:[%s37] ss:$8 sm:$0x3] %vm36, %v35
    %v39 = vld [vmem:[#allocation0] sm:$0x3]
    %40 = vrot.lane.b32.xlu0 %v39, 122
    %v41 = vpop.permute.xlu0 %40
    %vm42 = vcmask 7168
    %s43 = scalar_lea.vmem %s1, 6
    %44 = vst.msk [vmem:[%s43] ss:$8 sm:$0x3] %vm42, %v41
    %v45 = vld [vmem:[#allocation0] sm:$0x3]
    %46 = vrot.lane.b32.xlu0 %v45, 121
    %v47 = vpop.permute.xlu0 %46
    %vm48 = vcmask 7168
    %s49 = scalar_lea.vmem %s1, 7
    %50 = vst.msk [vmem:[%s49] ss:$8 sm:$0x3] %vm48, %v47

// kernel: model_forward.1
$region0: #{model_forward.1}
  #allocation0 [shape = 'u32[]', space=smem, size = 0x4, offset = 0x4, fixed_abs, tag = 'smem constant byte address 0x4 - core index']
  #allocation1 [shape = 'u32[72,128]{1,0:T(1,128)}', space=vmem, size = 0x9000, scoped, tag = 'internal scratch']
  %s0 = inlined_call_operand.vmem [shape: s32[16,1], index: 0, kind: input, shape index: {}]
  %s1 = inlined_call_operand.vmem [shape: bf16[128,32], index: 1, kind: input, shape index: {}]
  %s2 = inlined_call_operand.vmem [shape: bf16[2,4,32,32], index: 2, kind: input, shape index: {}]
  %s3 = inlined_call_operand.vmem [shape: f32[2,16,32], index: 3, kind: input, shape index: {}]
  %s4 = inlined_call_operand.vmem [shape: bf16[2,32,2048], index: 4, kind: input, shape index: {}]
  %s5 = inlined_call_operand.vmem [shape: f32[2,1,2048], index: 5, kind: input, shape index: {}]
  %s6 = inlined_call_operand.vmem [shape: bf16[2,2048,32], index: 6, kind: input, shape index: {}]
  %s7 = inlined_call_operand.vmem [shape: bf16[32,128], index: 7, kind: input, shape index: {}]
  %s8 = inlined_call_operand.vmem [shape: f32[1,128], index: 8, kind: input, shape index: {}]
  %s9 = inlined_call_operand.hbm [shape: f32[16,128], index: 9, kind: output, shape index: {}]
  %s10 = sld [smem:[#allocation0]]
  $region69: #{model_forward.1} parent=0
    _
  %s12 = ssub.s32 1, %s10
  %s13 = scalar_select 0, %s12, %s10
  $region1: #{model_forward.1} parent=0
    #allocation2 [shape = 'u8[8192]{0}', space=vmem, size = 0x2000, scoped, tag = 'output window, operand 0']
    #allocation3 [shape = 's32[2]{0}', space=sflag, size = 0x8, scoped, tag = 'scoped memory for model_forward.1']
    %14 = vsyncpa [#allocation3], 0
    %s15 = scalar_lea.sflag [#allocation3], 1
    %16 = vsyncpa %s15, 0
    loop: start=0, step=1, limit=4
    $region2: #{model_forward.1} parent=1 // loop_pre_header
      _
    $region3: #{model_forward.1} parent=1 // loop_header
      %s18 = sphi 0, %s22
      %p19 = scmp.ge.s32.totalorder %s18, 4
      %s28 = sphi 0, %s30
      %s31 = sphi 0, %s28
      %s32 = sphi 0, %s31
      %s48 = sphi 0, %s32
      %s52 = sphi 0, %s52
      %s54 = sphi 0, %s52
      %s55 = sphi 0, %s54
      %s69 = sphi 0, %s55
      %s73 = sphi 0, %s73
      %s75 = sphi 0, %s73
      %s76 = sphi 0, %s75
      %s90 = sphi 0, %s76
      %s94 = sphi 0, %s94
      %s96 = sphi 0, %s94
      %s97 = sphi 0, %s96
      %s111 = sphi 0, %s97
      %s115 = sphi 0, %s115
      %s117 = sphi 0, %s115
      %s118 = sphi 0, %s117
      %s132 = sphi 0, %s118
      %s136 = sphi 0, %s136
      %s138 = sphi 0, %s136
      %s139 = sphi 0, %s138
      %s153 = sphi 0, %s139
      %s157 = sphi 0, %s157
      %s159 = sphi 0, %s157
      %s160 = sphi 0, %s159
      %s174 = sphi 0, %s160
      %s178 = sphi 0, %s178
      %s180 = sphi 0, %s178
      %s181 = sphi 0, %s180
      %s195 = sphi 0, %s181
      %s199 = sphi 0, %s199
      %s201 = sphi 0, %s199
      %s202 = sphi 0, %s201
      %s216 = sphi 0, %s202
      %s222 = sphi 0, %s224
      %s225 = sphi 0, %s222
      %s226 = sphi 0, %s225
      %s242 = sphi 0, %s226
    $region4: #{model_forward.1} parent=1 // loop_header_branch
      %21 = sbr.rel (%p19) target = $region8
    $region5: #{model_forward.1} parent=1 // loop_body
      %s23 = ssub.s32 %s18, 1
      %s24 = ssub.s32 %s18, 2
      %s25 = sadd.s32 %s18, 1
      %s26 = ssub.s32 %s18, %s25
      %p27 = scmp.eq.s32.totalorder %s26, 0
      %s29 = sadd.s32 %s28, 1
      %s30 = scalar_select %p27, %s28, %s29
      %p33 = pneg %p27
      %p34 = scmp.eq.s32.totalorder %s18, 1
      %p35 = por %p33, %p34
      %p36 = scmp.ne.s32.totalorder %s28, %s31
      %p37 = scmp.eq.s32.totalorder %s18, 0
      %p38 = por %p36, %p37
      %p39 = scmp.ne.s32.totalorder %s28, %s31
      %p40 = scmp.eq.s32.totalorder %s23, 1
      %p41 = por %p39, %p40
      %p42 = scmp.ne.s32.totalorder %s31, %s32
      %p43 = scmp.eq.s32.totalorder %s23, 0
      %p44 = por %p42, %p43
      %p45 = scmp.ne.s32.totalorder %s31, %s32
      %p46 = scmp.eq.s32.totalorder %s24, 1
      %p47 = por %p45, %p46
      %p49 = scmp.ne.s32.totalorder %s32, %s48
      %p50 = scmp.eq.s32.totalorder %s24, 0
      %p51 = por %p49, %p50
      %s53 = sadd.s32 %s52, 1
      %p56 = scmp.eq.s32.totalorder %s18, 1
      %p57 = scmp.ne.s32.totalorder %s52, %s54
      %p58 = scmp.eq.s32.totalorder %s18, 0
      %p59 = por %p57, %p58
      %p60 = scmp.ne.s32.totalorder %s52, %s54
      %p61 = scmp.eq.s32.totalorder %s23, 1
      %p62 = por %p60, %p61
      %p63 = scmp.ne.s32.totalorder %s54, %s55
      %p64 = scmp.eq.s32.totalorder %s23, 0
      %p65 = por %p63, %p64
      %p66 = scmp.ne.s32.totalorder %s54, %s55
      %p67 = scmp.eq.s32.totalorder %s24, 1
      %p68 = por %p66, %p67
      %p70 = scmp.ne.s32.totalorder %s55, %s69
      %p71 = scmp.eq.s32.totalorder %s24, 0
      %p72 = por %p70, %p71
      %s74 = sadd.s32 %s73, 1
      %p77 = scmp.eq.s32.totalorder %s18, 1
      %p78 = scmp.ne.s32.totalorder %s73, %s75
      %p79 = scmp.eq.s32.totalorder %s18, 0
      %p80 = por %p78, %p79
      %p81 = scmp.ne.s32.totalorder %s73, %s75
      %p82 = scmp.eq.s32.totalorder %s23, 1
      %p83 = por %p81, %p82
      %p84 = scmp.ne.s32.totalorder %s75, %s76
      %p85 = scmp.eq.s32.totalorder %s23, 0
      %p86 = por %p84, %p85
      %p87 = scmp.ne.s32.totalorder %s75, %s76
      %p88 = scmp.eq.s32.totalorder %s24, 1
      %p89 = por %p87, %p88
      %p91 = scmp.ne.s32.totalorder %s76, %s90
      %p92 = scmp.eq.s32.totalorder %s24, 0
      %p93 = por %p91, %p92
      %s95 = sadd.s32 %s94, 1
      %p98 = scmp.eq.s32.totalorder %s18, 1
      %p99 = scmp.ne.s32.totalorder %s94, %s96
      %p100 = scmp.eq.s32.totalorder %s18, 0
      %p101 = por %p99, %p100
      %p102 = scmp.ne.s32.totalorder %s94, %s96
      %p103 = scmp.eq.s32.totalorder %s23, 1
      %p104 = por %p102, %p103
      %p105 = scmp.ne.s32.totalorder %s96, %s97
      %p106 = scmp.eq.s32.totalorder %s23, 0
      %p107 = por %p105, %p106
      %p108 = scmp.ne.s32.totalorder %s96, %s97
      %p109 = scmp.eq.s32.totalorder %s24, 1
      %p110 = por %p108, %p109
      %p112 = scmp.ne.s32.totalorder %s97, %s111
      %p113 = scmp.eq.s32.totalorder %s24, 0
      %p114 = por %p112, %p113
      %s116 = sadd.s32 %s115, 1
      %p119 = scmp.eq.s32.totalorder %s18, 1
      %p120 = scmp.ne.s32.totalorder %s115, %s117
      %p121 = scmp.eq.s32.totalorder %s18, 0
      %p122 = por %p120, %p121
      %p123 = scmp.ne.s32.totalorder %s115, %s117
      %p124 = scmp.eq.s32.totalorder %s23, 1
      %p125 = por %p123, %p124
      %p126 = scmp.ne.s32.totalorder %s117, %s118
      %p127 = scmp.eq.s32.totalorder %s23, 0
      %p128 = por %p126, %p127
      %p129 = scmp.ne.s32.totalorder %s117, %s118
      %p130 = scmp.eq.s32.totalorder %s24, 1
      %p131 = por %p129, %p130
      %p133 = scmp.ne.s32.totalorder %s118, %s132
      %p134 = scmp.eq.s32.totalorder %s24, 0
      %p135 = por %p133, %p134
      %s137 = sadd.s32 %s136, 1
      %p140 = scmp.eq.s32.totalorder %s18, 1
      %p141 = scmp.ne.s32.totalorder %s136, %s138
      %p142 = scmp.eq.s32.totalorder %s18, 0
      %p143 = por %p141, %p142
      %p144 = scmp.ne.s32.totalorder %s136, %s138
      %p145 = scmp.eq.s32.totalorder %s23, 1
      %p146 = por %p144, %p145
      %p147 = scmp.ne.s32.totalorder %s138, %s139
      %p148 = scmp.eq.s32.totalorder %s23, 0
      %p149 = por %p147, %p148
      %p150 = scmp.ne.s32.totalorder %s138, %s139
      %p151 = scmp.eq.s32.totalorder %s24, 1
      %p152 = por %p150, %p151
      %p154 = scmp.ne.s32.totalorder %s139, %s153
      %p155 = scmp.eq.s32.totalorder %s24, 0
      %p156 = por %p154, %p155
      %s158 = sadd.s32 %s157, 1
      %p161 = scmp.eq.s32.totalorder %s18, 1
      %p162 = scmp.ne.s32.totalorder %s157, %s159
      %p163 = scmp.eq.s32.totalorder %s18, 0
      %p164 = por %p162, %p163
      %p165 = scmp.ne.s32.totalorder %s157, %s159
      %p166 = scmp.eq.s32.totalorder %s23, 1
      %p167 = por %p165, %p166
      %p168 = scmp.ne.s32.totalorder %s159, %s160
      %p169 = scmp.eq.s32.totalorder %s23, 0
      %p170 = por %p168, %p169
      %p171 = scmp.ne.s32.totalorder %s159, %s160
      %p172 = scmp.eq.s32.totalorder %s24, 1
      %p173 = por %p171, %p172
      %p175 = scmp.ne.s32.totalorder %s160, %s174
      %p176 = scmp.eq.s32.totalorder %s24, 0
      %p177 = por %p175, %p176
      %s179 = sadd.s32 %s178, 1
      %p182 = scmp.eq.s32.totalorder %s18, 1
      %p183 = scmp.ne.s32.totalorder %s178, %s180
      %p184 = scmp.eq.s32.totalorder %s18, 0
      %p185 = por %p183, %p184
      %p186 = scmp.ne.s32.totalorder %s178, %s180
      %p187 = scmp.eq.s32.totalorder %s23, 1
      %p188 = por %p186, %p187
      %p189 = scmp.ne.s32.totalorder %s180, %s181
      %p190 = scmp.eq.s32.totalorder %s23, 0
      %p191 = por %p189, %p190
      %p192 = scmp.ne.s32.totalorder %s180, %s181
      %p193 = scmp.eq.s32.totalorder %s24, 1
      %p194 = por %p192, %p193
      %p196 = scmp.ne.s32.totalorder %s181, %s195
      %p197 = scmp.eq.s32.totalorder %s24, 0
      %p198 = por %p196, %p197
      %s200 = sadd.s32 %s199, 1
      %p203 = scmp.eq.s32.totalorder %s18, 1
      %p204 = scmp.ne.s32.totalorder %s199, %s201
      %p205 = scmp.eq.s32.totalorder %s18, 0
      %p206 = por %p204, %p205
      %p207 = scmp.ne.s32.totalorder %s199, %s201
      %p208 = scmp.eq.s32.totalorder %s23, 1
      %p209 = por %p207, %p208
      %p210 = scmp.ne.s32.totalorder %s201, %s202
      %p211 = scmp.eq.s32.totalorder %s23, 0
      %p212 = por %p210, %p211
      %p213 = scmp.ne.s32.totalorder %s201, %s202
      %p214 = scmp.eq.s32.totalorder %s24, 1
      %p215 = por %p213, %p214
      %p217 = scmp.ne.s32.totalorder %s202, %s216
      %p218 = scmp.eq.s32.totalorder %s24, 0
      %p219 = por %p217, %p218
      %s220 = ssub.s32 %s18, %s25
      %p221 = scmp.eq.s32.totalorder %s220, 0
      %s223 = sadd.s32 %s222, 1
      %s224 = scalar_select %p221, %s222, %s223
      %p227 = pneg %p221
      %p228 = scmp.eq.s32.totalorder %s18, 1
      %p229 = por %p227, %p228
      %p230 = scmp.ne.s32.totalorder %s222, %s225
      %p231 = scmp.eq.s32.totalorder %s18, 0
      %p232 = por %p230, %p231
      %p233 = scmp.ne.s32.totalorder %s222, %s225
      %p234 = scmp.eq.s32.totalorder %s23, 1
      %p235 = por %p233, %p234
      %p236 = scmp.ne.s32.totalorder %s225, %s226
      %p237 = scmp.eq.s32.totalorder %s23, 0
      %p238 = por %p236, %p237
      %p239 = scmp.ne.s32.totalorder %s225, %s226
      %p240 = scmp.eq.s32.totalorder %s24, 1
      %p241 = por %p239, %p240
      %p243 = scmp.ne.s32.totalorder %s226, %s242
      %p244 = scmp.eq.s32.totalorder %s24, 0
      %p245 = por %p243, %p244
      %p246 = scmp.le.s32.totalorder 1, %s18
      %p247 = scmp.lt.s32.totalorder %s18, 3
      %p248 = pnand %p246, %p247
      %p249 = pneg %p248
      // Predicated region
      $region9: #{model_forward.1} parent=5 // pred_check
        _
      $region10: #{model_forward.1} parent=5 // pred_check_branch
        %251 = sbr.rel (%p248) target = $region12
      $region11: #{model_forward.1} parent=5 // pred_region
        %s252 = ssub.s32 %s18, 1
        // Predicated region
        $region13: #{model_forward.1} parent=11 // pred_check
          %p253 = pneg %p65
        $region14: #{model_forward.1} parent=11 // pred_check_branch
          %255 = sbr.rel (%p253) target = $region16
        $region15: #{model_forward.1} parent=11 // pred_region
          _
        $region16: #{model_forward.1} parent=11 // pred_fallthru
          _
        // Predicated region
        $region17: #{model_forward.1} parent=11 // pred_check
          %p256 = pneg %p86
        $region18: #{model_forward.1} parent=11 // pred_check_branch
          %258 = sbr.rel (%p256) target = $region20
        $region19: #{model_forward.1} parent=11 // pred_region
          _
        $region20: #{model_forward.1} parent=11 // pred_fallthru
          _
        // Predicated region
        $region21: #{model_forward.1} parent=11 // pred_check
          %p259 = pneg %p107
        $region22: #{model_forward.1} parent=11 // pred_check_branch
          %261 = sbr.rel (%p259) target = $region24
        $region23: #{model_forward.1} parent=11 // pred_region
          _
        $region24: #{model_forward.1} parent=11 // pred_fallthru
          _
        // Predicated region
        $region25: #{model_forward.1} parent=11 // pred_check
          %p262 = pneg %p128
        $region26: #{model_forward.1} parent=11 // pred_check_branch
          %264 = sbr.rel (%p262) target = $region28
        $region27: #{model_forward.1} parent=11 // pred_region
          _
        $region28: #{model_forward.1} parent=11 // pred_fallthru
          _
        // Predicated region
        $region29: #{model_forward.1} parent=11 // pred_check
          %p265 = pneg %p149
        $region30: #{model_forward.1} parent=11 // pred_check_branch
          %267 = sbr.rel (%p265) target = $region32
        $region31: #{model_forward.1} parent=11 // pred_region
          _
        $region32: #{model_forward.1} parent=11 // pred_fallthru
          _
        // Predicated region
        $region33: #{model_forward.1} parent=11 // pred_check
          %p268 = pneg %p170
        $region34: #{model_forward.1} parent=11 // pred_check_branch
          %270 = sbr.rel (%p268) target = $region36
        $region35: #{model_forward.1} parent=11 // pred_region
          _
        $region36: #{model_forward.1} parent=11 // pred_fallthru
          _
        // Predicated region
        $region37: #{model_forward.1} parent=11 // pred_check
          %p271 = pneg %p191
        $region38: #{model_forward.1} parent=11 // pred_check_branch
          %273 = sbr.rel (%p271) target = $region40
        $region39: #{model_forward.1} parent=11 // pred_region
          _
        $region40: #{model_forward.1} parent=11 // pred_fallthru
          _
        // Predicated region
        $region41: #{model_forward.1} parent=11 // pred_check
          %p274 = pneg %p212
        $region42: #{model_forward.1} parent=11 // pred_check_branch
          %276 = sbr.rel (%p274) target = $region44
        $region43: #{model_forward.1} parent=11 // pred_region
          _
        $region44: #{model_forward.1} parent=11 // pred_fallthru
          _
      $region12: #{model_forward.1} parent=5 // pred_fallthru
        _
      %p277 = scmp.lt.s32.totalorder %s18, 2
      // Predicated region
      $region45: #{model_forward.1} parent=5 // pred_check
        %p278 = pneg %p277
      $region46: #{model_forward.1} parent=5 // pred_check_branch
        %280 = sbr.rel (%p278) target = $region48
      $region47: #{model_forward.1} parent=5 // pred_region
        // Predicated region
        $region49: #{model_forward.1} parent=47 // pred_check
          %p281 = pneg %p38
        $region50: #{model_forward.1} parent=47 // pred_check_branch
          %283 = sbr.rel (%p281) target = $region52
        $region51: #{model_forward.1} parent=47 // pred_region
          %p284 = scmp.lt.s32.totalorder %s18, 1
          %s285 = scalar_select %p284, %s18, 1
          %s286 = smul.addr %s285, 8
          %s287 = scalar_lea.vmem %s0, %s286
        $region52: #{model_forward.1} parent=47 // pred_fallthru
          _
      $region48: #{model_forward.1} parent=5 // pred_fallthru
        _
      %p288 = scmp.le.s32.totalorder 1, %s18
      %p289 = scmp.lt.s32.totalorder %s18, 3
      %p290 = pnand %p288, %p289
      %p291 = pneg %p290
      // Predicated region
      $region53: #{model_forward.1} parent=5 // pred_check
        _
      $region54: #{model_forward.1} parent=5 // pred_check_branch
        %293 = sbr.rel (%p290) target = $region56
      $region55: #{model_forward.1} parent=5 // pred_region
        %s294 = ssub.s32 %s18, 1
        %p295 = scmp.lt.s32.totalorder %s23, 1
        %s296 = scalar_select %p295, %s23, 1
        %s297 = smul.addr %s296, 8
        %s298 = scalar_lea.vmem %s0, %s297
        %p299 = pneg %p44
        %p300 = pneg %p41
        %p301 = pneg %p65
        %p302 = pneg %p62
        %p303 = pneg %p86
        %p304 = pneg %p83
        %p305 = pneg %p107
        %p306 = pneg %p104
        %p307 = pneg %p128
        %p308 = pneg %p125
        %p309 = pneg %p149
        %p310 = pneg %p146
        %p311 = pneg %p170
        %p312 = pneg %p167
        %p313 = pneg %p191
        %p314 = pneg %p188
        %p315 = pneg %p212
        %p316 = pneg %p209
        %p317 = pneg %p238
        %p318 = pneg %p235
        %s319 = sand.u32 %s225, 1
        %s320 = scalar_lea.sflag [#allocation3], %s319
        %s321 = sand.u32 %s225, 1
        %s322 = smul.addr %s321, 8
        %s323 = scalar_lea.vmem [#allocation2], %s322
        %p324 = scmp.lt.s32.totalorder %s23, 1
        %s325 = scalar_select %p324, %s23, 1
        %s326 = smul.addr %s325, 8
        %s327 = scalar_lea.vmem %s0, %s326
        %v329 = vld [vmem:[%s327] sm:$0xff]
        %v330 = vlaneseq
        %v331 = vand.u32 %v330, 127
        %332 = vset.pattern.permute.xlu0 0
        %333 = vperm.xlu0 %332, %v329
        %v334 = vpop.permute.xlu0 %333
        %vm335 = vcmp.eq.s32.totalorder %v331, %v334
        %v336 = vsel %vm335, 1, 0
        %v337 = vcvt.s32.f32 %v336
        %v338 = vpack.c.bf16 %v337, %v337
        %v339 = vld [vmem:[%s1] sm:$0xf]
        %v340 = vld [vmem:[%s1 + $0x4] sm:$0xf]
        %v341 = vld [vmem:[%s1 + $0x8] sm:$0xf]
        %v342 = vld [vmem:[%s1 + $0xc] sm:$0xf]
        %v343 = vld [vmem:[%s1 + $0x10] sm:$0xf]
        %v344 = vld [vmem:[%s1 + $0x14] sm:$0xf]
        %v345 = vld [vmem:[%s1 + $0x18] sm:$0xf]
        %v346 = vld [vmem:[%s1 + $0x1c] sm:$0xf]
        %v347 = vld [vmem:[%s1 + $0x20] sm:$0xf]
        %v348 = vld [vmem:[%s1 + $0x24] sm:$0xf]
        %v349 = vld [vmem:[%s1 + $0x28] sm:$0xf]
        %v350 = vld [vmem:[%s1 + $0x2c] sm:$0xf]
        %v351 = vld [vmem:[%s1 + $0x30] sm:$0xf]
        %v352 = vld [vmem:[%s1 + $0x34] sm:$0xf]
        %v353 = vld [vmem:[%s1 + $0x38] sm:$0xf]
        %v354 = vld [vmem:[%s1 + $0x3c] sm:$0xf]
        %v371 = vunpack.c.l.b16 %v339
        %v372 = vunpack.c.l.b16 %v340
        %v373 = vunpack.c.l.b16 %v341
        %v374 = vunpack.c.l.b16 %v342
        %v375 = vunpack.c.l.b16 %v343
        %v376 = vunpack.c.l.b16 %v344
        %v377 = vunpack.c.l.b16 %v345
        %v378 = vunpack.c.l.b16 %v346
        %v379 = vunpack.c.l.b16 %v347
        %v380 = vunpack.c.l.b16 %v348
        %v381 = vunpack.c.l.b16 %v349
        %v382 = vunpack.c.l.b16 %v350
        %v383 = vunpack.c.l.b16 %v351
        %v384 = vunpack.c.l.b16 %v352
        %v385 = vunpack.c.l.b16 %v353
        %v386 = vunpack.c.l.b16 %v354
        %v387 = vpack.c.b16 %v372, %v371
        %v388 = vpack.c.b16 %v374, %v373
        %v389 = vpack.c.b16 %v376, %v375
        %v390 = vpack.c.b16 %v378, %v377
        %v391 = vpack.c.b16 %v380, %v379
        %v392 = vpack.c.b16 %v382, %v381
        %v393 = vpack.c.b16 %v384, %v383
        %v394 = vpack.c.b16 %v386, %v385
        %403 = vmatpush.bf16.msra.mxu0 %v394
        %404 = vmatpush.bf16.msra.mxu0 %v393
        %405 = vmatpush.bf16.msra.mxu0 %v392
        %406 = vmatpush.bf16.msra.mxu0 %v391
        %407 = vmatpush.bf16.msra.mxu0 %v390
        %408 = vmatpush.bf16.msra.mxu0 %v389
        %409 = vmatpush.bf16.msra.mxu0 %v388
        %410 = vmatpush.bf16.msra.mxu0 %v387
        %411 = vmatmul.bf16.gmra.mxu0 %v338
        %v412 = vpop.f32.mrf.mxu0
        %v413 = vadd.f32 0.0, %v412
        %v414 = vpop.f32.mrf.mxu0
        %415 = vdwg.mxu0
        %vm416 = vcmp.ge.s32.totalorder %v331, 0
        %vm417 = vcmp.lt.s32.totalorder %v331, 8
        %vm418 = vmand %vm416, %vm417
        %v419 = vsel %vm418, 1, 0
        %v420 = vcvt.s32.f32 %v419
        %vm421 = vcmp.ge.s32.totalorder %v331, 8
        %vm422 = vcmp.lt.s32.totalorder %v331, 16
        %vm423 = vmand %vm421, %vm422
        %v424 = vsel %vm423, 1, 0
        %v425 = vcvt.s32.f32 %v424
        %vm426 = vcmp.ge.s32.totalorder %v331, 16
        %vm427 = vcmp.lt.s32.totalorder %v331, 24
        %vm428 = vmand %vm426, %vm427
        %v429 = vsel %vm428, 1, 0
        %v430 = vcvt.s32.f32 %v429
        %vm431 = vcmp.ge.s32.totalorder %v331, 24
        %vm432 = vcmp.lt.s32.totalorder %v331, 32
        %vm433 = vmand %vm431, %vm432
        %v434 = vsel %vm433, 1, 0
        %v435 = vcvt.s32.f32 %v434
        %v436 = vld [vmem:[%s3] sm:$0xff]
        %v437 = vld [vmem:[%s3 + $0x8] sm:$0xff]
        %v438 = vpack.c.bf16 %v413, %v413
        %v439 = vld [vmem:[%s2] sm:$0xf]
        %v440 = vld [vmem:[%s2 + $0x4] sm:$0xf]
        %v441 = vld [vmem:[%s2 + $0x8] sm:$0xf]
        %v442 = vld [vmem:[%s2 + $0xc] sm:$0xf]
        %v443 = vperm.slane %v436, 0
        %v448 = vunpack.c.l.b16 %v439
        %v449 = vunpack.c.l.b16 %v440
        %v450 = vunpack.c.l.b16 %v441
        %v451 = vunpack.c.l.b16 %v442
        %v452 = vpack.c.b16 %v449, %v448
        %v453 = vpack.c.b16 %v451, %v450
        %vm456 = vcmask 261120
        %v458 = vsel %vm456, %v438, 0
        %460 = vmatpush.bf16.msra.mxu0 0
        %461 = vmatpush.bf16.msra.mxu0 0
        %462 = vmatpush.bf16.msra.mxu0 0
        %463 = vmatpush.bf16.msra.mxu0 0
        %464 = vmatpush.bf16.msra.mxu0 0
        %465 = vmatpush.bf16.msra.mxu0 0
        %466 = vmatpush.bf16.msra.mxu0 %v453
        %467 = vmatpush.bf16.msra.mxu0 %v452
        %468 = vmatmul.bf16.gmra.mxu0 %v458
        %v469 = vpop.f32.mrf.mxu0
        %v470 = vadd.f32 %v443, %v469
        %v471 = vpop.f32.mrf.mxu0
        %472 = vdwg.mxu0
        %s473 = scalar_lea.vmem %s2, 16
        %v474 = vld [vmem:[%s473] sm:$0xf]
        %v475 = vld [vmem:[%s473 + $0x4] sm:$0xf]
        %v476 = vld [vmem:[%s473 + $0x8] sm:$0xf]
        %v477 = vld [vmem:[%s473 + $0xc] sm:$0xf]
        %v478 = vperm.slane %v436, 1
        %v483 = vunpack.c.l.b16 %v474
        %v484 = vunpack.c.l.b16 %v475
        %v485 = vunpack.c.l.b16 %v476
        %v486 = vunpack.c.l.b16 %v477
        %v487 = vpack.c.b16 %v484, %v483
        %v488 = vpack.c.b16 %v486, %v485
        %491 = vmatpush.bf16.msra.mxu0 0
        %492 = vmatpush.bf16.msra.mxu0 0
        %493 = vmatpush.bf16.msra.mxu0 0
        %494 = vmatpush.bf16.msra.mxu0 0
        %495 = vmatpush.bf16.msra.mxu0 0
        %496 = vmatpush.bf16.msra.mxu0 0
        %497 = vmatpush.bf16.msra.mxu0 %v488
        %498 = vmatpush.bf16.msra.mxu0 %v487
        %499 = vmatmul.bf16.gmra.mxu0 %v458
        %v500 = vpop.f32.mrf.mxu0
        %v501 = vadd.f32 %v478, %v500
        %v502 = vpop.f32.mrf.mxu0
        %503 = vdwg.mxu0
        %s504 = scalar_lea.vmem %s2, 32
        %v505 = vld [vmem:[%s504] sm:$0xf]
        %v506 = vld [vmem:[%s504 + $0x4] sm:$0xf]
        %v507 = vld [vmem:[%s504 + $0x8] sm:$0xf]
        %v508 = vld [vmem:[%s504 + $0xc] sm:$0xf]
        %v509 = vperm.slane %v436, 2
        %v514 = vunpack.c.l.b16 %v505
        %v515 = vunpack.c.l.b16 %v506
        %v516 = vunpack.c.l.b16 %v507
        %v517 = vunpack.c.l.b16 %v508
        %v518 = vpack.c.b16 %v515, %v514
        %v519 = vpack.c.b16 %v517, %v516
        %522 = vmatpush.bf16.msra.mxu0 0
        %523 = vmatpush.bf16.msra.mxu0 0
        %524 = vmatpush.bf16.msra.mxu0 0
        %525 = vmatpush.bf16.msra.mxu0 0
        %526 = vmatpush.bf16.msra.mxu0 0
        %527 = vmatpush.bf16.msra.mxu0 0
        %528 = vmatpush.bf16.msra.mxu0 %v519
        %529 = vmatpush.bf16.msra.mxu0 %v518
        %530 = vmatmul.bf16.gmra.mxu0 %v458
        %v531 = vpop.f32.mrf.mxu0
        %v532 = vadd.f32 %v509, %v531
        %v533 = vpop.f32.mrf.mxu0
        %534 = vdwg.mxu0
        %v535 = vpack.c.bf16 %v501, %v501
        %v536 = vmul.f32 %v470, %v420
        %v537 = vpack.c.bf16 %v536, %v536
        %v538 = vmul.f32 %v532, %v420
        %v539 = vpack.c.bf16 %v538, %v538
        %v541 = vsel %vm456, %v537, 0
        %v544 = vsel %vm456, %v535, 0
        %546 = vmatpush.bf16.xpose.msra.mxu0 0
        %547 = vmatpush.bf16.xpose.msra.mxu0 0
        %548 = vmatpush.bf16.xpose.msra.mxu0 0
        %549 = vmatpush.bf16.xpose.msra.mxu0 0
        %550 = vmatpush.bf16.xpose.msra.mxu0 0
        %551 = vmatpush.bf16.xpose.msra.mxu0 0
        %552 = vmatpush.bf16.xpose.msra.mxu0 0
        %553 = vmatpush.bf16.xpose.msra.mxu0 %v544
        %554 = vmatmul.bf16.gmra.mxu0 %v541
        %v555 = vpop.f32.mrf.mxu0
        %v556 = vadd.f32 0.0, %v555
        %v557 = vpop.f32.mrf.mxu0
        %558 = vdwg.mxu0
        %vm559 = vcmask 64512
        %v560 = vsel %vm559, %v556, -inf
        %561 = vmax.xlane.f32.xlu0 %v560
        %v562 = vpop.xlane.xlu0 %561
        %v563 = vsub.f32 %v556, %v562
        %v564 = vmul.f32 %v563, 1.442695
        %v565 = vpow.pop %v564
        %v566 = vsel %vm559, %v565, 0.0
        %567 = vadd.xlane.f32.xlu0 %v566
        %v568 = vpop.xlane.xlu0 %567
        %v569 = vrcp.pop %v568
        %v570 = vmul.f32 %v565, %v569
        %v571 = vpack.c.bf16 %v570, %v570
        %v572 = vmul.f32 %v470, %v425
        %v573 = vpack.c.bf16 %v572, %v572
        %v574 = vmul.f32 %v532, %v425
        %v575 = vpack.c.bf16 %v574, %v574
        %v577 = vsel %vm456, %v573, 0
        %579 = vmatpush.bf16.xpose.msra.mxu0 0
        %580 = vmatpush.bf16.xpose.msra.mxu0 0
        %581 = vmatpush.bf16.xpose.msra.mxu0 0
        %582 = vmatpush.bf16.xpose.msra.mxu0 0
        %583 = vmatpush.bf16.xpose.msra.mxu0 0
        %584 = vmatpush.bf16.xpose.msra.mxu0 0
        %585 = vmatpush.bf16.xpose.msra.mxu0 0
        %586 = vmatpush.bf16.xpose.msra.mxu0 %v544
        %587 = vmatmul.bf16.gmra.mxu0 %v577
        %v588 = vpop.f32.mrf.mxu0
        %v589 = vadd.f32 0.0, %v588
        %v590 = vpop.f32.mrf.mxu0
        %591 = vdwg.mxu0
        %v592 = vsel %vm559, %v589, -inf
        %593 = vmax.xlane.f32.xlu0 %v592
        %v594 = vpop.xlane.xlu0 %593
        %v595 = vsub.f32 %v589, %v594
        %v596 = vmul.f32 %v595, 1.442695
        %v597 = vpow.pop %v596
        %v598 = vsel %vm559, %v597, 0.0
        %599 = vadd.xlane.f32.xlu0 %v598
        %v600 = vpop.xlane.xlu0 %599
        %v601 = vrcp.pop %v600
        %v602 = vmul.f32 %v597, %v601
        %v603 = vpack.c.bf16 %v602, %v602
        %v605 = vsel %vm559, %v603, 0
        %vm607 = vcmask 1043456
        %v609 = vsel %vm607, %v575, 0
        %611 = vmatpush.bf16.msra.mxu0 0
        %612 = vmatpush.bf16.msra.mxu0 0
        %613 = vmatpush.bf16.msra.mxu0 0
        %614 = vmatpush.bf16.msra.mxu0 0
        %615 = vmatpush.bf16.msra.mxu0 0
        %616 = vmatpush.bf16.msra.mxu0 0
        %617 = vmatpush.bf16.msra.mxu0 0
        %618 = vmatpush.bf16.msra.mxu0 %v609
        %619 = vmatmul.bf16.gmra.mxu0 %v605
        %v620 = vpop.f32.mrf.mxu0
        %v621 = vadd.f32 0.0, %v620
        %v622 = vpop.f32.mrf.mxu0
        %623 = vdwg.mxu0
        %v625 = vsel %vm559, %v571, 0
        %v628 = vsel %vm607, %v539, 0
        %630 = vmatpush.bf16.msra.mxu0 0
        %631 = vmatpush.bf16.msra.mxu0 0
        %632 = vmatpush.bf16.msra.mxu0 0
        %633 = vmatpush.bf16.msra.mxu0 0
        %634 = vmatpush.bf16.msra.mxu0 0
        %635 = vmatpush.bf16.msra.mxu0 0
        %636 = vmatpush.bf16.msra.mxu0 0
        %637 = vmatpush.bf16.msra.mxu0 %v628
        %638 = vmatmul.bf16.gmra.mxu0 %v625
        %v639 = vpop.f32.mrf.mxu0
        %v640 = vadd.f32 %v621, %v639
        %v641 = vpop.f32.mrf.mxu0
        %642 = vdwg.mxu0
        %v643 = vmul.f32 %v470, %v430
        %v644 = vpack.c.bf16 %v643, %v643
        %v645 = vmul.f32 %v532, %v430
        %v646 = vpack.c.bf16 %v645, %v645
        %v648 = vsel %vm456, %v644, 0
        %650 = vmatpush.bf16.xpose.msra.mxu0 0
        %651 = vmatpush.bf16.xpose.msra.mxu0 0
        %652 = vmatpush.bf16.xpose.msra.mxu0 0
        %653 = vmatpush.bf16.xpose.msra.mxu0 0
        %654 = vmatpush.bf16.xpose.msra.mxu0 0
        %655 = vmatpush.bf16.xpose.msra.mxu0 0
        %656 = vmatpush.bf16.xpose.msra.mxu0 0
        %657 = vmatpush.bf16.xpose.msra.mxu0 %v544
        %658 = vmatmul.bf16.gmra.mxu0 %v648
        %v659 = vpop.f32.mrf.mxu0
        %v660 = vadd.f32 0.0, %v659
        %v661 = vpop.f32.mrf.mxu0
        %662 = vdwg.mxu0
        %v663 = vsel %vm559, %v660, -inf
        %664 = vmax.xlane.f32.xlu0 %v663
        %v665 = vpop.xlane.xlu0 %664
        %v666 = vsub.f32 %v660, %v665
        %v667 = vmul.f32 %v666, 1.442695
        %v668 = vpow.pop %v667
        %v669 = vsel %vm559, %v668, 0.0
        %670 = vadd.xlane.f32.xlu0 %v669
        %v671 = vpop.xlane.xlu0 %670
        %v672 = vrcp.pop %v671
        %v673 = vmul.f32 %v668, %v672
        %v674 = vpack.c.bf16 %v673, %v673
        %v676 = vsel %vm559, %v674, 0
        %v679 = vsel %vm607, %v646, 0
        %681 = vmatpush.bf16.msra.mxu0 0
        %682 = vmatpush.bf16.msra.mxu0 0
        %683 = vmatpush.bf16.msra.mxu0 0
        %684 = vmatpush.bf16.msra.mxu0 0
        %685 = vmatpush.bf16.msra.mxu0 0
        %686 = vmatpush.bf16.msra.mxu0 0
        %687 = vmatpush.bf16.msra.mxu0 0
        %688 = vmatpush.bf16.msra.mxu0 %v679
        %689 = vmatmul.bf16.gmra.mxu0 %v676
        %v690 = vpop.f32.mrf.mxu0
        %v691 = vadd.f32 0.0, %v690
        %v692 = vpop.f32.mrf.mxu0
        %693 = vdwg.mxu0
        %v694 = vadd.f32 %v640, %v691
        %v695 = vmul.f32 %v470, %v435
        %v696 = vpack.c.bf16 %v695, %v695
        %v697 = vmul.f32 %v532, %v435
        %v698 = vpack.c.bf16 %v697, %v697
        %v700 = vsel %vm456, %v696, 0
        %702 = vmatpush.bf16.xpose.msra.mxu0 0
        %703 = vmatpush.bf16.xpose.msra.mxu0 0
        %704 = vmatpush.bf16.xpose.msra.mxu0 0
        %705 = vmatpush.bf16.xpose.msra.mxu0 0
        %706 = vmatpush.bf16.xpose.msra.mxu0 0
        %707 = vmatpush.bf16.xpose.msra.mxu0 0
        %708 = vmatpush.bf16.xpose.msra.mxu0 0
        %709 = vmatpush.bf16.xpose.msra.mxu0 %v544
        %710 = vmatmul.bf16.gmra.mxu0 %v700
        %v711 = vpop.f32.mrf.mxu0
        %v712 = vadd.f32 0.0, %v711
        %v713 = vpop.f32.mrf.mxu0
        %714 = vdwg.mxu0
        %v715 = vsel %vm559, %v712, -inf
        %716 = vmax.xlane.f32.xlu0 %v715
        %v717 = vpop.xlane.xlu0 %716
        %v718 = vsub.f32 %v712, %v717
        %v719 = vmul.f32 %v718, 1.442695
        %v720 = vpow.pop %v719
        %v721 = vsel %vm559, %v720, 0.0
        %722 = vadd.xlane.f32.xlu0 %v721
        %v723 = vpop.xlane.xlu0 %722
        %v724 = vrcp.pop %v723
        %v725 = vmul.f32 %v720, %v724
        %v726 = vpack.c.bf16 %v725, %v725
        %v728 = vsel %vm559, %v726, 0
        %v731 = vsel %vm607, %v698, 0
        %733 = vmatpush.bf16.msra.mxu0 0
        %734 = vmatpush.bf16.msra.mxu0 0
        %735 = vmatpush.bf16.msra.mxu0 0
        %736 = vmatpush.bf16.msra.mxu0 0
        %737 = vmatpush.bf16.msra.mxu0 0
        %738 = vmatpush.bf16.msra.mxu0 0
        %739 = vmatpush.bf16.msra.mxu0 0
        %740 = vmatpush.bf16.msra.mxu0 %v731
        %741 = vmatmul.bf16.gmra.mxu0 %v728
        %v742 = vpop.f32.mrf.mxu0
        %v743 = vadd.f32 0.0, %v742
        %v744 = vpop.f32.mrf.mxu0
        %745 = vdwg.mxu0
        %v746 = vadd.f32 %v694, %v743
        %v747 = vpack.c.bf16 %v746, %v746
        %s748 = scalar_lea.vmem %s2, 48
        %v749 = vld [vmem:[%s748] sm:$0xf]
        %v750 = vld [vmem:[%s748 + $0x4] sm:$0xf]
        %v751 = vld [vmem:[%s748 + $0x8] sm:$0xf]
        %v752 = vld [vmem:[%s748 + $0xc] sm:$0xf]
        %v753 = vperm.slane %v436, 3
        %v758 = vunpack.c.l.b16 %v749
        %v759 = vunpack.c.l.b16 %v750
        %v760 = vunpack.c.l.b16 %v751
        %v761 = vunpack.c.l.b16 %v752
        %v762 = vpack.c.b16 %v759, %v758
        %v763 = vpack.c.b16 %v761, %v760
        %v767 = vsel %vm456, %v747, 0
        %769 = vmatpush.bf16.msra.mxu0 0
        %770 = vmatpush.bf16.msra.mxu0 0
        %771 = vmatpush.bf16.msra.mxu0 0
        %772 = vmatpush.bf16.msra.mxu0 0
        %773 = vmatpush.bf16.msra.mxu0 0
        %774 = vmatpush.bf16.msra.mxu0 0
        %775 = vmatpush.bf16.msra.mxu0 %v763
        %776 = vmatpush.bf16.msra.mxu0 %v762
        %777 = vmatmul.bf16.gmra.mxu0 %v767
        %v778 = vpop.f32.mrf.mxu0
        %v779 = vadd.f32 %v753, %v778
        %v780 = vpop.f32.mrf.mxu0
        %781 = vdwg.mxu0
        %v782 = vadd.f32 %v413, %v779
        %v783 = vsel %vm456, %v782, 0.0
        %784 = vadd.xlane.f32.xlu0 %v783
        %v785 = vpop.xlane.xlu0 %784
        %v786 = vrcp.pop 32.0
        %v787 = vmul.f32 32.0, %v786
        %v788 = vsub.f32 1.0, %v787
        %v789 = vmul.f32 %v786, %v788
        %v790 = vadd.f32 %v786, %v789
        %vm791 = vweird.f32 %v786
        %v792 = vsel %vm791, %v786, %v790
        %v793 = vmul.f32 %v785, %v792
        %v794 = vsub.f32 %v782, %v793
        %v795 = vmul.f32 %v794, %v794
        %v796 = vsel %vm456, %v795, 0.0
        %797 = vadd.xlane.f32.xlu0 %v796
        %v798 = vpop.xlane.xlu0 %797
        %v799 = vmul.f32 %v798, %v792
        %v800 = vadd.f32 %v799, 1e-05
        %v801 = vrsqrt.pop %v800
        %v802 = vmul.f32 %v801, %v800
        %v803 = vmul.f32 %v802, %v801
        %v804 = vmul.f32 0.5, %v803
        %v805 = vsub.f32 1.5, %v804
        %v806 = vmul.f32 %v801, %v805
        %vm807 = vweird.f32 %v800
        %vm808 = vweird.f32 %v801
        %vm809 = vmor %vm807, %vm808
        %v810 = vsel %vm809, %v801, %v806
        %v811 = vmul.f32 %v794, %v810
        %v812 = vperm.slane %v436, 4
        %v813 = vmul.f32 %v811, %v812
        %v814 = vperm.slane %v436, 5
        %v815 = vadd.f32 %v813, %v814
        %v816 = vpack.c.bf16 %v815, %v815
        %v817 = vld [vmem:[%s4] sm:$0xff]
        %v818 = vld [vmem:[%s4 + $0x8] sm:$0xff]
        %v819 = vld [vmem:[%s4 + $0x40] sm:$0xff]
        %v820 = vld [vmem:[%s4 + $0x48] sm:$0xff]
        %v821 = vld [vmem:[%s4 + $0x80] sm:$0xff]
        %v822 = vld [vmem:[%s4 + $0x88] sm:$0xff]
        %v823 = vld [vmem:[%s4 + $0xc0] sm:$0xff]
        %v824 = vld [vmem:[%s4 + $0xc8] sm:$0xff]
        %v825 = vld [vmem:[%s5] sm:$0xf]
        %v827 = vperm.slane %v825, 0
        %v828 = vperm.slane %v825, 1
        %v829 = vperm.slane %v825, 2
        %v830 = vperm.slane %v825, 3
        %v843 = vunpack.c.l.b16 %v817
        %v844 = vunpack.c.h.b16 %v817
        %v845 = vunpack.c.l.b16 %v818
        %v846 = vunpack.c.h.b16 %v818
        %v847 = vunpack.c.l.b16 %v819
        %v848 = vunpack.c.h.b16 %v819
        %v849 = vunpack.c.l.b16 %v820
        %v850 = vunpack.c.h.b16 %v820
        %v851 = vunpack.c.l.b16 %v821
        %v852 = vunpack.c.h.b16 %v821
        %v853 = vunpack.c.l.b16 %v822
        %v854 = vunpack.c.h.b16 %v822
        %v855 = vunpack.c.l.b16 %v823
        %v856 = vunpack.c.h.b16 %v823
        %v857 = vunpack.c.l.b16 %v824
        %v858 = vunpack.c.h.b16 %v824
        %v859 = vpack.c.b16 %v847, %v843
        %v860 = vpack.c.b16 %v848, %v844
        %v861 = vpack.c.b16 %v849, %v845
        %v862 = vpack.c.b16 %v850, %v846
        %v863 = vpack.c.b16 %v855, %v851
        %v864 = vpack.c.b16 %v856, %v852
        %v865 = vpack.c.b16 %v857, %v853
        %v866 = vpack.c.b16 %v858, %v854
        %v876 = vsel %vm456, %v816, 0
        %878 = vmatpush.bf16.msra.mxu0 0
        %879 = vmatpush.bf16.msra.mxu0 0
        %880 = vmatpush.bf16.msra.mxu0 0
        %881 = vmatpush.bf16.msra.mxu0 0
        %882 = vmatpush.bf16.msra.mxu0 0
        %883 = vmatpush.bf16.msra.mxu0 0
        %884 = vmatpush.bf16.msra.mxu0 %v863
        %885 = vmatpush.bf16.msra.mxu0 %v859
        %886 = vmatmul.bf16.gmra.mxu0 %v876
        %v887 = vpop.f32.mrf.mxu0
        %v888 = vadd.f32 %v827, %v887
        %v889 = vpop.f32.mrf.mxu0
        %890 = vdwg.mxu0
        %891 = vmatpush.bf16.msra.mxu0 0
        %892 = vmatpush.bf16.msra.mxu0 0
        %893 = vmatpush.bf16.msra.mxu0 0
        %894 = vmatpush.bf16.msra.mxu0 0
        %895 = vmatpush.bf16.msra.mxu0 0
        %896 = vmatpush.bf16.msra.mxu0 0
        %897 = vmatpush.bf16.msra.mxu0 %v864
        %898 = vmatpush.bf16.msra.mxu0 %v860
        %899 = vmatmul.bf16.gmra.mxu0 %v876
        %v900 = vpop.f32.mrf.mxu0
        %v901 = vadd.f32 %v828, %v900
        %v902 = vpop.f32.mrf.mxu0
        %903 = vdwg.mxu0
        %904 = vmatpush.bf16.msra.mxu0 0
        %905 = vmatpush.bf16.msra.mxu0 0
        %906 = vmatpush.bf16.msra.mxu0 0
        %907 = vmatpush.bf16.msra.mxu0 0
        %908 = vmatpush.bf16.msra.mxu0 0
        %909 = vmatpush.bf16.msra.mxu0 0
        %910 = vmatpush.bf16.msra.mxu0 %v865
        %911 = vmatpush.bf16.msra.mxu0 %v861
        %912 = vmatmul.bf16.gmra.mxu0 %v876
        %v913 = vpop.f32.mrf.mxu0
        %v914 = vadd.f32 %v829, %v913
        %v915 = vpop.f32.mrf.mxu0
        %916 = vdwg.mxu0
        %917 = vmatpush.bf16.msra.mxu0 0
        %918 = vmatpush.bf16.msra.mxu0 0
        %919 = vmatpush.bf16.msra.mxu0 0
        %920 = vmatpush.bf16.msra.mxu0 0
        %921 = vmatpush.bf16.msra.mxu0 0
        %922 = vmatpush.bf16.msra.mxu0 0
        %923 = vmatpush.bf16.msra.mxu0 %v866
        %924 = vmatpush.bf16.msra.mxu0 %v862
        %925 = vmatmul.bf16.gmra.mxu0 %v876
        %v926 = vpop.f32.mrf.mxu0
        %v927 = vadd.f32 %v830, %v926
        %v928 = vpop.f32.mrf.mxu0
        %929 = vdwg.mxu0
        %v930 = vmax.f32 %v888, 0.0
        %v931 = vmax.f32 %v901, 0.0
        %v932 = vmax.f32 %v914, 0.0
        %v933 = vmax.f32 %v927, 0.0
        %v934 = vpack.c.bf16 %v930, %v930
        %v935 = vpack.c.bf16 %v931, %v931
        %v936 = vpack.c.bf16 %v932, %v932
        %v937 = vpack.c.bf16 %v933, %v933
        %v938 = vld [vmem:[%s6] sm:$0xf]
        %v939 = vld [vmem:[%s6 + $0x4] sm:$0xf]
        %v940 = vld [vmem:[%s6 + $0x8] sm:$0xf]
        %v941 = vld [vmem:[%s6 + $0xc] sm:$0xf]
        %v942 = vld [vmem:[%s6 + $0x10] sm:$0xf]
        %v943 = vld [vmem:[%s6 + $0x14] sm:$0xf]
        %v944 = vld [vmem:[%s6 + $0x18] sm:$0xf]
        %v945 = vld [vmem:[%s6 + $0x1c] sm:$0xf]
        %v946 = vld [vmem:[%s6 + $0x20] sm:$0xf]
        %v947 = vld [vmem:[%s6 + $0x24] sm:$0xf]
        %v948 = vld [vmem:[%s6 + $0x28] sm:$0xf]
        %v949 = vld [vmem:[%s6 + $0x2c] sm:$0xf]
        %v950 = vld [vmem:[%s6 + $0x30] sm:$0xf]
        %v951 = vld [vmem:[%s6 + $0x34] sm:$0xf]
        %v952 = vld [vmem:[%s6 + $0x38] sm:$0xf]
        %v953 = vld [vmem:[%s6 + $0x3c] sm:$0xf]
        %v954 = vld [vmem:[%s6 + $0x40] sm:$0xf]
        %v955 = vld [vmem:[%s6 + $0x44] sm:$0xf]
        %v956 = vld [vmem:[%s6 + $0x48] sm:$0xf]
        %v957 = vld [vmem:[%s6 + $0x4c] sm:$0xf]
        %v958 = vld [vmem:[%s6 + $0x50] sm:$0xf]
        %v959 = vld [vmem:[%s6 + $0x54] sm:$0xf]
        %v960 = vld [vmem:[%s6 + $0x58] sm:$0xf]
        %v961 = vld [vmem:[%s6 + $0x5c] sm:$0xf]
        %v962 = vld [vmem:[%s6 + $0x60] sm:$0xf]
        %v963 = vld [vmem:[%s6 + $0x64] sm:$0xf]
        %v964 = vld [vmem:[%s6 + $0x68] sm:$0xf]
        %v965 = vld [vmem:[%s6 + $0x6c] sm:$0xf]
        %v966 = vld [vmem:[%s6 + $0x70] sm:$0xf]
        %v967 = vld [vmem:[%s6 + $0x74] sm:$0xf]
        %v968 = vld [vmem:[%s6 + $0x78] sm:$0xf]
        %v969 = vld [vmem:[%s6 + $0x7c] sm:$0xf]
        %v970 = vld [vmem:[%s6 + $0x80] sm:$0xf]
        %v971 = vld [vmem:[%s6 + $0x84] sm:$0xf]
        %v972 = vld [vmem:[%s6 + $0x88] sm:$0xf]
        %v973 = vld [vmem:[%s6 + $0x8c] sm:$0xf]
        %v974 = vld [vmem:[%s6 + $0x90] sm:$0xf]
        %v975 = vld [vmem:[%s6 + $0x94] sm:$0xf]
        %v976 = vld [vmem:[%s6 + $0x98] sm:$0xf]
        %v977 = vld [vmem:[%s6 + $0x9c] sm:$0xf]
        %v978 = vld [vmem:[%s6 + $0xa0] sm:$0xf]
        %v979 = vld [vmem:[%s6 + $0xa4] sm:$0xf]
        %v980 = vld [vmem:[%s6 + $0xa8] sm:$0xf]
        %v981 = vld [vmem:[%s6 + $0xac] sm:$0xf]
        %v982 = vld [vmem:[%s6 + $0xb0] sm:$0xf]
        %v983 = vld [vmem:[%s6 + $0xb4] sm:$0xf]
        %v984 = vld [vmem:[%s6 + $0xb8] sm:$0xf]
        %v985 = vld [vmem:[%s6 + $0xbc] sm:$0xf]
        %v986 = vld [vmem:[%s6 + $0xc0] sm:$0xf]
        %v987 = vld [vmem:[%s6 + $0xc4] sm:$0xf]
        %v988 = vld [vmem:[%s6 + $0xc8] sm:$0xf]
        %v989 = vld [vmem:[%s6 + $0xcc] sm:$0xf]
        %v990 = vld [vmem:[%s6 + $0xd0] sm:$0xf]
        %v991 = vld [vmem:[%s6 + $0xd4] sm:$0xf]
        %v992 = vld [vmem:[%s6 + $0xd8] sm:$0xf]
        %v993 = vld [vmem:[%s6 + $0xdc] sm:$0xf]
        %v994 = vld [vmem:[%s6 + $0xe0] sm:$0xf]
        %v995 = vld [vmem:[%s6 + $0xe4] sm:$0xf]
        %v996 = vld [vmem:[%s6 + $0xe8] sm:$0xf]
        %v997 = vld [vmem:[%s6 + $0xec] sm:$0xf]
        %v998 = vld [vmem:[%s6 + $0xf0] sm:$0xf]
        %v999 = vld [vmem:[%s6 + $0xf4] sm:$0xf]
        %v1000 = vld [vmem:[%s6 + $0xf8] sm:$0xf]
        %v1001 = vld [vmem:[%s6 + $0xfc] sm:$0xf]
        %v1002 = vld [vmem:[%s4 + $0x10] sm:$0xff]
        %v1003 = vld [vmem:[%s4 + $0x18] sm:$0xff]
        %v1004 = vld [vmem:[%s4 + $0x50] sm:$0xff]
        %v1005 = vld [vmem:[%s4 + $0x58] sm:$0xff]
        %v1006 = vld [vmem:[%s4 + $0x90] sm:$0xff]
        %v1007 = vld [vmem:[%s4 + $0x98] sm:$0xff]
        %v1008 = vld [vmem:[%s4 + $0xd0] sm:$0xff]
        %v1009 = vld [vmem:[%s4 + $0xd8] sm:$0xff]
        %v1010 = vld [vmem:[%s5 + $0x4] sm:$0xf]
        %v1012 = vperm.slane %v1010, 0
        %v1013 = vperm.slane %v1010, 1
        %v1014 = vperm.slane %v1010, 2
        %v1015 = vperm.slane %v1010, 3
        %v1028 = vunpack.c.l.b16 %v1002
        %v1029 = vunpack.c.h.b16 %v1002
        %v1030 = vunpack.c.l.b16 %v1003
        %v1031 = vunpack.c.h.b16 %v1003
        %v1032 = vunpack.c.l.b16 %v1004
        %v1033 = vunpack.c.h.b16 %v1004
        %v1034 = vunpack.c.l.b16 %v1005
        %v1035 = vunpack.c.h.b16 %v1005
        %v1036 = vunpack.c.l.b16 %v1006
        %v1037 = vunpack.c.h.b16 %v1006
        %v1038 = vunpack.c.l.b16 %v1007
        %v1039 = vunpack.c.h.b16 %v1007
        %v1040 = vunpack.c.l.b16 %v1008
        %v1041 = vunpack.c.h.b16 %v1008
        %v1042 = vunpack.c.l.b16 %v1009
        %v1043 = vunpack.c.h.b16 %v1009
        %v1044 = vpack.c.b16 %v1032, %v1028
        %v1045 = vpack.c.b16 %v1033, %v1029
        %v1046 = vpack.c.b16 %v1034, %v1030
        %v1047 = vpack.c.b16 %v1035, %v1031
        %v1048 = vpack.c.b16 %v1040, %v1036
        %v1049 = vpack.c.b16 %v1041, %v1037
        %v1050 = vpack.c.b16 %v1042, %v1038
        %v1051 = vpack.c.b16 %v1043, %v1039
        %1060 = vmatpush.bf16.msra.mxu0 0
        %1061 = vmatpush.bf16.msra.mxu0 0
        %1062 = vmatpush.bf16.msra.mxu0 0
        %1063 = vmatpush.bf16.msra.mxu0 0
        %1064 = vmatpush.bf16.msra.mxu0 0
        %1065 = vmatpush.bf16.msra.mxu0 0
        %1066 = vmatpush.bf16.msra.mxu0 %v1048
        %1067 = vmatpush.bf16.msra.mxu0 %v1044
        %1068 = vmatmul.bf16.gmra.mxu0 %v876
        %v1069 = vpop.f32.mrf.mxu0
        %v1070 = vadd.f32 %v1012, %v1069
        %v1071 = vpop.f32.mrf.mxu0
        %1072 = vdwg.mxu0
        %1073 = vmatpush.bf16.msra.mxu0 0
        %1074 = vmatpush.bf16.msra.mxu0 0
        %1075 = vmatpush.bf16.msra.mxu0 0
        %1076 = vmatpush.bf16.msra.mxu0 0
        %1077 = vmatpush.bf16.msra.mxu0 0
        %1078 = vmatpush.bf16.msra.mxu0 0
        %1079 = vmatpush.bf16.msra.mxu0 %v1049
        %1080 = vmatpush.bf16.msra.mxu0 %v1045
        %1081 = vmatmul.bf16.gmra.mxu0 %v876
        %v1082 = vpop.f32.mrf.mxu0
        %v1083 = vadd.f32 %v1013, %v1082
        %v1084 = vpop.f32.mrf.mxu0
        %1085 = vdwg.mxu0
        %1086 = vmatpush.bf16.msra.mxu0 0
        %1087 = vmatpush.bf16.msra.mxu0 0
        %1088 = vmatpush.bf16.msra.mxu0 0
        %1089 = vmatpush.bf16.msra.mxu0 0
        %1090 = vmatpush.bf16.msra.mxu0 0
        %1091 = vmatpush.bf16.msra.mxu0 0
        %1092 = vmatpush.bf16.msra.mxu0 %v1050
        %1093 = vmatpush.bf16.msra.mxu0 %v1046
        %1094 = vmatmul.bf16.gmra.mxu0 %v876
        %v1095 = vpop.f32.mrf.mxu0
        %v1096 = vadd.f32 %v1014, %v1095
        %v1097 = vpop.f32.mrf.mxu0
        %1098 = vdwg.mxu0
        %1099 = vmatpush.bf16.msra.mxu0 0
        %1100 = vmatpush.bf16.msra.mxu0 0
        %1101 = vmatpush.bf16.msra.mxu0 0
        %1102 = vmatpush.bf16.msra.mxu0 0
        %1103 = vmatpush.bf16.msra.mxu0 0
        %1104 = vmatpush.bf16.msra.mxu0 0
        %1105 = vmatpush.bf16.msra.mxu0 %v1051
        %1106 = vmatpush.bf16.msra.mxu0 %v1047
        %1107 = vmatmul.bf16.gmra.mxu0 %v876
        %v1108 = vpop.f32.mrf.mxu0
        %v1109 = vadd.f32 %v1015, %v1108
        %v1110 = vpop.f32.mrf.mxu0
        %1111 = vdwg.mxu0
        %v1112 = vmax.f32 %v1070, 0.0
        %v1113 = vmax.f32 %v1083, 0.0
        %v1114 = vmax.f32 %v1096, 0.0
        %v1115 = vmax.f32 %v1109, 0.0
        %v1116 = vpack.c.bf16 %v1112, %v1112
        %v1117 = vpack.c.bf16 %v1113, %v1113
        %v1118 = vpack.c.bf16 %v1114, %v1114
        %v1119 = vpack.c.bf16 %v1115, %v1115
        %v1120 = vld [vmem:[%s6 + $0x100] sm:$0xf]
        %v1121 = vld [vmem:[%s6 + $0x104] sm:$0xf]
        %v1122 = vld [vmem:[%s6 + $0x108] sm:$0xf]
        %v1123 = vld [vmem:[%s6 + $0x10c] sm:$0xf]
        %v1124 = vld [vmem:[%s6 + $0x110] sm:$0xf]
        %v1125 = vld [vmem:[%s6 + $0x114] sm:$0xf]
        %v1126 = vld [vmem:[%s6 + $0x118] sm:$0xf]
        %v1127 = vld [vmem:[%s6 + $0x11c] sm:$0xf]
        %v1128 = vld [vmem:[%s6 + $0x120] sm:$0xf]
        %v1129 = vld [vmem:[%s6 + $0x124] sm:$0xf]
        %v1130 = vld [vmem:[%s6 + $0x128] sm:$0xf]
        %v1131 = vld [vmem:[%s6 + $0x12c] sm:$0xf]
        %v1132 = vld [vmem:[%s6 + $0x130] sm:$0xf]
        %v1133 = vld [vmem:[%s6 + $0x134] sm:$0xf]
        %v1134 = vld [vmem:[%s6 + $0x138] sm:$0xf]
        %v1135 = vld [vmem:[%s6 + $0x13c] sm:$0xf]
        %v1136 = vld [vmem:[%s6 + $0x140] sm:$0xf]
        %v1137 = vld [vmem:[%s6 + $0x144] sm:$0xf]
        %v1138 = vld [vmem:[%s6 + $0x148] sm:$0xf]
        %v1139 = vld [vmem:[%s6 + $0x14c] sm:$0xf]
        %v1140 = vld [vmem:[%s6 + $0x150] sm:$0xf]
        %v1141 = vld [vmem:[%s6 + $0x154] sm:$0xf]
        %v1142 = vld [vmem:[%s6 + $0x158] sm:$0xf]
        %v1143 = vld [vmem:[%s6 + $0x15c] sm:$0xf]
        %v1144 = vld [vmem:[%s6 + $0x160] sm:$0xf]
        %v1145 = vld [vmem:[%s6 + $0x164] sm:$0xf]
        %v1146 = vld [vmem:[%s6 + $0x168] sm:$0xf]
        %v1147 = vld [vmem:[%s6 + $0x16c] sm:$0xf]
        %v1148 = vld [vmem:[%s6 + $0x170] sm:$0xf]
        %v1149 = vld [vmem:[%s6 + $0x174] sm:$0xf]
        %v1150 = vld [vmem:[%s6 + $0x178] sm:$0xf]
        %v1151 = vld [vmem:[%s6 + $0x17c] sm:$0xf]
        %v1152 = vld [vmem:[%s6 + $0x180] sm:$0xf]
        %v1153 = vld [vmem:[%s6 + $0x184] sm:$0xf]
        %v1154 = vld [vmem:[%s6 + $0x188] sm:$0xf]
        %v1155 = vld [vmem:[%s6 + $0x18c] sm:$0xf]
        %v1156 = vld [vmem:[%s6 + $0x190] sm:$0xf]
        %v1157 = vld [vmem:[%s6 + $0x194] sm:$0xf]
        %v1158 = vld [vmem:[%s6 + $0x198] sm:$0xf]
        %v1159 = vld [vmem:[%s6 + $0x19c] sm:$0xf]
        %v1160 = vld [vmem:[%s6 + $0x1a0] sm:$0xf]
        %v1161 = vld [vmem:[%s6 + $0x1a4] sm:$0xf]
        %v1162 = vld [vmem:[%s6 + $0x1a8] sm:$0xf]
        %v1163 = vld [vmem:[%s6 + $0x1ac] sm:$0xf]
        %v1164 = vld [vmem:[%s6 + $0x1b0] sm:$0xf]
        %v1165 = vld [vmem:[%s6 + $0x1b4] sm:$0xf]
        %v1166 = vld [vmem:[%s6 + $0x1b8] sm:$0xf]
        %v1167 = vld [vmem:[%s6 + $0x1bc] sm:$0xf]
        %v1168 = vld [vmem:[%s6 + $0x1c0] sm:$0xf]
        %v1169 = vld [vmem:[%s6 + $0x1c4] sm:$0xf]
        %v1170 = vld [vmem:[%s6 + $0x1c8] sm:$0xf]
        %v1171 = vld [vmem:[%s6 + $0x1cc] sm:$0xf]
        %v1172 = vld [vmem:[%s6 + $0x1d0] sm:$0xf]
        %v1173 = vld [vmem:[%s6 + $0x1d4] sm:$0xf]
        %v1174 = vld [vmem:[%s6 + $0x1d8] sm:$0xf]
        %v1175 = vld [vmem:[%s6 + $0x1dc] sm:$0xf]
        %v1176 = vld [vmem:[%s6 + $0x1e0] sm:$0xf]
        %v1177 = vld [vmem:[%s6 + $0x1e4] sm:$0xf]
        %v1178 = vld [vmem:[%s6 + $0x1e8] sm:$0xf]
        %v1179 = vld [vmem:[%s6 + $0x1ec] sm:$0xf]
        %v1180 = vld [vmem:[%s6 + $0x1f0] sm:$0xf]
        %v1181 = vld [vmem:[%s6 + $0x1f4] sm:$0xf]
        %v1182 = vld [vmem:[%s6 + $0x1f8] sm:$0xf]
        %v1183 = vld [vmem:[%s6 + $0x1fc] sm:$0xf]
        %v1248 = vunpack.c.l.b16 %v1120
        %v1249 = vunpack.c.l.b16 %v1121
        %v1250 = vunpack.c.l.b16 %v1122
        %v1251 = vunpack.c.l.b16 %v1123
        %v1252 = vunpack.c.l.b16 %v1124
        %v1253 = vunpack.c.l.b16 %v1125
        %v1254 = vunpack.c.l.b16 %v1126
        %v1255 = vunpack.c.l.b16 %v1127
        %v1256 = vunpack.c.l.b16 %v1128
        %v1257 = vunpack.c.l.b16 %v1129
        %v1258 = vunpack.c.l.b16 %v1130
        %v1259 = vunpack.c.l.b16 %v1131
        %v1260 = vunpack.c.l.b16 %v1132
        %v1261 = vunpack.c.l.b16 %v1133
        %v1262 = vunpack.c.l.b16 %v1134
        %v1263 = vunpack.c.l.b16 %v1135
        %v1264 = vunpack.c.l.b16 %v1136
        %v1265 = vunpack.c.l.b16 %v1137
        %v1266 = vunpack.c.l.b16 %v1138
        %v1267 = vunpack.c.l.b16 %v1139
        %v1268 = vunpack.c.l.b16 %v1140
        %v1269 = vunpack.c.l.b16 %v1141
        %v1270 = vunpack.c.l.b16 %v1142
        %v1271 = vunpack.c.l.b16 %v1143
        %v1272 = vunpack.c.l.b16 %v1144
        %v1273 = vunpack.c.l.b16 %v1145
        %v1274 = vunpack.c.l.b16 %v1146
        %v1275 = vunpack.c.l.b16 %v1147
        %v1276 = vunpack.c.l.b16 %v1148
        %v1277 = vunpack.c.l.b16 %v1149
        %v1278 = vunpack.c.l.b16 %v1150
        %v1279 = vunpack.c.l.b16 %v1151
        %v1280 = vunpack.c.l.b16 %v1152
        %v1281 = vunpack.c.l.b16 %v1153
        %v1282 = vunpack.c.l.b16 %v1154
        %v1283 = vunpack.c.l.b16 %v1155
        %v1284 = vunpack.c.l.b16 %v1156
        %v1285 = vunpack.c.l.b16 %v1157
        %v1286 = vunpack.c.l.b16 %v1158
        %v1287 = vunpack.c.l.b16 %v1159
        %v1288 = vunpack.c.l.b16 %v1160
        %v1289 = vunpack.c.l.b16 %v1161
        %v1290 = vunpack.c.l.b16 %v1162
        %v1291 = vunpack.c.l.b16 %v1163
        %v1292 = vunpack.c.l.b16 %v1164
        %v1293 = vunpack.c.l.b16 %v1165
        %v1294 = vunpack.c.l.b16 %v1166
        %v1295 = vunpack.c.l.b16 %v1167
        %v1296 = vunpack.c.l.b16 %v1168
        %v1297 = vunpack.c.l.b16 %v1169
        %v1298 = vunpack.c.l.b16 %v1170
        %v1299 = vunpack.c.l.b16 %v1171
        %v1300 = vunpack.c.l.b16 %v1172
        %v1301 = vunpack.c.l.b16 %v1173
        %v1302 = vunpack.c.l.b16 %v1174
        %v1303 = vunpack.c.l.b16 %v1175
        %v1304 = vunpack.c.l.b16 %v1176
        %v1305 = vunpack.c.l.b16 %v1177
        %v1306 = vunpack.c.l.b16 %v1178
        %v1307 = vunpack.c.l.b16 %v1179
        %v1308 = vunpack.c.l.b16 %v1180
        %v1309 = vunpack.c.l.b16 %v1181
        %v1310 = vunpack.c.l.b16 %v1182
        %v1311 = vunpack.c.l.b16 %v1183
        %v1312 = vpack.c.b16 %v1249, %v1248
        %v1313 = vpack.c.b16 %v1251, %v1250
        %v1314 = vpack.c.b16 %v1253, %v1252
        %v1315 = vpack.c.b16 %v1255, %v1254
        %v1316 = vpack.c.b16 %v1257, %v1256
        %v1317 = vpack.c.b16 %v1259, %v1258
        %v1318 = vpack.c.b16 %v1261, %v1260
        %v1319 = vpack.c.b16 %v1263, %v1262
        %v1320 = vpack.c.b16 %v1265, %v1264
        %v1321 = vpack.c.b16 %v1267, %v1266
        %v1322 = vpack.c.b16 %v1269, %v1268
        %v1323 = vpack.c.b16 %v1271, %v1270
        %v1324 = vpack.c.b16 %v1273, %v1272
        %v1325 = vpack.c.b16 %v1275, %v1274
        %v1326 = vpack.c.b16 %v1277, %v1276
        %v1327 = vpack.c.b16 %v1279, %v1278
        %v1328 = vpack.c.b16 %v1281, %v1280
        %v1329 = vpack.c.b16 %v1283, %v1282
        %v1330 = vpack.c.b16 %v1285, %v1284
        %v1331 = vpack.c.b16 %v1287, %v1286
        %v1332 = vpack.c.b16 %v1289, %v1288
        %v1333 = vpack.c.b16 %v1291, %v1290
        %v1334 = vpack.c.b16 %v1293, %v1292
        %v1335 = vpack.c.b16 %v1295, %v1294
        %v1336 = vpack.c.b16 %v1297, %v1296
        %v1337 = vpack.c.b16 %v1299, %v1298
        %v1338 = vpack.c.b16 %v1301, %v1300
        %v1339 = vpack.c.b16 %v1303, %v1302
        %v1340 = vpack.c.b16 %v1305, %v1304
        %v1341 = vpack.c.b16 %v1307, %v1306
        %v1342 = vpack.c.b16 %v1309, %v1308
        %v1343 = vpack.c.b16 %v1311, %v1310
        %1376 = vmatpush.bf16.msra.mxu0 %v1319
        %1377 = vmatpush.bf16.msra.mxu0 %v1318
        %1378 = vmatpush.bf16.msra.mxu0 %v1317
        %1379 = vmatpush.bf16.msra.mxu0 %v1316
        %1380 = vmatpush.bf16.msra.mxu0 %v1315
        %1381 = vmatpush.bf16.msra.mxu0 %v1314
        %1382 = vmatpush.bf16.msra.mxu0 %v1313
        %1383 = vmatpush.bf16.msra.mxu0 %v1312
        %1384 = vmatmul.bf16.gmra.mxu0 %v1116
        %v1385 = vpop.f32.mrf.mxu0
        %v1386 = vadd.f32 0.0, %v1385
        %v1387 = vpop.f32.mrf.mxu0
        %1388 = vdwg.mxu0
        %1389 = vmatpush.bf16.msra.mxu0 %v1327
        %1390 = vmatpush.bf16.msra.mxu0 %v1326
        %1391 = vmatpush.bf16.msra.mxu0 %v1325
        %1392 = vmatpush.bf16.msra.mxu0 %v1324
        %1393 = vmatpush.bf16.msra.mxu0 %v1323
        %1394 = vmatpush.bf16.msra.mxu0 %v1322
        %1395 = vmatpush.bf16.msra.mxu0 %v1321
        %1396 = vmatpush.bf16.msra.mxu0 %v1320
        %1397 = vmatmul.bf16.gmra.mxu0 %v1117
        %v1398 = vpop.f32.mrf.mxu0
        %v1399 = vadd.f32 %v1386, %v1398
        %v1400 = vpop.f32.mrf.mxu0
        %1401 = vdwg.mxu0
        %1402 = vmatpush.bf16.msra.mxu0 %v1335
        %1403 = vmatpush.bf16.msra.mxu0 %v1334
        %1404 = vmatpush.bf16.msra.mxu0 %v1333
        %1405 = vmatpush.bf16.msra.mxu0 %v1332
        %1406 = vmatpush.bf16.msra.mxu0 %v1331
        %1407 = vmatpush.bf16.msra.mxu0 %v1330
        %1408 = vmatpush.bf16.msra.mxu0 %v1329
        %1409 = vmatpush.bf16.msra.mxu0 %v1328
        %1410 = vmatmul.bf16.gmra.mxu0 %v1118
        %v1411 = vpop.f32.mrf.mxu0
        %v1412 = vadd.f32 %v1399, %v1411
        %v1413 = vpop.f32.mrf.mxu0
        %1414 = vdwg.mxu0
        %1415 = vmatpush.bf16.msra.mxu0 %v1343
        %1416 = vmatpush.bf16.msra.mxu0 %v1342
        %1417 = vmatpush.bf16.msra.mxu0 %v1341
        %1418 = vmatpush.bf16.msra.mxu0 %v1340
        %1419 = vmatpush.bf16.msra.mxu0 %v1339
        %1420 = vmatpush.bf16.msra.mxu0 %v1338
        %1421 = vmatpush.bf16.msra.mxu0 %v1337
        %1422 = vmatpush.bf16.msra.mxu0 %v1336
        %1423 = vmatmul.bf16.gmra.mxu0 %v1119
        %v1424 = vpop.f32.mrf.mxu0
        %v1425 = vadd.f32 %v1412, %v1424
        %v1426 = vpop.f32.mrf.mxu0
        %1427 = vdwg.mxu0
        %v1492 = vunpack.c.l.b16 %v938
        %v1493 = vunpack.c.l.b16 %v939
        %v1494 = vunpack.c.l.b16 %v940
        %v1495 = vunpack.c.l.b16 %v941
        %v1496 = vunpack.c.l.b16 %v942
        %v1497 = vunpack.c.l.b16 %v943
        %v1498 = vunpack.c.l.b16 %v944
        %v1499 = vunpack.c.l.b16 %v945
        %v1500 = vunpack.c.l.b16 %v946
        %v1501 = vunpack.c.l.b16 %v947
        %v1502 = vunpack.c.l.b16 %v948
        %v1503 = vunpack.c.l.b16 %v949
        %v1504 = vunpack.c.l.b16 %v950
        %v1505 = vunpack.c.l.b16 %v951
        %v1506 = vunpack.c.l.b16 %v952
        %v1507 = vunpack.c.l.b16 %v953
        %v1508 = vunpack.c.l.b16 %v954
        %v1509 = vunpack.c.l.b16 %v955
        %v1510 = vunpack.c.l.b16 %v956
        %v1511 = vunpack.c.l.b16 %v957
        %v1512 = vunpack.c.l.b16 %v958
        %v1513 = vunpack.c.l.b16 %v959
        %v1514 = vunpack.c.l.b16 %v960
        %v1515 = vunpack.c.l.b16 %v961
        %v1516 = vunpack.c.l.b16 %v962
        %v1517 = vunpack.c.l.b16 %v963
        %v1518 = vunpack.c.l.b16 %v964
        %v1519 = vunpack.c.l.b16 %v965
        %v1520 = vunpack.c.l.b16 %v966
        %v1521 = vunpack.c.l.b16 %v967
        %v1522 = vunpack.c.l.b16 %v968
        %v1523 = vunpack.c.l.b16 %v969
        %v1524 = vunpack.c.l.b16 %v970
        %v1525 = vunpack.c.l.b16 %v971
        %v1526 = vunpack.c.l.b16 %v972
        %v1527 = vunpack.c.l.b16 %v973
        %v1528 = vunpack.c.l.b16 %v974
        %v1529 = vunpack.c.l.b16 %v975
        %v1530 = vunpack.c.l.b16 %v976
        %v1531 = vunpack.c.l.b16 %v977
        %v1532 = vunpack.c.l.b16 %v978
        %v1533 = vunpack.c.l.b16 %v979
        %v1534 = vunpack.c.l.b16 %v980
        %v1535 = vunpack.c.l.b16 %v981
        %v1536 = vunpack.c.l.b16 %v982
        %v1537 = vunpack.c.l.b16 %v983
        %v1538 = vunpack.c.l.b16 %v984
        %v1539 = vunpack.c.l.b16 %v985
        %v1540 = vunpack.c.l.b16 %v986
        %v1541 = vunpack.c.l.b16 %v987
        %v1542 = vunpack.c.l.b16 %v988
        %v1543 = vunpack.c.l.b16 %v989
        %v1544 = vunpack.c.l.b16 %v990
        %v1545 = vunpack.c.l.b16 %v991
        %v1546 = vunpack.c.l.b16 %v992
        %v1547 = vunpack.c.l.b16 %v993
        %v1548 = vunpack.c.l.b16 %v994
        %v1549 = vunpack.c.l.b16 %v995
        %v1550 = vunpack.c.l.b16 %v996
        %v1551 = vunpack.c.l.b16 %v997
        %v1552 = vunpack.c.l.b16 %v998
        %v1553 = vunpack.c.l.b16 %v999
        %v1554 = vunpack.c.l.b16 %v1000
        %v1555 = vunpack.c.l.b16 %v1001
        %v1556 = vpack.c.b16 %v1493, %v1492
        %v1557 = vpack.c.b16 %v1495, %v1494
        %v1558 = vpack.c.b16 %v1497, %v1496
        %v1559 = vpack.c.b16 %v1499, %v1498
        %v1560 = vpack.c.b16 %v1501, %v1500
        %v1561 = vpack.c.b16 %v1503, %v1502
        %v1562 = vpack.c.b16 %v1505, %v1504
        %v1563 = vpack.c.b16 %v1507, %v1506
        %v1564 = vpack.c.b16 %v1509, %v1508
        %v1565 = vpack.c.b16 %v1511, %v1510
        %v1566 = vpack.c.b16 %v1513, %v1512
        %v1567 = vpack.c.b16 %v1515, %v1514
        %v1568 = vpack.c.b16 %v1517, %v1516
        %v1569 = vpack.c.b16 %v1519, %v1518
        %v1570 = vpack.c.b16 %v1521, %v1520
        %v1571 = vpack.c.b16 %v1523, %v1522
        %v1572 = vpack.c.b16 %v1525, %v1524
        %v1573 = vpack.c.b16 %v1527, %v1526
        %v1574 = vpack.c.b16 %v1529, %v1528
        %v1575 = vpack.c.b16 %v1531, %v1530
        %v1576 = vpack.c.b16 %v1533, %v1532
        %v1577 = vpack.c.b16 %v1535, %v1534
        %v1578 = vpack.c.b16 %v1537, %v1536
        %v1579 = vpack.c.b16 %v1539, %v1538
        %v1580 = vpack.c.b16 %v1541, %v1540
        %v1581 = vpack.c.b16 %v1543, %v1542
        %v1582 = vpack.c.b16 %v1545, %v1544
        %v1583 = vpack.c.b16 %v1547, %v1546
        %v1584 = vpack.c.b16 %v1549, %v1548
        %v1585 = vpack.c.b16 %v1551, %v1550
        %v1586 = vpack.c.b16 %v1553, %v1552
        %v1587 = vpack.c.b16 %v1555, %v1554
        %1620 = vmatpush.bf16.msra.mxu0 %v1563
        %1621 = vmatpush.bf16.msra.mxu0 %v1562
        %1622 = vmatpush.bf16.msra.mxu0 %v1561
        %1623 = vmatpush.bf16.msra.mxu0 %v1560
        %1624 = vmatpush.bf16.msra.mxu0 %v1559
        %1625 = vmatpush.bf16.msra.mxu0 %v1558
        %1626 = vmatpush.bf16.msra.mxu0 %v1557
        %1627 = vmatpush.bf16.msra.mxu0 %v1556
        %1628 = vmatmul.bf16.gmra.mxu0 %v934
        %v1629 = vpop.f32.mrf.mxu0
        %v1630 = vadd.f32 %v1425, %v1629
        %v1631 = vpop.f32.mrf.mxu0
        %1632 = vdwg.mxu0
        %1633 = vmatpush.bf16.msra.mxu0 %v1571
        %1634 = vmatpush.bf16.msra.mxu0 %v1570
        %1635 = vmatpush.bf16.msra.mxu0 %v1569
        %1636 = vmatpush.bf16.msra.mxu0 %v1568
        %1637 = vmatpush.bf16.msra.mxu0 %v1567
        %1638 = vmatpush.bf16.msra.mxu0 %v1566
        %1639 = vmatpush.bf16.msra.mxu0 %v1565
        %1640 = vmatpush.bf16.msra.mxu0 %v1564
        %1641 = vmatmul.bf16.gmra.mxu0 %v935
        %v1642 = vpop.f32.mrf.mxu0
        %v1643 = vadd.f32 %v1630, %v1642
        %v1644 = vpop.f32.mrf.mxu0
        %1645 = vdwg.mxu0
        %1646 = vmatpush.bf16.msra.mxu0 %v1579
        %1647 = vmatpush.bf16.msra.mxu0 %v1578
        %1648 = vmatpush.bf16.msra.mxu0 %v1577
        %1649 = vmatpush.bf16.msra.mxu0 %v1576
        %1650 = vmatpush.bf16.msra.mxu0 %v1575
        %1651 = vmatpush.bf16.msra.mxu0 %v1574
        %1652 = vmatpush.bf16.msra.mxu0 %v1573
        %1653 = vmatpush.bf16.msra.mxu0 %v1572
        %1654 = vmatmul.bf16.gmra.mxu0 %v936
        %v1655 = vpop.f32.mrf.mxu0
        %v1656 = vadd.f32 %v1643, %v1655
        %v1657 = vpop.f32.mrf.mxu0
        %1658 = vdwg.mxu0
        %1659 = vmatpush.bf16.msra.mxu0 %v1587
        %1660 = vmatpush.bf16.msra.mxu0 %v1586
        %1661 = vmatpush.bf16.msra.mxu0 %v1585
        %1662 = vmatpush.bf16.msra.mxu0 %v1584
        %1663 = vmatpush.bf16.msra.mxu0 %v1583
        %1664 = vmatpush.bf16.msra.mxu0 %v1582
        %1665 = vmatpush.bf16.msra.mxu0 %v1581
        %1666 = vmatpush.bf16.msra.mxu0 %v1580
        %1667 = vmatmul.bf16.gmra.mxu0 %v937
        %v1668 = vpop.f32.mrf.mxu0
        %v1669 = vadd.f32 %v1656, %v1668
        %v1670 = vpop.f32.mrf.mxu0
        %1671 = vdwg.mxu0
        %v1672 = vld [vmem:[%s4 + $0x20] sm:$0xff]
        %v1673 = vld [vmem:[%s4 + $0x28] sm:$0xff]
        %v1674 = vld [vmem:[%s4 + $0x60] sm:$0xff]
        %v1675 = vld [vmem:[%s4 + $0x68] sm:$0xff]
        %v1676 = vld [vmem:[%s4 + $0xa0] sm:$0xff]
        %v1677 = vld [vmem:[%s4 + $0xa8] sm:$0xff]
        %v1678 = vld [vmem:[%s4 + $0xe0] sm:$0xff]
        %v1679 = vld [vmem:[%s4 + $0xe8] sm:$0xff]
        %v1680 = vld [vmem:[%s5 + $0x8] sm:$0xf]
        %v1682 = vperm.slane %v1680, 0
        %v1683 = vperm.slane %v1680, 1
        %v1684 = vperm.slane %v1680, 2
        %v1685 = vperm.slane %v1680, 3
        %v1698 = vunpack.c.l.b16 %v1672
        %v1699 = vunpack.c.h.b16 %v1672
        %v1700 = vunpack.c.l.b16 %v1673
        %v1701 = vunpack.c.h.b16 %v1673
        %v1702 = vunpack.c.l.b16 %v1674
        %v1703 = vunpack.c.h.b16 %v1674
        %v1704 = vunpack.c.l.b16 %v1675
        %v1705 = vunpack.c.h.b16 %v1675
        %v1706 = vunpack.c.l.b16 %v1676
        %v1707 = vunpack.c.h.b16 %v1676
        %v1708 = vunpack.c.l.b16 %v1677
        %v1709 = vunpack.c.h.b16 %v1677
        %v1710 = vunpack.c.l.b16 %v1678
        %v1711 = vunpack.c.h.b16 %v1678
        %v1712 = vunpack.c.l.b16 %v1679
        %v1713 = vunpack.c.h.b16 %v1679
        %v1714 = vpack.c.b16 %v1702, %v1698
        %v1715 = vpack.c.b16 %v1703, %v1699
        %v1716 = vpack.c.b16 %v1704, %v1700
        %v1717 = vpack.c.b16 %v1705, %v1701
        %v1718 = vpack.c.b16 %v1710, %v1706
        %v1719 = vpack.c.b16 %v1711, %v1707
        %v1720 = vpack.c.b16 %v1712, %v1708
        %v1721 = vpack.c.b16 %v1713, %v1709
        %1730 = vmatpush.bf16.msra.mxu0 0
        %1731 = vmatpush.bf16.msra.mxu0 0
        %1732 = vmatpush.bf16.msra.mxu0 0
        %1733 = vmatpush.bf16.msra.mxu0 0
        %1734 = vmatpush.bf16.msra.mxu0 0
        %1735 = vmatpush.bf16.msra.mxu0 0
        %1736 = vmatpush.bf16.msra.mxu0 %v1718
        %1737 = vmatpush.bf16.msra.mxu0 %v1714
        %1738 = vmatmul.bf16.gmra.mxu0 %v876
        %v1739 = vpop.f32.mrf.mxu0
        %v1740 = vadd.f32 %v1682, %v1739
        %v1741 = vpop.f32.mrf.mxu0
        %1742 = vdwg.mxu0
        %1743 = vmatpush.bf16.msra.mxu0 0
        %1744 = vmatpush.bf16.msra.mxu0 0
        %1745 = vmatpush.bf16.msra.mxu0 0
        %1746 = vmatpush.bf16.msra.mxu0 0
        %1747 = vmatpush.bf16.msra.mxu0 0
        %1748 = vmatpush.bf16.msra.mxu0 0
        %1749 = vmatpush.bf16.msra.mxu0 %v1719
        %1750 = vmatpush.bf16.msra.mxu0 %v1715
        %1751 = vmatmul.bf16.gmra.mxu0 %v876
        %v1752 = vpop.f32.mrf.mxu0
        %v1753 = vadd.f32 %v1683, %v1752
        %v1754 = vpop.f32.mrf.mxu0
        %1755 = vdwg.mxu0
        %1756 = vmatpush.bf16.msra.mxu0 0
        %1757 = vmatpush.bf16.msra.mxu0 0
        %1758 = vmatpush.bf16.msra.mxu0 0
        %1759 = vmatpush.bf16.msra.mxu0 0
        %1760 = vmatpush.bf16.msra.mxu0 0
        %1761 = vmatpush.bf16.msra.mxu0 0
        %1762 = vmatpush.bf16.msra.mxu0 %v1720
        %1763 = vmatpush.bf16.msra.mxu0 %v1716
        %1764 = vmatmul.bf16.gmra.mxu0 %v876
        %v1765 = vpop.f32.mrf.mxu0
        %v1766 = vadd.f32 %v1684, %v1765
        %v1767 = vpop.f32.mrf.mxu0
        %1768 = vdwg.mxu0
        %1769 = vmatpush.bf16.msra.mxu0 0
        %1770 = vmatpush.bf16.msra.mxu0 0
        %1771 = vmatpush.bf16.msra.mxu0 0
        %1772 = vmatpush.bf16.msra.mxu0 0
        %1773 = vmatpush.bf16.msra.mxu0 0
        %1774 = vmatpush.bf16.msra.mxu0 0
        %1775 = vmatpush.bf16.msra.mxu0 %v1721
        %1776 = vmatpush.bf16.msra.mxu0 %v1717
        %1777 = vmatmul.bf16.gmra.mxu0 %v876
        %v1778 = vpop.f32.mrf.mxu0
        %v1779 = vadd.f32 %v1685, %v1778
        %v1780 = vpop.f32.mrf.mxu0
        %1781 = vdwg.mxu0
        %v1782 = vmax.f32 %v1740, 0.0
        %v1783 = vmax.f32 %v1753, 0.0
        %v1784 = vmax.f32 %v1766, 0.0
        %v1785 = vmax.f32 %v1779, 0.0
        %v1786 = vpack.c.bf16 %v1782, %v1782
        %v1787 = vpack.c.bf16 %v1783, %v1783
        %v1788 = vpack.c.bf16 %v1784, %v1784
        %v1789 = vpack.c.bf16 %v1785, %v1785
        %v1790 = vld [vmem:[%s6 + $0x200] sm:$0xf]
        %v1791 = vld [vmem:[%s6 + $0x204] sm:$0xf]
        %v1792 = vld [vmem:[%s6 + $0x208] sm:$0xf]
        %v1793 = vld [vmem:[%s6 + $0x20c] sm:$0xf]
        %v1794 = vld [vmem:[%s6 + $0x210] sm:$0xf]
        %v1795 = vld [vmem:[%s6 + $0x214] sm:$0xf]
        %v1796 = vld [vmem:[%s6 + $0x218] sm:$0xf]
        %v1797 = vld [vmem:[%s6 + $0x21c] sm:$0xf]
        %v1798 = vld [vmem:[%s6 + $0x220] sm:$0xf]
        %v1799 = vld [vmem:[%s6 + $0x224] sm:$0xf]
        %v1800 = vld [vmem:[%s6 + $0x228] sm:$0xf]
        %v1801 = vld [vmem:[%s6 + $0x22c] sm:$0xf]
        %v1802 = vld [vmem:[%s6 + $0x230] sm:$0xf]
        %v1803 = vld [vmem:[%s6 + $0x234] sm:$0xf]
        %v1804 = vld [vmem:[%s6 + $0x238] sm:$0xf]
        %v1805 = vld [vmem:[%s6 + $0x23c] sm:$0xf]
        %v1806 = vld [vmem:[%s6 + $0x240] sm:$0xf]
        %v1807 = vld [vmem:[%s6 + $0x244] sm:$0xf]
        %v1808 = vld [vmem:[%s6 + $0x248] sm:$0xf]
        %v1809 = vld [vmem:[%s6 + $0x24c] sm:$0xf]
        %v1810 = vld [vmem:[%s6 + $0x250] sm:$0xf]
        %v1811 = vld [vmem:[%s6 + $0x254] sm:$0xf]
        %v1812 = vld [vmem:[%s6 + $0x258] sm:$0xf]
        %v1813 = vld [vmem:[%s6 + $0x25c] sm:$0xf]
        %v1814 = vld [vmem:[%s6 + $0x260] sm:$0xf]
        %v1815 = vld [vmem:[%s6 + $0x264] sm:$0xf]
        %v1816 = vld [vmem:[%s6 + $0x268] sm:$0xf]
        %v1817 = vld [vmem:[%s6 + $0x26c] sm:$0xf]
        %v1818 = vld [vmem:[%s6 + $0x270] sm:$0xf]
        %v1819 = vld [vmem:[%s6 + $0x274] sm:$0xf]
        %v1820 = vld [vmem:[%s6 + $0x278] sm:$0xf]
        %v1821 = vld [vmem:[%s6 + $0x27c] sm:$0xf]
        %v1822 = vld [vmem:[%s6 + $0x280] sm:$0xf]
        %v1823 = vld [vmem:[%s6 + $0x284] sm:$0xf]
        %v1824 = vld [vmem:[%s6 + $0x288] sm:$0xf]
        %v1825 = vld [vmem:[%s6 + $0x28c] sm:$0xf]
        %v1826 = vld [vmem:[%s6 + $0x290] sm:$0xf]
        %v1827 = vld [vmem:[%s6 + $0x294] sm:$0xf]
        %v1828 = vld [vmem:[%s6 + $0x298] sm:$0xf]
        %v1829 = vld [vmem:[%s6 + $0x29c] sm:$0xf]
        %v1830 = vld [vmem:[%s6 + $0x2a0] sm:$0xf]
        %v1831 = vld [vmem:[%s6 + $0x2a4] sm:$0xf]
        %v1832 = vld [vmem:[%s6 + $0x2a8] sm:$0xf]
        %v1833 = vld [vmem:[%s6 + $0x2ac] sm:$0xf]
        %v1834 = vld [vmem:[%s6 + $0x2b0] sm:$0xf]
        %v1835 = vld [vmem:[%s6 + $0x2b4] sm:$0xf]
        %v1836 = vld [vmem:[%s6 + $0x2b8] sm:$0xf]
        %v1837 = vld [vmem:[%s6 + $0x2bc] sm:$0xf]
        %v1838 = vld [vmem:[%s6 + $0x2c0] sm:$0xf]
        %v1839 = vld [vmem:[%s6 + $0x2c4] sm:$0xf]
        %v1840 = vld [vmem:[%s6 + $0x2c8] sm:$0xf]
        %v1841 = vld [vmem:[%s6 + $0x2cc] sm:$0xf]
        %v1842 = vld [vmem:[%s6 + $0x2d0] sm:$0xf]
        %v1843 = vld [vmem:[%s6 + $0x2d4] sm:$0xf]
        %v1844 = vld [vmem:[%s6 + $0x2d8] sm:$0xf]
        %v1845 = vld [vmem:[%s6 + $0x2dc] sm:$0xf]
        %v1846 = vld [vmem:[%s6 + $0x2e0] sm:$0xf]
        %v1847 = vld [vmem:[%s6 + $0x2e4] sm:$0xf]
        %v1848 = vld [vmem:[%s6 + $0x2e8] sm:$0xf]
        %v1849 = vld [vmem:[%s6 + $0x2ec] sm:$0xf]
        %v1850 = vld [vmem:[%s6 + $0x2f0] sm:$0xf]
        %v1851 = vld [vmem:[%s6 + $0x2f4] sm:$0xf]
        %v1852 = vld [vmem:[%s6 + $0x2f8] sm:$0xf]
        %v1853 = vld [vmem:[%s6 + $0x2fc] sm:$0xf]
        %v1918 = vunpack.c.l.b16 %v1790
        %v1919 = vunpack.c.l.b16 %v1791
        %v1920 = vunpack.c.l.b16 %v1792
        %v1921 = vunpack.c.l.b16 %v1793
        %v1922 = vunpack.c.l.b16 %v1794
        %v1923 = vunpack.c.l.b16 %v1795
        %v1924 = vunpack.c.l.b16 %v1796
        %v1925 = vunpack.c.l.b16 %v1797
        %v1926 = vunpack.c.l.b16 %v1798
        %v1927 = vunpack.c.l.b16 %v1799
        %v1928 = vunpack.c.l.b16 %v1800
        %v1929 = vunpack.c.l.b16 %v1801
        %v1930 = vunpack.c.l.b16 %v1802
        %v1931 = vunpack.c.l.b16 %v1803
        %v1932 = vunpack.c.l.b16 %v1804
        %v1933 = vunpack.c.l.b16 %v1805
        %v1934 = vunpack.c.l.b16 %v1806
        %v1935 = vunpack.c.l.b16 %v1807
        %v1936 = vunpack.c.l.b16 %v1808
        %v1937 = vunpack.c.l.b16 %v1809
        %v1938 = vunpack.c.l.b16 %v1810
        %v1939 = vunpack.c.l.b16 %v1811
        %v1940 = vunpack.c.l.b16 %v1812
        %v1941 = vunpack.c.l.b16 %v1813
        %v1942 = vunpack.c.l.b16 %v1814
        %v1943 = vunpack.c.l.b16 %v1815
        %v1944 = vunpack.c.l.b16 %v1816
        %v1945 = vunpack.c.l.b16 %v1817
        %v1946 = vunpack.c.l.b16 %v1818
        %v1947 = vunpack.c.l.b16 %v1819
        %v1948 = vunpack.c.l.b16 %v1820
        %v1949 = vunpack.c.l.b16 %v1821
        %v1950 = vunpack.c.l.b16 %v1822
        %v1951 = vunpack.c.l.b16 %v1823
        %v1952 = vunpack.c.l.b16 %v1824
        %v1953 = vunpack.c.l.b16 %v1825
        %v1954 = vunpack.c.l.b16 %v1826
        %v1955 = vunpack.c.l.b16 %v1827
        %v1956 = vunpack.c.l.b16 %v1828
        %v1957 = vunpack.c.l.b16 %v1829
        %v1958 = vunpack.c.l.b16 %v1830
        %v1959 = vunpack.c.l.b16 %v1831
        %v1960 = vunpack.c.l.b16 %v1832
        %v1961 = vunpack.c.l.b16 %v1833
        %v1962 = vunpack.c.l.b16 %v1834
        %v1963 = vunpack.c.l.b16 %v1835
        %v1964 = vunpack.c.l.b16 %v1836
        %v1965 = vunpack.c.l.b16 %v1837
        %v1966 = vunpack.c.l.b16 %v1838
        %v1967 = vunpack.c.l.b16 %v1839
        %v1968 = vunpack.c.l.b16 %v1840
        %v1969 = vunpack.c.l.b16 %v1841
        %v1970 = vunpack.c.l.b16 %v1842
        %v1971 = vunpack.c.l.b16 %v1843
        %v1972 = vunpack.c.l.b16 %v1844
        %v1973 = vunpack.c.l.b16 %v1845
        %v1974 = vunpack.c.l.b16 %v1846
        %v1975 = vunpack.c.l.b16 %v1847
        %v1976 = vunpack.c.l.b16 %v1848
        %v1977 = vunpack.c.l.b16 %v1849
        %v1978 = vunpack.c.l.b16 %v1850
        %v1979 = vunpack.c.l.b16 %v1851
        %v1980 = vunpack.c.l.b16 %v1852
        %v1981 = vunpack.c.l.b16 %v1853
        %v1982 = vpack.c.b16 %v1919, %v1918
        %v1983 = vpack.c.b16 %v1921, %v1920
        %v1984 = vpack.c.b16 %v1923, %v1922
        %v1985 = vpack.c.b16 %v1925, %v1924
        %v1986 = vpack.c.b16 %v1927, %v1926
        %v1987 = vpack.c.b16 %v1929, %v1928
        %v1988 = vpack.c.b16 %v1931, %v1930
        %v1989 = vpack.c.b16 %v1933, %v1932
        %v1990 = vpack.c.b16 %v1935, %v1934
        %v1991 = vpack.c.b16 %v1937, %v1936
        %v1992 = vpack.c.b16 %v1939, %v1938
        %v1993 = vpack.c.b16 %v1941, %v1940
        %v1994 = vpack.c.b16 %v1943, %v1942
        %v1995 = vpack.c.b16 %v1945, %v1944
        %v1996 = vpack.c.b16 %v1947, %v1946
        %v1997 = vpack.c.b16 %v1949, %v1948
        %v1998 = vpack.c.b16 %v1951, %v1950
        %v1999 = vpack.c.b16 %v1953, %v1952
        %v2000 = vpack.c.b16 %v1955, %v1954
        %v2001 = vpack.c.b16 %v1957, %v1956
        %v2002 = vpack.c.b16 %v1959, %v1958
        %v2003 = vpack.c.b16 %v1961, %v1960
        %v2004 = vpack.c.b16 %v1963, %v1962
        %v2005 = vpack.c.b16 %v1965, %v1964
        %v2006 = vpack.c.b16 %v1967, %v1966
        %v2007 = vpack.c.b16 %v1969, %v1968
        %v2008 = vpack.c.b16 %v1971, %v1970
        %v2009 = vpack.c.b16 %v1973, %v1972
        %v2010 = vpack.c.b16 %v1975, %v1974
        %v2011 = vpack.c.b16 %v1977, %v1976
        %v2012 = vpack.c.b16 %v1979, %v1978
        %v2013 = vpack.c.b16 %v1981, %v1980
        %2046 = vmatpush.bf16.msra.mxu0 %v1989
        %2047 = vmatpush.bf16.msra.mxu0 %v1988
        %2048 = vmatpush.bf16.msra.mxu0 %v1987
        %2049 = vmatpush.bf16.msra.mxu0 %v1986
        %2050 = vmatpush.bf16.msra.mxu0 %v1985
        %2051 = vmatpush.bf16.msra.mxu0 %v1984
        %2052 = vmatpush.bf16.msra.mxu0 %v1983
        %2053 = vmatpush.bf16.msra.mxu0 %v1982
        %2054 = vmatmul.bf16.gmra.mxu0 %v1786
        %v2055 = vpop.f32.mrf.mxu0
        %v2056 = vadd.f32 0.0, %v2055
        %v2057 = vpop.f32.mrf.mxu0
        %2058 = vdwg.mxu0
        %2059 = vmatpush.bf16.msra.mxu0 %v1997
        %2060 = vmatpush.bf16.msra.mxu0 %v1996
        %2061 = vmatpush.bf16.msra.mxu0 %v1995
        %2062 = vmatpush.bf16.msra.mxu0 %v1994
        %2063 = vmatpush.bf16.msra.mxu0 %v1993
        %2064 = vmatpush.bf16.msra.mxu0 %v1992
        %2065 = vmatpush.bf16.msra.mxu0 %v1991
        %2066 = vmatpush.bf16.msra.mxu0 %v1990
        %2067 = vmatmul.bf16.gmra.mxu0 %v1787
        %v2068 = vpop.f32.mrf.mxu0
        %v2069 = vadd.f32 %v2056, %v2068
        %v2070 = vpop.f32.mrf.mxu0
        %2071 = vdwg.mxu0
        %2072 = vmatpush.bf16.msra.mxu0 %v2005
        %2073 = vmatpush.bf16.msra.mxu0 %v2004
        %2074 = vmatpush.bf16.msra.mxu0 %v2003
        %2075 = vmatpush.bf16.msra.mxu0 %v2002
        %2076 = vmatpush.bf16.msra.mxu0 %v2001
        %2077 = vmatpush.bf16.msra.mxu0 %v2000
        %2078 = vmatpush.bf16.msra.mxu0 %v1999
        %2079 = vmatpush.bf16.msra.mxu0 %v1998
        %2080 = vmatmul.bf16.gmra.mxu0 %v1788
        %v2081 = vpop.f32.mrf.mxu0
        %v2082 = vadd.f32 %v2069, %v2081
        %v2083 = vpop.f32.mrf.mxu0
        %2084 = vdwg.mxu0
        %2085 = vmatpush.bf16.msra.mxu0 %v2013
        %2086 = vmatpush.bf16.msra.mxu0 %v2012
        %2087 = vmatpush.bf16.msra.mxu0 %v2011
        %2088 = vmatpush.bf16.msra.mxu0 %v2010
        %2089 = vmatpush.bf16.msra.mxu0 %v2009
        %2090 = vmatpush.bf16.msra.mxu0 %v2008
        %2091 = vmatpush.bf16.msra.mxu0 %v2007
        %2092 = vmatpush.bf16.msra.mxu0 %v2006
        %2093 = vmatmul.bf16.gmra.mxu0 %v1789
        %v2094 = vpop.f32.mrf.mxu0
        %v2095 = vadd.f32 %v2082, %v2094
        %v2096 = vpop.f32.mrf.mxu0
        %2097 = vdwg.mxu0
        %v2098 = vadd.f32 %v1669, %v2095
        %v2099 = vld [vmem:[%s4 + $0x30] sm:$0xff]
        %v2100 = vld [vmem:[%s4 + $0x38] sm:$0xff]
        %v2101 = vld [vmem:[%s4 + $0x70] sm:$0xff]
        %v2102 = vld [vmem:[%s4 + $0x78] sm:$0xff]
        %v2103 = vld [vmem:[%s4 + $0xb0] sm:$0xff]
        %v2104 = vld [vmem:[%s4 + $0xb8] sm:$0xff]
        %v2105 = vld [vmem:[%s4 + $0xf0] sm:$0xff]
        %v2106 = vld [vmem:[%s4 + $0xf8] sm:$0xff]
        %v2107 = vld [vmem:[%s5 + $0xc] sm:$0xf]
        %v2109 = vperm.slane %v2107, 0
        %v2110 = vperm.slane %v2107, 1
        %v2111 = vperm.slane %v2107, 2
        %v2112 = vperm.slane %v2107, 3
        %v2125 = vunpack.c.l.b16 %v2099
        %v2126 = vunpack.c.h.b16 %v2099
        %v2127 = vunpack.c.l.b16 %v2100
        %v2128 = vunpack.c.h.b16 %v2100
        %v2129 = vunpack.c.l.b16 %v2101
        %v2130 = vunpack.c.h.b16 %v2101
        %v2131 = vunpack.c.l.b16 %v2102
        %v2132 = vunpack.c.h.b16 %v2102
        %v2133 = vunpack.c.l.b16 %v2103
        %v2134 = vunpack.c.h.b16 %v2103
        %v2135 = vunpack.c.l.b16 %v2104
        %v2136 = vunpack.c.h.b16 %v2104
        %v2137 = vunpack.c.l.b16 %v2105
        %v2138 = vunpack.c.h.b16 %v2105
        %v2139 = vunpack.c.l.b16 %v2106
        %v2140 = vunpack.c.h.b16 %v2106
        %v2141 = vpack.c.b16 %v2129, %v2125
        %v2142 = vpack.c.b16 %v2130, %v2126
        %v2143 = vpack.c.b16 %v2131, %v2127
        %v2144 = vpack.c.b16 %v2132, %v2128
        %v2145 = vpack.c.b16 %v2137, %v2133
        %v2146 = vpack.c.b16 %v2138, %v2134
        %v2147 = vpack.c.b16 %v2139, %v2135
        %v2148 = vpack.c.b16 %v2140, %v2136
        %2157 = vmatpush.bf16.msra.mxu0 0
        %2158 = vmatpush.bf16.msra.mxu0 0
        %2159 = vmatpush.bf16.msra.mxu0 0
        %2160 = vmatpush.bf16.msra.mxu0 0
        %2161 = vmatpush.bf16.msra.mxu0 0
        %2162 = vmatpush.bf16.msra.mxu0 0
        %2163 = vmatpush.bf16.msra.mxu0 %v2145
        %2164 = vmatpush.bf16.msra.mxu0 %v2141
        %2165 = vmatmul.bf16.gmra.mxu0 %v876
        %v2166 = vpop.f32.mrf.mxu0
        %v2167 = vadd.f32 %v2109, %v2166
        %v2168 = vpop.f32.mrf.mxu0
        %2169 = vdwg.mxu0
        %2170 = vmatpush.bf16.msra.mxu0 0
        %2171 = vmatpush.bf16.msra.mxu0 0
        %2172 = vmatpush.bf16.msra.mxu0 0
        %2173 = vmatpush.bf16.msra.mxu0 0
        %2174 = vmatpush.bf16.msra.mxu0 0
        %2175 = vmatpush.bf16.msra.mxu0 0
        %2176 = vmatpush.bf16.msra.mxu0 %v2146
        %2177 = vmatpush.bf16.msra.mxu0 %v2142
        %2178 = vmatmul.bf16.gmra.mxu0 %v876
        %v2179 = vpop.f32.mrf.mxu0
        %v2180 = vadd.f32 %v2110, %v2179
        %v2181 = vpop.f32.mrf.mxu0
        %2182 = vdwg.mxu0
        %2183 = vmatpush.bf16.msra.mxu0 0
        %2184 = vmatpush.bf16.msra.mxu0 0
        %2185 = vmatpush.bf16.msra.mxu0 0
        %2186 = vmatpush.bf16.msra.mxu0 0
        %2187 = vmatpush.bf16.msra.mxu0 0
        %2188 = vmatpush.bf16.msra.mxu0 0
        %2189 = vmatpush.bf16.msra.mxu0 %v2147
        %2190 = vmatpush.bf16.msra.mxu0 %v2143
        %2191 = vmatmul.bf16.gmra.mxu0 %v876
        %v2192 = vpop.f32.mrf.mxu0
        %v2193 = vadd.f32 %v2111, %v2192
        %v2194 = vpop.f32.mrf.mxu0
        %2195 = vdwg.mxu0
        %2196 = vmatpush.bf16.msra.mxu0 0
        %2197 = vmatpush.bf16.msra.mxu0 0
        %2198 = vmatpush.bf16.msra.mxu0 0
        %2199 = vmatpush.bf16.msra.mxu0 0
        %2200 = vmatpush.bf16.msra.mxu0 0
        %2201 = vmatpush.bf16.msra.mxu0 0
        %2202 = vmatpush.bf16.msra.mxu0 %v2148
        %2203 = vmatpush.bf16.msra.mxu0 %v2144
        %2204 = vmatmul.bf16.gmra.mxu0 %v876
        %v2205 = vpop.f32.mrf.mxu0
        %v2206 = vadd.f32 %v2112, %v2205
        %v2207 = vpop.f32.mrf.mxu0
        %2208 = vdwg.mxu0
        %v2209 = vmax.f32 %v2167, 0.0
        %v2210 = vmax.f32 %v2180, 0.0
        %v2211 = vmax.f32 %v2193, 0.0
        %v2212 = vmax.f32 %v2206, 0.0
        %v2213 = vpack.c.bf16 %v2209, %v2209
        %v2214 = vpack.c.bf16 %v2210, %v2210
        %v2215 = vpack.c.bf16 %v2211, %v2211
        %v2216 = vpack.c.bf16 %v2212, %v2212
        %v2217 = vld [vmem:[%s6 + $0x300] sm:$0xf]
        %v2218 = vld [vmem:[%s6 + $0x304] sm:$0xf]
        %v2219 = vld [vmem:[%s6 + $0x308] sm:$0xf]
        %v2220 = vld [vmem:[%s6 + $0x30c] sm:$0xf]
        %v2221 = vld [vmem:[%s6 + $0x310] sm:$0xf]
        %v2222 = vld [vmem:[%s6 + $0x314] sm:$0xf]
        %v2223 = vld [vmem:[%s6 + $0x318] sm:$0xf]
        %v2224 = vld [vmem:[%s6 + $0x31c] sm:$0xf]
        %v2225 = vld [vmem:[%s6 + $0x320] sm:$0xf]
        %v2226 = vld [vmem:[%s6 + $0x324] sm:$0xf]
        %v2227 = vld [vmem:[%s6 + $0x328] sm:$0xf]
        %v2228 = vld [vmem:[%s6 + $0x32c] sm:$0xf]
        %v2229 = vld [vmem:[%s6 + $0x330] sm:$0xf]
        %v2230 = vld [vmem:[%s6 + $0x334] sm:$0xf]
        %v2231 = vld [vmem:[%s6 + $0x338] sm:$0xf]
        %v2232 = vld [vmem:[%s6 + $0x33c] sm:$0xf]
        %v2233 = vld [vmem:[%s6 + $0x340] sm:$0xf]
        %v2234 = vld [vmem:[%s6 + $0x344] sm:$0xf]
        %v2235 = vld [vmem:[%s6 + $0x348] sm:$0xf]
        %v2236 = vld [vmem:[%s6 + $0x34c] sm:$0xf]
        %v2237 = vld [vmem:[%s6 + $0x350] sm:$0xf]
        %v2238 = vld [vmem:[%s6 + $0x354] sm:$0xf]
        %v2239 = vld [vmem:[%s6 + $0x358] sm:$0xf]
        %v2240 = vld [vmem:[%s6 + $0x35c] sm:$0xf]
        %v2241 = vld [vmem:[%s6 + $0x360] sm:$0xf]
        %v2242 = vld [vmem:[%s6 + $0x364] sm:$0xf]
        %v2243 = vld [vmem:[%s6 + $0x368] sm:$0xf]
        %v2244 = vld [vmem:[%s6 + $0x36c] sm:$0xf]
        %v2245 = vld [vmem:[%s6 + $0x370] sm:$0xf]
        %v2246 = vld [vmem:[%s6 + $0x374] sm:$0xf]
        %v2247 = vld [vmem:[%s6 + $0x378] sm:$0xf]
        %v2248 = vld [vmem:[%s6 + $0x37c] sm:$0xf]
        %v2249 = vld [vmem:[%s6 + $0x380] sm:$0xf]
        %v2250 = vld [vmem:[%s6 + $0x384] sm:$0xf]
        %v2251 = vld [vmem:[%s6 + $0x388] sm:$0xf]
        %v2252 = vld [vmem:[%s6 + $0x38c] sm:$0xf]
        %v2253 = vld [vmem:[%s6 + $0x390] sm:$0xf]
        %v2254 = vld [vmem:[%s6 + $0x394] sm:$0xf]
        %v2255 = vld [vmem:[%s6 + $0x398] sm:$0xf]
        %v2256 = vld [vmem:[%s6 + $0x39c] sm:$0xf]
        %v2257 = vld [vmem:[%s6 + $0x3a0] sm:$0xf]
        %v2258 = vld [vmem:[%s6 + $0x3a4] sm:$0xf]
        %v2259 = vld [vmem:[%s6 + $0x3a8] sm:$0xf]
        %v2260 = vld [vmem:[%s6 + $0x3ac] sm:$0xf]
        %v2261 = vld [vmem:[%s6 + $0x3b0] sm:$0xf]
        %v2262 = vld [vmem:[%s6 + $0x3b4] sm:$0xf]
        %v2263 = vld [vmem:[%s6 + $0x3b8] sm:$0xf]
        %v2264 = vld [vmem:[%s6 + $0x3bc] sm:$0xf]
        %v2265 = vld [vmem:[%s6 + $0x3c0] sm:$0xf]
        %v2266 = vld [vmem:[%s6 + $0x3c4] sm:$0xf]
        %v2267 = vld [vmem:[%s6 + $0x3c8] sm:$0xf]
        %v2268 = vld [vmem:[%s6 + $0x3cc] sm:$0xf]
        %v2269 = vld [vmem:[%s6 + $0x3d0] sm:$0xf]
        %v2270 = vld [vmem:[%s6 + $0x3d4] sm:$0xf]
        %v2271 = vld [vmem:[%s6 + $0x3d8] sm:$0xf]
        %v2272 = vld [vmem:[%s6 + $0x3dc] sm:$0xf]
        %v2273 = vld [vmem:[%s6 + $0x3e0] sm:$0xf]
        %v2274 = vld [vmem:[%s6 + $0x3e4] sm:$0xf]
        %v2275 = vld [vmem:[%s6 + $0x3e8] sm:$0xf]
        %v2276 = vld [vmem:[%s6 + $0x3ec] sm:$0xf]
        %v2277 = vld [vmem:[%s6 + $0x3f0] sm:$0xf]
        %v2278 = vld [vmem:[%s6 + $0x3f4] sm:$0xf]
        %v2279 = vld [vmem:[%s6 + $0x3f8] sm:$0xf]
        %v2280 = vld [vmem:[%s6 + $0x3fc] sm:$0xf]
        %v2345 = vunpack.c.l.b16 %v2217
        %v2346 = vunpack.c.l.b16 %v2218
        %v2347 = vunpack.c.l.b16 %v2219
        %v2348 = vunpack.c.l.b16 %v2220
        %v2349 = vunpack.c.l.b16 %v2221
        %v2350 = vunpack.c.l.b16 %v2222
        %v2351 = vunpack.c.l.b16 %v2223
        %v2352 = vunpack.c.l.b16 %v2224
        %v2353 = vunpack.c.l.b16 %v2225
        %v2354 = vunpack.c.l.b16 %v2226
        %v2355 = vunpack.c.l.b16 %v2227
        %v2356 = vunpack.c.l.b16 %v2228
        %v2357 = vunpack.c.l.b16 %v2229
        %v2358 = vunpack.c.l.b16 %v2230
        %v2359 = vunpack.c.l.b16 %v2231
        %v2360 = vunpack.c.l.b16 %v2232
        %v2361 = vunpack.c.l.b16 %v2233
        %v2362 = vunpack.c.l.b16 %v2234
        %v2363 = vunpack.c.l.b16 %v2235
        %v2364 = vunpack.c.l.b16 %v2236
        %v2365 = vunpack.c.l.b16 %v2237
        %v2366 = vunpack.c.l.b16 %v2238
        %v2367 = vunpack.c.l.b16 %v2239
        %v2368 = vunpack.c.l.b16 %v2240
        %v2369 = vunpack.c.l.b16 %v2241
        %v2370 = vunpack.c.l.b16 %v2242
        %v2371 = vunpack.c.l.b16 %v2243
        %v2372 = vunpack.c.l.b16 %v2244
        %v2373 = vunpack.c.l.b16 %v2245
        %v2374 = vunpack.c.l.b16 %v2246
        %v2375 = vunpack.c.l.b16 %v2247
        %v2376 = vunpack.c.l.b16 %v2248
        %v2377 = vunpack.c.l.b16 %v2249
        %v2378 = vunpack.c.l.b16 %v2250
        %v2379 = vunpack.c.l.b16 %v2251
        %v2380 = vunpack.c.l.b16 %v2252
        %v2381 = vunpack.c.l.b16 %v2253
        %v2382 = vunpack.c.l.b16 %v2254
        %v2383 = vunpack.c.l.b16 %v2255
        %v2384 = vunpack.c.l.b16 %v2256
        %v2385 = vunpack.c.l.b16 %v2257
        %v2386 = vunpack.c.l.b16 %v2258
        %v2387 = vunpack.c.l.b16 %v2259
        %v2388 = vunpack.c.l.b16 %v2260
        %v2389 = vunpack.c.l.b16 %v2261
        %v2390 = vunpack.c.l.b16 %v2262
        %v2391 = vunpack.c.l.b16 %v2263
        %v2392 = vunpack.c.l.b16 %v2264
        %v2393 = vunpack.c.l.b16 %v2265
        %v2394 = vunpack.c.l.b16 %v2266
        %v2395 = vunpack.c.l.b16 %v2267
        %v2396 = vunpack.c.l.b16 %v2268
        %v2397 = vunpack.c.l.b16 %v2269
        %v2398 = vunpack.c.l.b16 %v2270
        %v2399 = vunpack.c.l.b16 %v2271
        %v2400 = vunpack.c.l.b16 %v2272
        %v2401 = vunpack.c.l.b16 %v2273
        %v2402 = vunpack.c.l.b16 %v2274
        %v2403 = vunpack.c.l.b16 %v2275
        %v2404 = vunpack.c.l.b16 %v2276
        %v2405 = vunpack.c.l.b16 %v2277
        %v2406 = vunpack.c.l.b16 %v2278
        %v2407 = vunpack.c.l.b16 %v2279
        %v2408 = vunpack.c.l.b16 %v2280
        %v2409 = vpack.c.b16 %v2346, %v2345
        %v2410 = vpack.c.b16 %v2348, %v2347
        %v2411 = vpack.c.b16 %v2350, %v2349
        %v2412 = vpack.c.b16 %v2352, %v2351
        %v2413 = vpack.c.b16 %v2354, %v2353
        %v2414 = vpack.c.b16 %v2356, %v2355
        %v2415 = vpack.c.b16 %v2358, %v2357
        %v2416 = vpack.c.b16 %v2360, %v2359
        %v2417 = vpack.c.b16 %v2362, %v2361
        %v2418 = vpack.c.b16 %v2364, %v2363
        %v2419 = vpack.c.b16 %v2366, %v2365
        %v2420 = vpack.c.b16 %v2368, %v2367
        %v2421 = vpack.c.b16 %v2370, %v2369
        %v2422 = vpack.c.b16 %v2372, %v2371
        %v2423 = vpack.c.b16 %v2374, %v2373
        %v2424 = vpack.c.b16 %v2376, %v2375
        %v2425 = vpack.c.b16 %v2378, %v2377
        %v2426 = vpack.c.b16 %v2380, %v2379
        %v2427 = vpack.c.b16 %v2382, %v2381
        %v2428 = vpack.c.b16 %v2384, %v2383
        %v2429 = vpack.c.b16 %v2386, %v2385
        %v2430 = vpack.c.b16 %v2388, %v2387
        %v2431 = vpack.c.b16 %v2390, %v2389
        %v2432 = vpack.c.b16 %v2392, %v2391
        %v2433 = vpack.c.b16 %v2394, %v2393
        %v2434 = vpack.c.b16 %v2396, %v2395
        %v2435 = vpack.c.b16 %v2398, %v2397
        %v2436 = vpack.c.b16 %v2400, %v2399
        %v2437 = vpack.c.b16 %v2402, %v2401
        %v2438 = vpack.c.b16 %v2404, %v2403
        %v2439 = vpack.c.b16 %v2406, %v2405
        %v2440 = vpack.c.b16 %v2408, %v2407
        %2473 = vmatpush.bf16.msra.mxu0 %v2416
        %2474 = vmatpush.bf16.msra.mxu0 %v2415
        %2475 = vmatpush.bf16.msra.mxu0 %v2414
        %2476 = vmatpush.bf16.msra.mxu0 %v2413
        %2477 = vmatpush.bf16.msra.mxu0 %v2412
        %2478 = vmatpush.bf16.msra.mxu0 %v2411
        %2479 = vmatpush.bf16.msra.mxu0 %v2410
        %2480 = vmatpush.bf16.msra.mxu0 %v2409
        %2481 = vmatmul.bf16.gmra.mxu0 %v2213
        %v2482 = vpop.f32.mrf.mxu0
        %v2483 = vadd.f32 0.0, %v2482
        %v2484 = vpop.f32.mrf.mxu0
        %2485 = vdwg.mxu0
        %2486 = vmatpush.bf16.msra.mxu0 %v2424
        %2487 = vmatpush.bf16.msra.mxu0 %v2423
        %2488 = vmatpush.bf16.msra.mxu0 %v2422
        %2489 = vmatpush.bf16.msra.mxu0 %v2421
        %2490 = vmatpush.bf16.msra.mxu0 %v2420
        %2491 = vmatpush.bf16.msra.mxu0 %v2419
        %2492 = vmatpush.bf16.msra.mxu0 %v2418
        %2493 = vmatpush.bf16.msra.mxu0 %v2417
        %2494 = vmatmul.bf16.gmra.mxu0 %v2214
        %v2495 = vpop.f32.mrf.mxu0
        %v2496 = vadd.f32 %v2483, %v2495
        %v2497 = vpop.f32.mrf.mxu0
        %2498 = vdwg.mxu0
        %2499 = vmatpush.bf16.msra.mxu0 %v2432
        %2500 = vmatpush.bf16.msra.mxu0 %v2431
        %2501 = vmatpush.bf16.msra.mxu0 %v2430
        %2502 = vmatpush.bf16.msra.mxu0 %v2429
        %2503 = vmatpush.bf16.msra.mxu0 %v2428
        %2504 = vmatpush.bf16.msra.mxu0 %v2427
        %2505 = vmatpush.bf16.msra.mxu0 %v2426
        %2506 = vmatpush.bf16.msra.mxu0 %v2425
        %2507 = vmatmul.bf16.gmra.mxu0 %v2215
        %v2508 = vpop.f32.mrf.mxu0
        %v2509 = vadd.f32 %v2496, %v2508
        %v2510 = vpop.f32.mrf.mxu0
        %2511 = vdwg.mxu0
        %2512 = vmatpush.bf16.msra.mxu0 %v2440
        %2513 = vmatpush.bf16.msra.mxu0 %v2439
        %2514 = vmatpush.bf16.msra.mxu0 %v2438
        %2515 = vmatpush.bf16.msra.mxu0 %v2437
        %2516 = vmatpush.bf16.msra.mxu0 %v2436
        %2517 = vmatpush.bf16.msra.mxu0 %v2435
        %2518 = vmatpush.bf16.msra.mxu0 %v2434
        %2519 = vmatpush.bf16.msra.mxu0 %v2433
        %2520 = vmatmul.bf16.gmra.mxu0 %v2216
        %v2521 = vpop.f32.mrf.mxu0
        %v2522 = vadd.f32 %v2509, %v2521
        %v2523 = vpop.f32.mrf.mxu0
        %2524 = vdwg.mxu0
        %v2525 = vadd.f32 %v2098, %v2522
        %v2526 = vadd.f32 %v815, %v2525
        %v2527 = vperm.slane %v436, 6
        %v2528 = vadd.f32 %v2526, %v2527
        %v2529 = vsel %vm456, %v2528, 0.0
        %2530 = vadd.xlane.f32.xlu0 %v2529
        %v2531 = vpop.xlane.xlu0 %2530
        %v2532 = vmul.f32 %v2531, %v792
        %v2533 = vsub.f32 %v2528, %v2532
        %v2534 = vmul.f32 %v2533, %v2533
        %v2535 = vsel %vm456, %v2534, 0.0
        %2536 = vadd.xlane.f32.xlu0 %v2535
        %v2537 = vpop.xlane.xlu0 %2536
        %v2538 = vmul.f32 %v2537, %v792
        %v2539 = vadd.f32 %v2538, 1e-05
        %v2540 = vrsqrt.pop %v2539
        %v2541 = vmul.f32 %v2540, %v2539
        %v2542 = vmul.f32 %v2541, %v2540
        %v2543 = vmul.f32 0.5, %v2542
        %v2544 = vsub.f32 1.5, %v2543
        %v2545 = vmul.f32 %v2540, %v2544
        %vm2546 = vweird.f32 %v2539
        %vm2547 = vweird.f32 %v2540
        %vm2548 = vmor %vm2546, %vm2547
        %v2549 = vsel %vm2548, %v2540, %v2545
        %v2550 = vmul.f32 %v2533, %v2549
        %v2551 = vperm.slane %v436, 7
        %v2552 = vmul.f32 %v2550, %v2551
        %v2553 = vperm.slane %v437, 0
        %v2554 = vadd.f32 %v2552, %v2553
        %s2555 = scalar_lea.vmem %s3, 16
        %v2556 = vld [vmem:[%s2555] sm:$0xff]
        %v2557 = vld [vmem:[%s2555 + $0x8] sm:$0xff]
        %v2558 = vpack.c.bf16 %v2554, %v2554
        %s2559 = scalar_lea.vmem %s2, 64
        %v2560 = vld [vmem:[%s2559] sm:$0xf]
        %v2561 = vld [vmem:[%s2559 + $0x4] sm:$0xf]
        %v2562 = vld [vmem:[%s2559 + $0x8] sm:$0xf]
        %v2563 = vld [vmem:[%s2559 + $0xc] sm:$0xf]
        %v2564 = vperm.slane %v2556, 0
        %v2569 = vunpack.c.l.b16 %v2560
        %v2570 = vunpack.c.l.b16 %v2561
        %v2571 = vunpack.c.l.b16 %v2562
        %v2572 = vunpack.c.l.b16 %v2563
        %v2573 = vpack.c.b16 %v2570, %v2569
        %v2574 = vpack.c.b16 %v2572, %v2571
        %v2578 = vsel %vm456, %v2558, 0
        %2580 = vmatpush.bf16.msra.mxu0 0
        %2581 = vmatpush.bf16.msra.mxu0 0
        %2582 = vmatpush.bf16.msra.mxu0 0
        %2583 = vmatpush.bf16.msra.mxu0 0
        %2584 = vmatpush.bf16.msra.mxu0 0
        %2585 = vmatpush.bf16.msra.mxu0 0
        %2586 = vmatpush.bf16.msra.mxu0 %v2574
        %2587 = vmatpush.bf16.msra.mxu0 %v2573
        %2588 = vmatmul.bf16.gmra.mxu0 %v2578
        %v2589 = vpop.f32.mrf.mxu0
        %v2590 = vadd.f32 %v2564, %v2589
        %v2591 = vpop.f32.mrf.mxu0
        %2592 = vdwg.mxu0
        %s2593 = scalar_lea.vmem %s2, 80
        %v2594 = vld [vmem:[%s2593] sm:$0xf]
        %v2595 = vld [vmem:[%s2593 + $0x4] sm:$0xf]
        %v2596 = vld [vmem:[%s2593 + $0x8] sm:$0xf]
        %v2597 = vld [vmem:[%s2593 + $0xc] sm:$0xf]
        %v2598 = vperm.slane %v2556, 1
        %v2603 = vunpack.c.l.b16 %v2594
        %v2604 = vunpack.c.l.b16 %v2595
        %v2605 = vunpack.c.l.b16 %v2596
        %v2606 = vunpack.c.l.b16 %v2597
        %v2607 = vpack.c.b16 %v2604, %v2603
        %v2608 = vpack.c.b16 %v2606, %v2605
        %2611 = vmatpush.bf16.msra.mxu0 0
        %2612 = vmatpush.bf16.msra.mxu0 0
        %2613 = vmatpush.bf16.msra.mxu0 0
        %2614 = vmatpush.bf16.msra.mxu0 0
        %2615 = vmatpush.bf16.msra.mxu0 0
        %2616 = vmatpush.bf16.msra.mxu0 0
        %2617 = vmatpush.bf16.msra.mxu0 %v2608
        %2618 = vmatpush.bf16.msra.mxu0 %v2607
        %2619 = vmatmul.bf16.gmra.mxu0 %v2578
        %v2620 = vpop.f32.mrf.mxu0
        %v2621 = vadd.f32 %v2598, %v2620
        %v2622 = vpop.f32.mrf.mxu0
        %2623 = vdwg.mxu0
        %s2624 = scalar_lea.vmem %s2, 96
        %v2625 = vld [vmem:[%s2624] sm:$0xf]
        %v2626 = vld [vmem:[%s2624 + $0x4] sm:$0xf]
        %v2627 = vld [vmem:[%s2624 + $0x8] sm:$0xf]
        %v2628 = vld [vmem:[%s2624 + $0xc] sm:$0xf]
        %v2629 = vperm.slane %v2556, 2
        %v2634 = vunpack.c.l.b16 %v2625
        %v2635 = vunpack.c.l.b16 %v2626
        %v2636 = vunpack.c.l.b16 %v2627
        %v2637 = vunpack.c.l.b16 %v2628
        %v2638 = vpack.c.b16 %v2635, %v2634
        %v2639 = vpack.c.b16 %v2637, %v2636
        %2642 = vmatpush.bf16.msra.mxu0 0
        %2643 = vmatpush.bf16.msra.mxu0 0
        %2644 = vmatpush.bf16.msra.mxu0 0
        %2645 = vmatpush.bf16.msra.mxu0 0
        %2646 = vmatpush.bf16.msra.mxu0 0
        %2647 = vmatpush.bf16.msra.mxu0 0
        %2648 = vmatpush.bf16.msra.mxu0 %v2639
        %2649 = vmatpush.bf16.msra.mxu0 %v2638
        %2650 = vmatmul.bf16.gmra.mxu0 %v2578
        %v2651 = vpop.f32.mrf.mxu0
        %v2652 = vadd.f32 %v2629, %v2651
        %v2653 = vpop.f32.mrf.mxu0
        %2654 = vdwg.mxu0
        %v2655 = vpack.c.bf16 %v2621, %v2621
        %v2656 = vmul.f32 %v2590, %v420
        %v2657 = vpack.c.bf16 %v2656, %v2656
        %v2658 = vmul.f32 %v2652, %v420
        %v2659 = vpack.c.bf16 %v2658, %v2658
        %v2661 = vsel %vm456, %v2657, 0
        %v2664 = vsel %vm456, %v2655, 0
        %2666 = vmatpush.bf16.xpose.msra.mxu0 0
        %2667 = vmatpush.bf16.xpose.msra.mxu0 0
        %2668 = vmatpush.bf16.xpose.msra.mxu0 0
        %2669 = vmatpush.bf16.xpose.msra.mxu0 0
        %2670 = vmatpush.bf16.xpose.msra.mxu0 0
        %2671 = vmatpush.bf16.xpose.msra.mxu0 0
        %2672 = vmatpush.bf16.xpose.msra.mxu0 0
        %2673 = vmatpush.bf16.xpose.msra.mxu0 %v2664
        %2674 = vmatmul.bf16.gmra.mxu0 %v2661
        %v2675 = vpop.f32.mrf.mxu0
        %v2676 = vadd.f32 0.0, %v2675
        %v2677 = vpop.f32.mrf.mxu0
        %2678 = vdwg.mxu0
        %v2679 = vsel %vm559, %v2676, -inf
        %2680 = vmax.xlane.f32.xlu0 %v2679
        %v2681 = vpop.xlane.xlu0 %2680
        %v2682 = vsub.f32 %v2676, %v2681
        %v2683 = vmul.f32 %v2682, 1.442695
        %v2684 = vpow.pop %v2683
        %v2685 = vsel %vm559, %v2684, 0.0
        %2686 = vadd.xlane.f32.xlu0 %v2685
        %v2687 = vpop.xlane.xlu0 %2686
        %v2688 = vrcp.pop %v2687
        %v2689 = vmul.f32 %v2684, %v2688
        %v2690 = vpack.c.bf16 %v2689, %v2689
        %v2691 = vmul.f32 %v2590, %v425
        %v2692 = vpack.c.bf16 %v2691, %v2691
        %v2693 = vmul.f32 %v2652, %v425
        %v2694 = vpack.c.bf16 %v2693, %v2693
        %v2696 = vsel %vm456, %v2692, 0
        %2698 = vmatpush.bf16.xpose.msra.mxu0 0
        %2699 = vmatpush.bf16.xpose.msra.mxu0 0
        %2700 = vmatpush.bf16.xpose.msra.mxu0 0
        %2701 = vmatpush.bf16.xpose.msra.mxu0 0
        %2702 = vmatpush.bf16.xpose.msra.mxu0 0
        %2703 = vmatpush.bf16.xpose.msra.mxu0 0
        %2704 = vmatpush.bf16.xpose.msra.mxu0 0
        %2705 = vmatpush.bf16.xpose.msra.mxu0 %v2664
        %2706 = vmatmul.bf16.gmra.mxu0 %v2696
        %v2707 = vpop.f32.mrf.mxu0
        %v2708 = vadd.f32 0.0, %v2707
        %v2709 = vpop.f32.mrf.mxu0
        %2710 = vdwg.mxu0
        %v2711 = vsel %vm559, %v2708, -inf
        %2712 = vmax.xlane.f32.xlu0 %v2711
        %v2713 = vpop.xlane.xlu0 %2712
        %v2714 = vsub.f32 %v2708, %v2713
        %v2715 = vmul.f32 %v2714, 1.442695
        %v2716 = vpow.pop %v2715
        %v2717 = vsel %vm559, %v2716, 0.0
        %2718 = vadd.xlane.f32.xlu0 %v2717
        %v2719 = vpop.xlane.xlu0 %2718
        %v2720 = vrcp.pop %v2719
        %v2721 = vmul.f32 %v2716, %v2720
        %v2722 = vpack.c.bf16 %v2721, %v2721
        %v2724 = vsel %vm559, %v2722, 0
        %v2727 = vsel %vm607, %v2694, 0
        %2729 = vmatpush.bf16.msra.mxu0 0
        %2730 = vmatpush.bf16.msra.mxu0 0
        %2731 = vmatpush.bf16.msra.mxu0 0
        %2732 = vmatpush.bf16.msra.mxu0 0
        %2733 = vmatpush.bf16.msra.mxu0 0
        %2734 = vmatpush.bf16.msra.mxu0 0
        %2735 = vmatpush.bf16.msra.mxu0 0
        %2736 = vmatpush.bf16.msra.mxu0 %v2727
        %2737 = vmatmul.bf16.gmra.mxu0 %v2724
        %v2738 = vpop.f32.mrf.mxu0
        %v2739 = vadd.f32 0.0, %v2738
        %v2740 = vpop.f32.mrf.mxu0
        %2741 = vdwg.mxu0
        %v2743 = vsel %vm559, %v2690, 0
        %v2746 = vsel %vm607, %v2659, 0
        %2748 = vmatpush.bf16.msra.mxu0 0
        %2749 = vmatpush.bf16.msra.mxu0 0
        %2750 = vmatpush.bf16.msra.mxu0 0
        %2751 = vmatpush.bf16.msra.mxu0 0
        %2752 = vmatpush.bf16.msra.mxu0 0
        %2753 = vmatpush.bf16.msra.mxu0 0
        %2754 = vmatpush.bf16.msra.mxu0 0
        %2755 = vmatpush.bf16.msra.mxu0 %v2746
        %2756 = vmatmul.bf16.gmra.mxu0 %v2743
        %v2757 = vpop.f32.mrf.mxu0
        %v2758 = vadd.f32 %v2739, %v2757
        %v2759 = vpop.f32.mrf.mxu0
        %2760 = vdwg.mxu0
        %v2761 = vmul.f32 %v2590, %v430
        %v2762 = vpack.c.bf16 %v2761, %v2761
        %v2763 = vmul.f32 %v2652, %v430
        %v2764 = vpack.c.bf16 %v2763, %v2763
        %v2766 = vsel %vm456, %v2762, 0
        %2768 = vmatpush.bf16.xpose.msra.mxu0 0
        %2769 = vmatpush.bf16.xpose.msra.mxu0 0
        %2770 = vmatpush.bf16.xpose.msra.mxu0 0
        %2771 = vmatpush.bf16.xpose.msra.mxu0 0
        %2772 = vmatpush.bf16.xpose.msra.mxu0 0
        %2773 = vmatpush.bf16.xpose.msra.mxu0 0
        %2774 = vmatpush.bf16.xpose.msra.mxu0 0
        %2775 = vmatpush.bf16.xpose.msra.mxu0 %v2664
        %2776 = vmatmul.bf16.gmra.mxu0 %v2766
        %v2777 = vpop.f32.mrf.mxu0
        %v2778 = vadd.f32 0.0, %v2777
        %v2779 = vpop.f32.mrf.mxu0
        %2780 = vdwg.mxu0
        %v2781 = vsel %vm559, %v2778, -inf
        %2782 = vmax.xlane.f32.xlu0 %v2781
        %v2783 = vpop.xlane.xlu0 %2782
        %v2784 = vsub.f32 %v2778, %v2783
        %v2785 = vmul.f32 %v2784, 1.442695
        %v2786 = vpow.pop %v2785
        %v2787 = vsel %vm559, %v2786, 0.0
        %2788 = vadd.xlane.f32.xlu0 %v2787
        %v2789 = vpop.xlane.xlu0 %2788
        %v2790 = vrcp.pop %v2789
        %v2791 = vmul.f32 %v2786, %v2790
        %v2792 = vpack.c.bf16 %v2791, %v2791
        %v2794 = vsel %vm559, %v2792, 0
        %v2797 = vsel %vm607, %v2764, 0
        %2799 = vmatpush.bf16.msra.mxu0 0
        %2800 = vmatpush.bf16.msra.mxu0 0
        %2801 = vmatpush.bf16.msra.mxu0 0
        %2802 = vmatpush.bf16.msra.mxu0 0
        %2803 = vmatpush.bf16.msra.mxu0 0
        %2804 = vmatpush.bf16.msra.mxu0 0
        %2805 = vmatpush.bf16.msra.mxu0 0
        %2806 = vmatpush.bf16.msra.mxu0 %v2797
        %2807 = vmatmul.bf16.gmra.mxu0 %v2794
        %v2808 = vpop.f32.mrf.mxu0
        %v2809 = vadd.f32 0.0, %v2808
        %v2810 = vpop.f32.mrf.mxu0
        %2811 = vdwg.mxu0
        %v2812 = vadd.f32 %v2758, %v2809
        %v2813 = vmul.f32 %v2590, %v435
        %v2814 = vpack.c.bf16 %v2813, %v2813
        %v2815 = vmul.f32 %v2652, %v435
        %v2816 = vpack.c.bf16 %v2815, %v2815
        %v2818 = vsel %vm456, %v2814, 0
        %2820 = vmatpush.bf16.xpose.msra.mxu0 0
        %2821 = vmatpush.bf16.xpose.msra.mxu0 0
        %2822 = vmatpush.bf16.xpose.msra.mxu0 0
        %2823 = vmatpush.bf16.xpose.msra.mxu0 0
        %2824 = vmatpush.bf16.xpose.msra.mxu0 0
        %2825 = vmatpush.bf16.xpose.msra.mxu0 0
        %2826 = vmatpush.bf16.xpose.msra.mxu0 0
        %2827 = vmatpush.bf16.xpose.msra.mxu0 %v2664
        %2828 = vmatmul.bf16.gmra.mxu0 %v2818
        %v2829 = vpop.f32.mrf.mxu0
        %v2830 = vadd.f32 0.0, %v2829
        %v2831 = vpop.f32.mrf.mxu0
        %2832 = vdwg.mxu0
        %v2833 = vsel %vm559, %v2830, -inf
        %2834 = vmax.xlane.f32.xlu0 %v2833
        %v2835 = vpop.xlane.xlu0 %2834
        %v2836 = vsub.f32 %v2830, %v2835
        %v2837 = vmul.f32 %v2836, 1.442695
        %v2838 = vpow.pop %v2837
        %v2839 = vsel %vm559, %v2838, 0.0
        %2840 = vadd.xlane.f32.xlu0 %v2839
        %v2841 = vpop.xlane.xlu0 %2840
        %v2842 = vrcp.pop %v2841
        %v2843 = vmul.f32 %v2838, %v2842
        %v2844 = vpack.c.bf16 %v2843, %v2843
        %v2846 = vsel %vm559, %v2844, 0
        %v2849 = vsel %vm607, %v2816, 0
        %2851 = vmatpush.bf16.msra.mxu0 0
        %2852 = vmatpush.bf16.msra.mxu0 0
        %2853 = vmatpush.bf16.msra.mxu0 0
        %2854 = vmatpush.bf16.msra.mxu0 0
        %2855 = vmatpush.bf16.msra.mxu0 0
        %2856 = vmatpush.bf16.msra.mxu0 0
        %2857 = vmatpush.bf16.msra.mxu0 0
        %2858 = vmatpush.bf16.msra.mxu0 %v2849
        %2859 = vmatmul.bf16.gmra.mxu0 %v2846
        %v2860 = vpop.f32.mrf.mxu0
        %v2861 = vadd.f32 0.0, %v2860
        %v2862 = vpop.f32.mrf.mxu0
        %2863 = vdwg.mxu0
        %v2864 = vadd.f32 %v2812, %v2861
        %v2865 = vpack.c.bf16 %v2864, %v2864
        %s2866 = scalar_lea.vmem %s2, 112
        %v2867 = vld [vmem:[%s2866] sm:$0xf]
        %v2868 = vld [vmem:[%s2866 + $0x4] sm:$0xf]
        %v2869 = vld [vmem:[%s2866 + $0x8] sm:$0xf]
        %v2870 = vld [vmem:[%s2866 + $0xc] sm:$0xf]
        %v2871 = vperm.slane %v2556, 3
        %v2876 = vunpack.c.l.b16 %v2867
        %v2877 = vunpack.c.l.b16 %v2868
        %v2878 = vunpack.c.l.b16 %v2869
        %v2879 = vunpack.c.l.b16 %v2870
        %v2880 = vpack.c.b16 %v2877, %v2876
        %v2881 = vpack.c.b16 %v2879, %v2878
        %v2885 = vsel %vm456, %v2865, 0
        %2887 = vmatpush.bf16.msra.mxu0 0
        %2888 = vmatpush.bf16.msra.mxu0 0
        %2889 = vmatpush.bf16.msra.mxu0 0
        %2890 = vmatpush.bf16.msra.mxu0 0
        %2891 = vmatpush.bf16.msra.mxu0 0
        %2892 = vmatpush.bf16.msra.mxu0 0
        %2893 = vmatpush.bf16.msra.mxu0 %v2881
        %2894 = vmatpush.bf16.msra.mxu0 %v2880
        %2895 = vmatmul.bf16.gmra.mxu0 %v2885
        %v2896 = vpop.f32.mrf.mxu0
        %v2897 = vadd.f32 %v2871, %v2896
        %v2898 = vpop.f32.mrf.mxu0
        %2899 = vdwg.mxu0
        %v2900 = vadd.f32 %v2554, %v2897
        %v2901 = vsel %vm456, %v2900, 0.0
        %2902 = vadd.xlane.f32.xlu0 %v2901
        %v2903 = vpop.xlane.xlu0 %2902
        %v2904 = vmul.f32 %v2903, %v792
        %v2905 = vsub.f32 %v2900, %v2904
        %v2906 = vmul.f32 %v2905, %v2905
        %v2907 = vsel %vm456, %v2906, 0.0
        %2908 = vadd.xlane.f32.xlu0 %v2907
        %v2909 = vpop.xlane.xlu0 %2908
        %v2910 = vmul.f32 %v2909, %v792
        %v2911 = vadd.f32 %v2910, 1e-05
        %v2912 = vrsqrt.pop %v2911
        %v2913 = vmul.f32 %v2912, %v2911
        %v2914 = vmul.f32 %v2913, %v2912
        %v2915 = vmul.f32 0.5, %v2914
        %v2916 = vsub.f32 1.5, %v2915
        %v2917 = vmul.f32 %v2912, %v2916
        %vm2918 = vweird.f32 %v2911
        %vm2919 = vweird.f32 %v2912
        %vm2920 = vmor %vm2918, %vm2919
        %v2921 = vsel %vm2920, %v2912, %v2917
        %v2922 = vmul.f32 %v2905, %v2921
        %v2923 = vperm.slane %v2556, 4
        %v2924 = vmul.f32 %v2922, %v2923
        %v2925 = vperm.slane %v2556, 5
        %v2926 = vadd.f32 %v2924, %v2925
        %v2927 = vpack.c.bf16 %v2926, %v2926
        %s2928 = scalar_lea.vmem %s4, 256
        %v2929 = vld [vmem:[%s2928] sm:$0xff]
        %v2930 = vld [vmem:[%s2928 + $0x8] sm:$0xff]
        %v2931 = vld [vmem:[%s2928 + $0x40] sm:$0xff]
        %v2932 = vld [vmem:[%s2928 + $0x48] sm:$0xff]
        %v2933 = vld [vmem:[%s2928 + $0x80] sm:$0xff]
        %v2934 = vld [vmem:[%s2928 + $0x88] sm:$0xff]
        %v2935 = vld [vmem:[%s2928 + $0xc0] sm:$0xff]
        %v2936 = vld [vmem:[%s2928 + $0xc8] sm:$0xff]
        %s2937 = scalar_lea.vmem %s5, 16
        %v2938 = vld [vmem:[%s2937] sm:$0xf]
        %v2940 = vperm.slane %v2938, 0
        %v2941 = vperm.slane %v2938, 1
        %v2942 = vperm.slane %v2938, 2
        %v2943 = vperm.slane %v2938, 3
        %v2956 = vunpack.c.l.b16 %v2929
        %v2957 = vunpack.c.h.b16 %v2929
        %v2958 = vunpack.c.l.b16 %v2930
        %v2959 = vunpack.c.h.b16 %v2930
        %v2960 = vunpack.c.l.b16 %v2931
        %v2961 = vunpack.c.h.b16 %v2931
        %v2962 = vunpack.c.l.b16 %v2932
        %v2963 = vunpack.c.h.b16 %v2932
        %v2964 = vunpack.c.l.b16 %v2933
        %v2965 = vunpack.c.h.b16 %v2933
        %v2966 = vunpack.c.l.b16 %v2934
        %v2967 = vunpack.c.h.b16 %v2934
        %v2968 = vunpack.c.l.b16 %v2935
        %v2969 = vunpack.c.h.b16 %v2935
        %v2970 = vunpack.c.l.b16 %v2936
        %v2971 = vunpack.c.h.b16 %v2936
        %v2972 = vpack.c.b16 %v2960, %v2956
        %v2973 = vpack.c.b16 %v2961, %v2957
        %v2974 = vpack.c.b16 %v2962, %v2958
        %v2975 = vpack.c.b16 %v2963, %v2959
        %v2976 = vpack.c.b16 %v2968, %v2964
        %v2977 = vpack.c.b16 %v2969, %v2965
        %v2978 = vpack.c.b16 %v2970, %v2966
        %v2979 = vpack.c.b16 %v2971, %v2967
        %v2989 = vsel %vm456, %v2927, 0
        %2991 = vmatpush.bf16.msra.mxu0 0
        %2992 = vmatpush.bf16.msra.mxu0 0
        %2993 = vmatpush.bf16.msra.mxu0 0
        %2994 = vmatpush.bf16.msra.mxu0 0
        %2995 = vmatpush.bf16.msra.mxu0 0
        %2996 = vmatpush.bf16.msra.mxu0 0
        %2997 = vmatpush.bf16.msra.mxu0 %v2976
        %2998 = vmatpush.bf16.msra.mxu0 %v2972
        %2999 = vmatmul.bf16.gmra.mxu0 %v2989
        %v3000 = vpop.f32.mrf.mxu0
        %v3001 = vadd.f32 %v2940, %v3000
        %v3002 = vpop.f32.mrf.mxu0
        %3003 = vdwg.mxu0
        %3004 = vmatpush.bf16.msra.mxu0 0
        %3005 = vmatpush.bf16.msra.mxu0 0
        %3006 = vmatpush.bf16.msra.mxu0 0
        %3007 = vmatpush.bf16.msra.mxu0 0
        %3008 = vmatpush.bf16.msra.mxu0 0
        %3009 = vmatpush.bf16.msra.mxu0 0
        %3010 = vmatpush.bf16.msra.mxu0 %v2977
        %3011 = vmatpush.bf16.msra.mxu0 %v2973
        %3012 = vmatmul.bf16.gmra.mxu0 %v2989
        %v3013 = vpop.f32.mrf.mxu0
        %v3014 = vadd.f32 %v2941, %v3013
        %v3015 = vpop.f32.mrf.mxu0
        %3016 = vdwg.mxu0
        %3017 = vmatpush.bf16.msra.mxu0 0
        %3018 = vmatpush.bf16.msra.mxu0 0
        %3019 = vmatpush.bf16.msra.mxu0 0
        %3020 = vmatpush.bf16.msra.mxu0 0
        %3021 = vmatpush.bf16.msra.mxu0 0
        %3022 = vmatpush.bf16.msra.mxu0 0
        %3023 = vmatpush.bf16.msra.mxu0 %v2978
        %3024 = vmatpush.bf16.msra.mxu0 %v2974
        %3025 = vmatmul.bf16.gmra.mxu0 %v2989
        %v3026 = vpop.f32.mrf.mxu0
        %v3027 = vadd.f32 %v2942, %v3026
        %v3028 = vpop.f32.mrf.mxu0
        %3029 = vdwg.mxu0
        %3030 = vmatpush.bf16.msra.mxu0 0
        %3031 = vmatpush.bf16.msra.mxu0 0
        %3032 = vmatpush.bf16.msra.mxu0 0
        %3033 = vmatpush.bf16.msra.mxu0 0
        %3034 = vmatpush.bf16.msra.mxu0 0
        %3035 = vmatpush.bf16.msra.mxu0 0
        %3036 = vmatpush.bf16.msra.mxu0 %v2979
        %3037 = vmatpush.bf16.msra.mxu0 %v2975
        %3038 = vmatmul.bf16.gmra.mxu0 %v2989
        %v3039 = vpop.f32.mrf.mxu0
        %v3040 = vadd.f32 %v2943, %v3039
        %v3041 = vpop.f32.mrf.mxu0
        %3042 = vdwg.mxu0
        %v3043 = vmax.f32 %v3001, 0.0
        %v3044 = vmax.f32 %v3014, 0.0
        %v3045 = vmax.f32 %v3027, 0.0
        %v3046 = vmax.f32 %v3040, 0.0
        %v3047 = vpack.c.bf16 %v3043, %v3043
        %v3048 = vpack.c.bf16 %v3044, %v3044
        %v3049 = vpack.c.bf16 %v3045, %v3045
        %v3050 = vpack.c.bf16 %v3046, %v3046
        %s3051 = scalar_lea.vmem %s6, 1024
        %v3052 = vld [vmem:[%s3051] sm:$0xf]
        %v3053 = vld [vmem:[%s3051 + $0x4] sm:$0xf]
        %v3054 = vld [vmem:[%s3051 + $0x8] sm:$0xf]
        %v3055 = vld [vmem:[%s3051 + $0xc] sm:$0xf]
        %v3056 = vld [vmem:[%s3051 + $0x10] sm:$0xf]
        %v3057 = vld [vmem:[%s3051 + $0x14] sm:$0xf]
        %v3058 = vld [vmem:[%s3051 + $0x18] sm:$0xf]
        %v3059 = vld [vmem:[%s3051 + $0x1c] sm:$0xf]
        %v3060 = vld [vmem:[%s3051 + $0x20] sm:$0xf]
        %v3061 = vld [vmem:[%s3051 + $0x24] sm:$0xf]
        %v3062 = vld [vmem:[%s3051 + $0x28] sm:$0xf]
        %v3063 = vld [vmem:[%s3051 + $0x2c] sm:$0xf]
        %v3064 = vld [vmem:[%s3051 + $0x30] sm:$0xf]
        %v3065 = vld [vmem:[%s3051 + $0x34] sm:$0xf]
        %v3066 = vld [vmem:[%s3051 + $0x38] sm:$0xf]
        %v3067 = vld [vmem:[%s3051 + $0x3c] sm:$0xf]
        %v3068 = vld [vmem:[%s3051 + $0x40] sm:$0xf]
        %v3069 = vld [vmem:[%s3051 + $0x44] sm:$0xf]
        %v3070 = vld [vmem:[%s3051 + $0x48] sm:$0xf]
        %v3071 = vld [vmem:[%s3051 + $0x4c] sm:$0xf]
        %v3072 = vld [vmem:[%s3051 + $0x50] sm:$0xf]
        %v3073 = vld [vmem:[%s3051 + $0x54] sm:$0xf]
        %v3074 = vld [vmem:[%s3051 + $0x58] sm:$0xf]
        %v3075 = vld [vmem:[%s3051 + $0x5c] sm:$0xf]
        %v3076 = vld [vmem:[%s3051 + $0x60] sm:$0xf]
        %v3077 = vld [vmem:[%s3051 + $0x64] sm:$0xf]
        %v3078 = vld [vmem:[%s3051 + $0x68] sm:$0xf]
        %v3079 = vld [vmem:[%s3051 + $0x6c] sm:$0xf]
        %v3080 = vld [vmem:[%s3051 + $0x70] sm:$0xf]
        %v3081 = vld [vmem:[%s3051 + $0x74] sm:$0xf]
        %v3082 = vld [vmem:[%s3051 + $0x78] sm:$0xf]
        %v3083 = vld [vmem:[%s3051 + $0x7c] sm:$0xf]
        %v3084 = vld [vmem:[%s3051 + $0x80] sm:$0xf]
        %v3085 = vld [vmem:[%s3051 + $0x84] sm:$0xf]
        %v3086 = vld [vmem:[%s3051 + $0x88] sm:$0xf]
        %v3087 = vld [vmem:[%s3051 + $0x8c] sm:$0xf]
        %v3088 = vld [vmem:[%s3051 + $0x90] sm:$0xf]
        %v3089 = vld [vmem:[%s3051 + $0x94] sm:$0xf]
        %v3090 = vld [vmem:[%s3051 + $0x98] sm:$0xf]
        %v3091 = vld [vmem:[%s3051 + $0x9c] sm:$0xf]
        %v3092 = vld [vmem:[%s3051 + $0xa0] sm:$0xf]
        %v3093 = vld [vmem:[%s3051 + $0xa4] sm:$0xf]
        %v3094 = vld [vmem:[%s3051 + $0xa8] sm:$0xf]
        %v3095 = vld [vmem:[%s3051 + $0xac] sm:$0xf]
        %v3096 = vld [vmem:[%s3051 + $0xb0] sm:$0xf]
        %v3097 = vld [vmem:[%s3051 + $0xb4] sm:$0xf]
        %v3098 = vld [vmem:[%s3051 + $0xb8] sm:$0xf]
        %v3099 = vld [vmem:[%s3051 + $0xbc] sm:$0xf]
        %v3100 = vld [vmem:[%s3051 + $0xc0] sm:$0xf]
        %v3101 = vld [vmem:[%s3051 + $0xc4] sm:$0xf]
        %v3102 = vld [vmem:[%s3051 + $0xc8] sm:$0xf]
        %v3103 = vld [vmem:[%s3051 + $0xcc] sm:$0xf]
        %v3104 = vld [vmem:[%s3051 + $0xd0] sm:$0xf]
        %v3105 = vld [vmem:[%s3051 + $0xd4] sm:$0xf]
        %v3106 = vld [vmem:[%s3051 + $0xd8] sm:$0xf]
        %v3107 = vld [vmem:[%s3051 + $0xdc] sm:$0xf]
        %v3108 = vld [vmem:[%s3051 + $0xe0] sm:$0xf]
        %v3109 = vld [vmem:[%s3051 + $0xe4] sm:$0xf]
        %v3110 = vld [vmem:[%s3051 + $0xe8] sm:$0xf]
        %v3111 = vld [vmem:[%s3051 + $0xec] sm:$0xf]
        %v3112 = vld [vmem:[%s3051 + $0xf0] sm:$0xf]
        %v3113 = vld [vmem:[%s3051 + $0xf4] sm:$0xf]
        %v3114 = vld [vmem:[%s3051 + $0xf8] sm:$0xf]
        %v3115 = vld [vmem:[%s3051 + $0xfc] sm:$0xf]
        %v3116 = vld [vmem:[%s2928 + $0x10] sm:$0xff]
        %v3117 = vld [vmem:[%s2928 + $0x18] sm:$0xff]
        %v3118 = vld [vmem:[%s2928 + $0x50] sm:$0xff]
        %v3119 = vld [vmem:[%s2928 + $0x58] sm:$0xff]
        %v3120 = vld [vmem:[%s2928 + $0x90] sm:$0xff]
        %v3121 = vld [vmem:[%s2928 + $0x98] sm:$0xff]
        %v3122 = vld [vmem:[%s2928 + $0xd0] sm:$0xff]
        %v3123 = vld [vmem:[%s2928 + $0xd8] sm:$0xff]
        %v3124 = vld [vmem:[%s2937 + $0x4] sm:$0xf]
        %v3126 = vperm.slane %v3124, 0
        %v3127 = vperm.slane %v3124, 1
        %v3128 = vperm.slane %v3124, 2
        %v3129 = vperm.slane %v3124, 3
        %v3142 = vunpack.c.l.b16 %v3116
        %v3143 = vunpack.c.h.b16 %v3116
        %v3144 = vunpack.c.l.b16 %v3117
        %v3145 = vunpack.c.h.b16 %v3117
        %v3146 = vunpack.c.l.b16 %v3118
        %v3147 = vunpack.c.h.b16 %v3118
        %v3148 = vunpack.c.l.b16 %v3119
        %v3149 = vunpack.c.h.b16 %v3119
        %v3150 = vunpack.c.l.b16 %v3120
        %v3151 = vunpack.c.h.b16 %v3120
        %v3152 = vunpack.c.l.b16 %v3121
        %v3153 = vunpack.c.h.b16 %v3121
        %v3154 = vunpack.c.l.b16 %v3122
        %v3155 = vunpack.c.h.b16 %v3122
        %v3156 = vunpack.c.l.b16 %v3123
        %v3157 = vunpack.c.h.b16 %v3123
        %v3158 = vpack.c.b16 %v3146, %v3142
        %v3159 = vpack.c.b16 %v3147, %v3143
        %v3160 = vpack.c.b16 %v3148, %v3144
        %v3161 = vpack.c.b16 %v3149, %v3145
        %v3162 = vpack.c.b16 %v3154, %v3150
        %v3163 = vpack.c.b16 %v3155, %v3151
        %v3164 = vpack.c.b16 %v3156, %v3152
        %v3165 = vpack.c.b16 %v3157, %v3153
        %3174 = vmatpush.bf16.msra.mxu0 0
        %3175 = vmatpush.bf16.msra.mxu0 0
        %3176 = vmatpush.bf16.msra.mxu0 0
        %3177 = vmatpush.bf16.msra.mxu0 0
        %3178 = vmatpush.bf16.msra.mxu0 0
        %3179 = vmatpush.bf16.msra.mxu0 0
        %3180 = vmatpush.bf16.msra.mxu0 %v3162
        %3181 = vmatpush.bf16.msra.mxu0 %v3158
        %3182 = vmatmul.bf16.gmra.mxu0 %v2989
        %v3183 = vpop.f32.mrf.mxu0
        %v3184 = vadd.f32 %v3126, %v3183
        %v3185 = vpop.f32.mrf.mxu0
        %3186 = vdwg.mxu0
        %3187 = vmatpush.bf16.msra.mxu0 0
        %3188 = vmatpush.bf16.msra.mxu0 0
        %3189 = vmatpush.bf16.msra.mxu0 0
        %3190 = vmatpush.bf16.msra.mxu0 0
        %3191 = vmatpush.bf16.msra.mxu0 0
        %3192 = vmatpush.bf16.msra.mxu0 0
        %3193 = vmatpush.bf16.msra.mxu0 %v3163
        %3194 = vmatpush.bf16.msra.mxu0 %v3159
        %3195 = vmatmul.bf16.gmra.mxu0 %v2989
        %v3196 = vpop.f32.mrf.mxu0
        %v3197 = vadd.f32 %v3127, %v3196
        %v3198 = vpop.f32.mrf.mxu0
        %3199 = vdwg.mxu0
        %3200 = vmatpush.bf16.msra.mxu0 0
        %3201 = vmatpush.bf16.msra.mxu0 0
        %3202 = vmatpush.bf16.msra.mxu0 0
        %3203 = vmatpush.bf16.msra.mxu0 0
        %3204 = vmatpush.bf16.msra.mxu0 0
        %3205 = vmatpush.bf16.msra.mxu0 0
        %3206 = vmatpush.bf16.msra.mxu0 %v3164
        %3207 = vmatpush.bf16.msra.mxu0 %v3160
        %3208 = vmatmul.bf16.gmra.mxu0 %v2989
        %v3209 = vpop.f32.mrf.mxu0
        %v3210 = vadd.f32 %v3128, %v3209
        %v3211 = vpop.f32.mrf.mxu0
        %3212 = vdwg.mxu0
        %3213 = vmatpush.bf16.msra.mxu0 0
        %3214 = vmatpush.bf16.msra.mxu0 0
        %3215 = vmatpush.bf16.msra.mxu0 0
        %3216 = vmatpush.bf16.msra.mxu0 0
        %3217 = vmatpush.bf16.msra.mxu0 0
        %3218 = vmatpush.bf16.msra.mxu0 0
        %3219 = vmatpush.bf16.msra.mxu0 %v3165
        %3220 = vmatpush.bf16.msra.mxu0 %v3161
        %3221 = vmatmul.bf16.gmra.mxu0 %v2989
        %v3222 = vpop.f32.mrf.mxu0
        %v3223 = vadd.f32 %v3129, %v3222
        %v3224 = vpop.f32.mrf.mxu0
        %3225 = vdwg.mxu0
        %v3226 = vmax.f32 %v3184, 0.0
        %v3227 = vmax.f32 %v3197, 0.0
        %v3228 = vmax.f32 %v3210, 0.0
        %v3229 = vmax.f32 %v3223, 0.0
        %v3230 = vpack.c.bf16 %v3226, %v3226
        %v3231 = vpack.c.bf16 %v3227, %v3227
        %v3232 = vpack.c.bf16 %v3228, %v3228
        %v3233 = vpack.c.bf16 %v3229, %v3229
        %v3234 = vld [vmem:[%s3051 + $0x100] sm:$0xf]
        %v3235 = vld [vmem:[%s3051 + $0x104] sm:$0xf]
        %v3236 = vld [vmem:[%s3051 + $0x108] sm:$0xf]
        %v3237 = vld [vmem:[%s3051 + $0x10c] sm:$0xf]
        %v3238 = vld [vmem:[%s3051 + $0x110] sm:$0xf]
        %v3239 = vld [vmem:[%s3051 + $0x114] sm:$0xf]
        %v3240 = vld [vmem:[%s3051 + $0x118] sm:$0xf]
        %v3241 = vld [vmem:[%s3051 + $0x11c] sm:$0xf]
        %v3242 = vld [vmem:[%s3051 + $0x120] sm:$0xf]
        %v3243 = vld [vmem:[%s3051 + $0x124] sm:$0xf]
        %v3244 = vld [vmem:[%s3051 + $0x128] sm:$0xf]
        %v3245 = vld [vmem:[%s3051 + $0x12c] sm:$0xf]
        %v3246 = vld [vmem:[%s3051 + $0x130] sm:$0xf]
        %v3247 = vld [vmem:[%s3051 + $0x134] sm:$0xf]
        %v3248 = vld [vmem:[%s3051 + $0x138] sm:$0xf]
        %v3249 = vld [vmem:[%s3051 + $0x13c] sm:$0xf]
        %v3250 = vld [vmem:[%s3051 + $0x140] sm:$0xf]
        %v3251 = vld [vmem:[%s3051 + $0x144] sm:$0xf]
        %v3252 = vld [vmem:[%s3051 + $0x148] sm:$0xf]
        %v3253 = vld [vmem:[%s3051 + $0x14c] sm:$0xf]
        %v3254 = vld [vmem:[%s3051 + $0x150] sm:$0xf]
        %v3255 = vld [vmem:[%s3051 + $0x154] sm:$0xf]
        %v3256 = vld [vmem:[%s3051 + $0x158] sm:$0xf]
        %v3257 = vld [vmem:[%s3051 + $0x15c] sm:$0xf]
        %v3258 = vld [vmem:[%s3051 + $0x160] sm:$0xf]
        %v3259 = vld [vmem:[%s3051 + $0x164] sm:$0xf]
        %v3260 = vld [vmem:[%s3051 + $0x168] sm:$0xf]
        %v3261 = vld [vmem:[%s3051 + $0x16c] sm:$0xf]
        %v3262 = vld [vmem:[%s3051 + $0x170] sm:$0xf]
        %v3263 = vld [vmem:[%s3051 + $0x174] sm:$0xf]
        %v3264 = vld [vmem:[%s3051 + $0x178] sm:$0xf]
        %v3265 = vld [vmem:[%s3051 + $0x17c] sm:$0xf]
        %v3266 = vld [vmem:[%s3051 + $0x180] sm:$0xf]
        %v3267 = vld [vmem:[%s3051 + $0x184] sm:$0xf]
        %v3268 = vld [vmem:[%s3051 + $0x188] sm:$0xf]
        %v3269 = vld [vmem:[%s3051 + $0x18c] sm:$0xf]
        %v3270 = vld [vmem:[%s3051 + $0x190] sm:$0xf]
        %v3271 = vld [vmem:[%s3051 + $0x194] sm:$0xf]
        %v3272 = vld [vmem:[%s3051 + $0x198] sm:$0xf]
        %v3273 = vld [vmem:[%s3051 + $0x19c] sm:$0xf]
        %v3274 = vld [vmem:[%s3051 + $0x1a0] sm:$0xf]
        %v3275 = vld [vmem:[%s3051 + $0x1a4] sm:$0xf]
        %v3276 = vld [vmem:[%s3051 + $0x1a8] sm:$0xf]
        %v3277 = vld [vmem:[%s3051 + $0x1ac] sm:$0xf]
        %v3278 = vld [vmem:[%s3051 + $0x1b0] sm:$0xf]
        %v3279 = vld [vmem:[%s3051 + $0x1b4] sm:$0xf]
        %v3280 = vld [vmem:[%s3051 + $0x1b8] sm:$0xf]
        %v3281 = vld [vmem:[%s3051 + $0x1bc] sm:$0xf]
        %v3282 = vld [vmem:[%s3051 + $0x1c0] sm:$0xf]
        %v3283 = vld [vmem:[%s3051 + $0x1c4] sm:$0xf]
        %v3284 = vld [vmem:[%s3051 + $0x1c8] sm:$0xf]
        %v3285 = vld [vmem:[%s3051 + $0x1cc] sm:$0xf]
        %v3286 = vld [vmem:[%s3051 + $0x1d0] sm:$0xf]
        %v3287 = vld [vmem:[%s3051 + $0x1d4] sm:$0xf]
        %v3288 = vld [vmem:[%s3051 + $0x1d8] sm:$0xf]
        %v3289 = vld [vmem:[%s3051 + $0x1dc] sm:$0xf]
        %v3290 = vld [vmem:[%s3051 + $0x1e0] sm:$0xf]
        %v3291 = vld [vmem:[%s3051 + $0x1e4] sm:$0xf]
        %v3292 = vld [vmem:[%s3051 + $0x1e8] sm:$0xf]
        %v3293 = vld [vmem:[%s3051 + $0x1ec] sm:$0xf]
        %v3294 = vld [vmem:[%s3051 + $0x1f0] sm:$0xf]
        %v3295 = vld [vmem:[%s3051 + $0x1f4] sm:$0xf]
        %v3296 = vld [vmem:[%s3051 + $0x1f8] sm:$0xf]
        %v3297 = vld [vmem:[%s3051 + $0x1fc] sm:$0xf]
        %v3362 = vunpack.c.l.b16 %v3234
        %v3363 = vunpack.c.l.b16 %v3235
        %v3364 = vunpack.c.l.b16 %v3236
        %v3365 = vunpack.c.l.b16 %v3237
        %v3366 = vunpack.c.l.b16 %v3238
        %v3367 = vunpack.c.l.b16 %v3239
        %v3368 = vunpack.c.l.b16 %v3240
        %v3369 = vunpack.c.l.b16 %v3241
        %v3370 = vunpack.c.l.b16 %v3242
        %v3371 = vunpack.c.l.b16 %v3243
        %v3372 = vunpack.c.l.b16 %v3244
        %v3373 = vunpack.c.l.b16 %v3245
        %v3374 = vunpack.c.l.b16 %v3246
        %v3375 = vunpack.c.l.b16 %v3247
        %v3376 = vunpack.c.l.b16 %v3248
        %v3377 = vunpack.c.l.b16 %v3249
        %v3378 = vunpack.c.l.b16 %v3250
        %v3379 = vunpack.c.l.b16 %v3251
        %v3380 = vunpack.c.l.b16 %v3252
        %v3381 = vunpack.c.l.b16 %v3253
        %v3382 = vunpack.c.l.b16 %v3254
        %v3383 = vunpack.c.l.b16 %v3255
        %v3384 = vunpack.c.l.b16 %v3256
        %v3385 = vunpack.c.l.b16 %v3257
        %v3386 = vunpack.c.l.b16 %v3258
        %v3387 = vunpack.c.l.b16 %v3259
        %v3388 = vunpack.c.l.b16 %v3260
        %v3389 = vunpack.c.l.b16 %v3261
        %v3390 = vunpack.c.l.b16 %v3262
        %v3391 = vunpack.c.l.b16 %v3263
        %v3392 = vunpack.c.l.b16 %v3264
        %v3393 = vunpack.c.l.b16 %v3265
        %v3394 = vunpack.c.l.b16 %v3266
        %v3395 = vunpack.c.l.b16 %v3267
        %v3396 = vunpack.c.l.b16 %v3268
        %v3397 = vunpack.c.l.b16 %v3269
        %v3398 = vunpack.c.l.b16 %v3270
        %v3399 = vunpack.c.l.b16 %v3271
        %v3400 = vunpack.c.l.b16 %v3272
        %v3401 = vunpack.c.l.b16 %v3273
        %v3402 = vunpack.c.l.b16 %v3274
        %v3403 = vunpack.c.l.b16 %v3275
        %v3404 = vunpack.c.l.b16 %v3276
        %v3405 = vunpack.c.l.b16 %v3277
        %v3406 = vunpack.c.l.b16 %v3278
        %v3407 = vunpack.c.l.b16 %v3279
        %v3408 = vunpack.c.l.b16 %v3280
        %v3409 = vunpack.c.l.b16 %v3281
        %v3410 = vunpack.c.l.b16 %v3282
        %v3411 = vunpack.c.l.b16 %v3283
        %v3412 = vunpack.c.l.b16 %v3284
        %v3413 = vunpack.c.l.b16 %v3285
        %v3414 = vunpack.c.l.b16 %v3286
        %v3415 = vunpack.c.l.b16 %v3287
        %v3416 = vunpack.c.l.b16 %v3288
        %v3417 = vunpack.c.l.b16 %v3289
        %v3418 = vunpack.c.l.b16 %v3290
        %v3419 = vunpack.c.l.b16 %v3291
        %v3420 = vunpack.c.l.b16 %v3292
        %v3421 = vunpack.c.l.b16 %v3293
        %v3422 = vunpack.c.l.b16 %v3294
        %v3423 = vunpack.c.l.b16 %v3295
        %v3424 = vunpack.c.l.b16 %v3296
        %v3425 = vunpack.c.l.b16 %v3297
        %v3426 = vpack.c.b16 %v3363, %v3362
        %v3427 = vpack.c.b16 %v3365, %v3364
        %v3428 = vpack.c.b16 %v3367, %v3366
        %v3429 = vpack.c.b16 %v3369, %v3368
        %v3430 = vpack.c.b16 %v3371, %v3370
        %v3431 = vpack.c.b16 %v3373, %v3372
        %v3432 = vpack.c.b16 %v3375, %v3374
        %v3433 = vpack.c.b16 %v3377, %v3376
        %v3434 = vpack.c.b16 %v3379, %v3378
        %v3435 = vpack.c.b16 %v3381, %v3380
        %v3436 = vpack.c.b16 %v3383, %v3382
        %v3437 = vpack.c.b16 %v3385, %v3384
        %v3438 = vpack.c.b16 %v3387, %v3386
        %v3439 = vpack.c.b16 %v3389, %v3388
        %v3440 = vpack.c.b16 %v3391, %v3390
        %v3441 = vpack.c.b16 %v3393, %v3392
        %v3442 = vpack.c.b16 %v3395, %v3394
        %v3443 = vpack.c.b16 %v3397, %v3396
        %v3444 = vpack.c.b16 %v3399, %v3398
        %v3445 = vpack.c.b16 %v3401, %v3400
        %v3446 = vpack.c.b16 %v3403, %v3402
        %v3447 = vpack.c.b16 %v3405, %v3404
        %v3448 = vpack.c.b16 %v3407, %v3406
        %v3449 = vpack.c.b16 %v3409, %v3408
        %v3450 = vpack.c.b16 %v3411, %v3410
        %v3451 = vpack.c.b16 %v3413, %v3412
        %v3452 = vpack.c.b16 %v3415, %v3414
        %v3453 = vpack.c.b16 %v3417, %v3416
        %v3454 = vpack.c.b16 %v3419, %v3418
        %v3455 = vpack.c.b16 %v3421, %v3420
        %v3456 = vpack.c.b16 %v3423, %v3422
        %v3457 = vpack.c.b16 %v3425, %v3424
        %3490 = vmatpush.bf16.msra.mxu0 %v3433
        %3491 = vmatpush.bf16.msra.mxu0 %v3432
        %3492 = vmatpush.bf16.msra.mxu0 %v3431
        %3493 = vmatpush.bf16.msra.mxu0 %v3430
        %3494 = vmatpush.bf16.msra.mxu0 %v3429
        %3495 = vmatpush.bf16.msra.mxu0 %v3428
        %3496 = vmatpush.bf16.msra.mxu0 %v3427
        %3497 = vmatpush.bf16.msra.mxu0 %v3426
        %3498 = vmatmul.bf16.gmra.mxu0 %v3230
        %v3499 = vpop.f32.mrf.mxu0
        %v3500 = vadd.f32 0.0, %v3499
        %v3501 = vpop.f32.mrf.mxu0
        %3502 = vdwg.mxu0
        %3503 = vmatpush.bf16.msra.mxu0 %v3441
        %3504 = vmatpush.bf16.msra.mxu0 %v3440
        %3505 = vmatpush.bf16.msra.mxu0 %v3439
        %3506 = vmatpush.bf16.msra.mxu0 %v3438
        %3507 = vmatpush.bf16.msra.mxu0 %v3437
        %3508 = vmatpush.bf16.msra.mxu0 %v3436
        %3509 = vmatpush.bf16.msra.mxu0 %v3435
        %3510 = vmatpush.bf16.msra.mxu0 %v3434
        %3511 = vmatmul.bf16.gmra.mxu0 %v3231
        %v3512 = vpop.f32.mrf.mxu0
        %v3513 = vadd.f32 %v3500, %v3512
        %v3514 = vpop.f32.mrf.mxu0
        %3515 = vdwg.mxu0
        %3516 = vmatpush.bf16.msra.mxu0 %v3449
        %3517 = vmatpush.bf16.msra.mxu0 %v3448
        %3518 = vmatpush.bf16.msra.mxu0 %v3447
        %3519 = vmatpush.bf16.msra.mxu0 %v3446
        %3520 = vmatpush.bf16.msra.mxu0 %v3445
        %3521 = vmatpush.bf16.msra.mxu0 %v3444
        %3522 = vmatpush.bf16.msra.mxu0 %v3443
        %3523 = vmatpush.bf16.msra.mxu0 %v3442
        %3524 = vmatmul.bf16.gmra.mxu0 %v3232
        %v3525 = vpop.f32.mrf.mxu0
        %v3526 = vadd.f32 %v3513, %v3525
        %v3527 = vpop.f32.mrf.mxu0
        %3528 = vdwg.mxu0
        %3529 = vmatpush.bf16.msra.mxu0 %v3457
        %3530 = vmatpush.bf16.msra.mxu0 %v3456
        %3531 = vmatpush.bf16.msra.mxu0 %v3455
        %3532 = vmatpush.bf16.msra.mxu0 %v3454
        %3533 = vmatpush.bf16.msra.mxu0 %v3453
        %3534 = vmatpush.bf16.msra.mxu0 %v3452
        %3535 = vmatpush.bf16.msra.mxu0 %v3451
        %3536 = vmatpush.bf16.msra.mxu0 %v3450
        %3537 = vmatmul.bf16.gmra.mxu0 %v3233
        %v3538 = vpop.f32.mrf.mxu0
        %v3539 = vadd.f32 %v3526, %v3538
        %v3540 = vpop.f32.mrf.mxu0
        %3541 = vdwg.mxu0
        %v3606 = vunpack.c.l.b16 %v3052
        %v3607 = vunpack.c.l.b16 %v3053
        %v3608 = vunpack.c.l.b16 %v3054
        %v3609 = vunpack.c.l.b16 %v3055
        %v3610 = vunpack.c.l.b16 %v3056
        %v3611 = vunpack.c.l.b16 %v3057
        %v3612 = vunpack.c.l.b16 %v3058
        %v3613 = vunpack.c.l.b16 %v3059
        %v3614 = vunpack.c.l.b16 %v3060
        %v3615 = vunpack.c.l.b16 %v3061
        %v3616 = vunpack.c.l.b16 %v3062
        %v3617 = vunpack.c.l.b16 %v3063
        %v3618 = vunpack.c.l.b16 %v3064
        %v3619 = vunpack.c.l.b16 %v3065
        %v3620 = vunpack.c.l.b16 %v3066
        %v3621 = vunpack.c.l.b16 %v3067
        %v3622 = vunpack.c.l.b16 %v3068
        %v3623 = vunpack.c.l.b16 %v3069
        %v3624 = vunpack.c.l.b16 %v3070
        %v3625 = vunpack.c.l.b16 %v3071
        %v3626 = vunpack.c.l.b16 %v3072
        %v3627 = vunpack.c.l.b16 %v3073
        %v3628 = vunpack.c.l.b16 %v3074
        %v3629 = vunpack.c.l.b16 %v3075
        %v3630 = vunpack.c.l.b16 %v3076
        %v3631 = vunpack.c.l.b16 %v3077
        %v3632 = vunpack.c.l.b16 %v3078
        %v3633 = vunpack.c.l.b16 %v3079
        %v3634 = vunpack.c.l.b16 %v3080
        %v3635 = vunpack.c.l.b16 %v3081
        %v3636 = vunpack.c.l.b16 %v3082
        %v3637 = vunpack.c.l.b16 %v3083
        %v3638 = vunpack.c.l.b16 %v3084
        %v3639 = vunpack.c.l.b16 %v3085
        %v3640 = vunpack.c.l.b16 %v3086
        %v3641 = vunpack.c.l.b16 %v3087
        %v3642 = vunpack.c.l.b16 %v3088
        %v3643 = vunpack.c.l.b16 %v3089
        %v3644 = vunpack.c.l.b16 %v3090
        %v3645 = vunpack.c.l.b16 %v3091
        %v3646 = vunpack.c.l.b16 %v3092
        %v3647 = vunpack.c.l.b16 %v3093
        %v3648 = vunpack.c.l.b16 %v3094
        %v3649 = vunpack.c.l.b16 %v3095
        %v3650 = vunpack.c.l.b16 %v3096
        %v3651 = vunpack.c.l.b16 %v3097
        %v3652 = vunpack.c.l.b16 %v3098
        %v3653 = vunpack.c.l.b16 %v3099
        %v3654 = vunpack.c.l.b16 %v3100
        %v3655 = vunpack.c.l.b16 %v3101
        %v3656 = vunpack.c.l.b16 %v3102
        %v3657 = vunpack.c.l.b16 %v3103
        %v3658 = vunpack.c.l.b16 %v3104
        %v3659 = vunpack.c.l.b16 %v3105
        %v3660 = vunpack.c.l.b16 %v3106
        %v3661 = vunpack.c.l.b16 %v3107
        %v3662 = vunpack.c.l.b16 %v3108
        %v3663 = vunpack.c.l.b16 %v3109
        %v3664 = vunpack.c.l.b16 %v3110
        %v3665 = vunpack.c.l.b16 %v3111
        %v3666 = vunpack.c.l.b16 %v3112
        %v3667 = vunpack.c.l.b16 %v3113
        %v3668 = vunpack.c.l.b16 %v3114
        %v3669 = vunpack.c.l.b16 %v3115
        %v3670 = vpack.c.b16 %v3607, %v3606
        %v3671 = vpack.c.b16 %v3609, %v3608
        %v3672 = vpack.c.b16 %v3611, %v3610
        %v3673 = vpack.c.b16 %v3613, %v3612
        %v3674 = vpack.c.b16 %v3615, %v3614
        %v3675 = vpack.c.b16 %v3617, %v3616
        %v3676 = vpack.c.b16 %v3619, %v3618
        %v3677 = vpack.c.b16 %v3621, %v3620
        %v3678 = vpack.c.b16 %v3623, %v3622
        %v3679 = vpack.c.b16 %v3625, %v3624
        %v3680 = vpack.c.b16 %v3627, %v3626
        %v3681 = vpack.c.b16 %v3629, %v3628
        %v3682 = vpack.c.b16 %v3631, %v3630
        %v3683 = vpack.c.b16 %v3633, %v3632
        %v3684 = vpack.c.b16 %v3635, %v3634
        %v3685 = vpack.c.b16 %v3637, %v3636
        %v3686 = vpack.c.b16 %v3639, %v3638
        %v3687 = vpack.c.b16 %v3641, %v3640
        %v3688 = vpack.c.b16 %v3643, %v3642
        %v3689 = vpack.c.b16 %v3645, %v3644
        %v3690 = vpack.c.b16 %v3647, %v3646
        %v3691 = vpack.c.b16 %v3649, %v3648
        %v3692 = vpack.c.b16 %v3651, %v3650
        %v3693 = vpack.c.b16 %v3653, %v3652
        %v3694 = vpack.c.b16 %v3655, %v3654
        %v3695 = vpack.c.b16 %v3657, %v3656
        %v3696 = vpack.c.b16 %v3659, %v3658
        %v3697 = vpack.c.b16 %v3661, %v3660
        %v3698 = vpack.c.b16 %v3663, %v3662
        %v3699 = vpack.c.b16 %v3665, %v3664
        %v3700 = vpack.c.b16 %v3667, %v3666
        %v3701 = vpack.c.b16 %v3669, %v3668
        %3734 = vmatpush.bf16.msra.mxu0 %v3677
        %3735 = vmatpush.bf16.msra.mxu0 %v3676
        %3736 = vmatpush.bf16.msra.mxu0 %v3675
        %3737 = vmatpush.bf16.msra.mxu0 %v3674
        %3738 = vmatpush.bf16.msra.mxu0 %v3673
        %3739 = vmatpush.bf16.msra.mxu0 %v3672
        %3740 = vmatpush.bf16.msra.mxu0 %v3671
        %3741 = vmatpush.bf16.msra.mxu0 %v3670
        %3742 = vmatmul.bf16.gmra.mxu0 %v3047
        %v3743 = vpop.f32.mrf.mxu0
        %v3744 = vadd.f32 %v3539, %v3743
        %v3745 = vpop.f32.mrf.mxu0
        %3746 = vdwg.mxu0
        %3747 = vmatpush.bf16.msra.mxu0 %v3685
        %3748 = vmatpush.bf16.msra.mxu0 %v3684
        %3749 = vmatpush.bf16.msra.mxu0 %v3683
        %3750 = vmatpush.bf16.msra.mxu0 %v3682
        %3751 = vmatpush.bf16.msra.mxu0 %v3681
        %3752 = vmatpush.bf16.msra.mxu0 %v3680
        %3753 = vmatpush.bf16.msra.mxu0 %v3679
        %3754 = vmatpush.bf16.msra.mxu0 %v3678
        %3755 = vmatmul.bf16.gmra.mxu0 %v3048
        %v3756 = vpop.f32.mrf.mxu0
        %v3757 = vadd.f32 %v3744, %v3756
        %v3758 = vpop.f32.mrf.mxu0
        %3759 = vdwg.mxu0
        %3760 = vmatpush.bf16.msra.mxu0 %v3693
        %3761 = vmatpush.bf16.msra.mxu0 %v3692
        %3762 = vmatpush.bf16.msra.mxu0 %v3691
        %3763 = vmatpush.bf16.msra.mxu0 %v3690
        %3764 = vmatpush.bf16.msra.mxu0 %v3689
        %3765 = vmatpush.bf16.msra.mxu0 %v3688
        %3766 = vmatpush.bf16.msra.mxu0 %v3687
        %3767 = vmatpush.bf16.msra.mxu0 %v3686
        %3768 = vmatmul.bf16.gmra.mxu0 %v3049
        %v3769 = vpop.f32.mrf.mxu0
        %v3770 = vadd.f32 %v3757, %v3769
        %v3771 = vpop.f32.mrf.mxu0
        %3772 = vdwg.mxu0
        %3773 = vmatpush.bf16.msra.mxu0 %v3701
        %3774 = vmatpush.bf16.msra.mxu0 %v3700
        %3775 = vmatpush.bf16.msra.mxu0 %v3699
        %3776 = vmatpush.bf16.msra.mxu0 %v3698
        %3777 = vmatpush.bf16.msra.mxu0 %v3697
        %3778 = vmatpush.bf16.msra.mxu0 %v3696
        %3779 = vmatpush.bf16.msra.mxu0 %v3695
        %3780 = vmatpush.bf16.msra.mxu0 %v3694
        %3781 = vmatmul.bf16.gmra.mxu0 %v3050
        %v3782 = vpop.f32.mrf.mxu0
        %v3783 = vadd.f32 %v3770, %v3782
        %v3784 = vpop.f32.mrf.mxu0
        %3785 = vdwg.mxu0
        %v3786 = vld [vmem:[%s2928 + $0x20] sm:$0xff]
        %v3787 = vld [vmem:[%s2928 + $0x28] sm:$0xff]
        %v3788 = vld [vmem:[%s2928 + $0x60] sm:$0xff]
        %v3789 = vld [vmem:[%s2928 + $0x68] sm:$0xff]
        %v3790 = vld [vmem:[%s2928 + $0xa0] sm:$0xff]
        %v3791 = vld [vmem:[%s2928 + $0xa8] sm:$0xff]
        %v3792 = vld [vmem:[%s2928 + $0xe0] sm:$0xff]
        %v3793 = vld [vmem:[%s2928 + $0xe8] sm:$0xff]
        %v3794 = vld [vmem:[%s2937 + $0x8] sm:$0xf]
        %v3796 = vperm.slane %v3794, 0
        %v3797 = vperm.slane %v3794, 1
        %v3798 = vperm.slane %v3794, 2
        %v3799 = vperm.slane %v3794, 3
        %v3812 = vunpack.c.l.b16 %v3786
        %v3813 = vunpack.c.h.b16 %v3786
        %v3814 = vunpack.c.l.b16 %v3787
        %v3815 = vunpack.c.h.b16 %v3787
        %v3816 = vunpack.c.l.b16 %v3788
        %v3817 = vunpack.c.h.b16 %v3788
        %v3818 = vunpack.c.l.b16 %v3789
        %v3819 = vunpack.c.h.b16 %v3789
        %v3820 = vunpack.c.l.b16 %v3790
        %v3821 = vunpack.c.h.b16 %v3790
        %v3822 = vunpack.c.l.b16 %v3791
        %v3823 = vunpack.c.h.b16 %v3791
        %v3824 = vunpack.c.l.b16 %v3792
        %v3825 = vunpack.c.h.b16 %v3792
        %v3826 = vunpack.c.l.b16 %v3793
        %v3827 = vunpack.c.h.b16 %v3793
        %v3828 = vpack.c.b16 %v3816, %v3812
        %v3829 = vpack.c.b16 %v3817, %v3813
        %v3830 = vpack.c.b16 %v3818, %v3814
        %v3831 = vpack.c.b16 %v3819, %v3815
        %v3832 = vpack.c.b16 %v3824, %v3820
        %v3833 = vpack.c.b16 %v3825, %v3821
        %v3834 = vpack.c.b16 %v3826, %v3822
        %v3835 = vpack.c.b16 %v3827, %v3823
        %3844 = vmatpush.bf16.msra.mxu0 0
        %3845 = vmatpush.bf16.msra.mxu0 0
        %3846 = vmatpush.bf16.msra.mxu0 0
        %3847 = vmatpush.bf16.msra.mxu0 0
        %3848 = vmatpush.bf16.msra.mxu0 0
        %3849 = vmatpush.bf16.msra.mxu0 0
        %3850 = vmatpush.bf16.msra.mxu0 %v3832
        %3851 = vmatpush.bf16.msra.mxu0 %v3828
        %3852 = vmatmul.bf16.gmra.mxu0 %v2989
        %v3853 = vpop.f32.mrf.mxu0
        %v3854 = vadd.f32 %v3796, %v3853
        %v3855 = vpop.f32.mrf.mxu0
        %3856 = vdwg.mxu0
        %3857 = vmatpush.bf16.msra.mxu0 0
        %3858 = vmatpush.bf16.msra.mxu0 0
        %3859 = vmatpush.bf16.msra.mxu0 0
        %3860 = vmatpush.bf16.msra.mxu0 0
        %3861 = vmatpush.bf16.msra.mxu0 0
        %3862 = vmatpush.bf16.msra.mxu0 0
        %3863 = vmatpush.bf16.msra.mxu0 %v3833
        %3864 = vmatpush.bf16.msra.mxu0 %v3829
        %3865 = vmatmul.bf16.gmra.mxu0 %v2989
        %v3866 = vpop.f32.mrf.mxu0
        %v3867 = vadd.f32 %v3797, %v3866
        %v3868 = vpop.f32.mrf.mxu0
        %3869 = vdwg.mxu0
        %3870 = vmatpush.bf16.msra.mxu0 0
        %3871 = vmatpush.bf16.msra.mxu0 0
        %3872 = vmatpush.bf16.msra.mxu0 0
        %3873 = vmatpush.bf16.msra.mxu0 0
        %3874 = vmatpush.bf16.msra.mxu0 0
        %3875 = vmatpush.bf16.msra.mxu0 0
        %3876 = vmatpush.bf16.msra.mxu0 %v3834
        %3877 = vmatpush.bf16.msra.mxu0 %v3830
        %3878 = vmatmul.bf16.gmra.mxu0 %v2989
        %v3879 = vpop.f32.mrf.mxu0
        %v3880 = vadd.f32 %v3798, %v3879
        %v3881 = vpop.f32.mrf.mxu0
        %3882 = vdwg.mxu0
        %3883 = vmatpush.bf16.msra.mxu0 0
        %3884 = vmatpush.bf16.msra.mxu0 0
        %3885 = vmatpush.bf16.msra.mxu0 0
        %3886 = vmatpush.bf16.msra.mxu0 0
        %3887 = vmatpush.bf16.msra.mxu0 0
        %3888 = vmatpush.bf16.msra.mxu0 0
        %3889 = vmatpush.bf16.msra.mxu0 %v3835
        %3890 = vmatpush.bf16.msra.mxu0 %v3831
        %3891 = vmatmul.bf16.gmra.mxu0 %v2989
        %v3892 = vpop.f32.mrf.mxu0
        %v3893 = vadd.f32 %v3799, %v3892
        %v3894 = vpop.f32.mrf.mxu0
        %3895 = vdwg.mxu0
        %v3896 = vmax.f32 %v3854, 0.0
        %v3897 = vmax.f32 %v3867, 0.0
        %v3898 = vmax.f32 %v3880, 0.0
        %v3899 = vmax.f32 %v3893, 0.0
        %v3900 = vpack.c.bf16 %v3896, %v3896
        %v3901 = vpack.c.bf16 %v3897, %v3897
        %v3902 = vpack.c.bf16 %v3898, %v3898
        %v3903 = vpack.c.bf16 %v3899, %v3899
        %v3904 = vld [vmem:[%s3051 + $0x200] sm:$0xf]
        %v3905 = vld [vmem:[%s3051 + $0x204] sm:$0xf]
        %v3906 = vld [vmem:[%s3051 + $0x208] sm:$0xf]
        %v3907 = vld [vmem:[%s3051 + $0x20c] sm:$0xf]
        %v3908 = vld [vmem:[%s3051 + $0x210] sm:$0xf]
        %v3909 = vld [vmem:[%s3051 + $0x214] sm:$0xf]
        %v3910 = vld [vmem:[%s3051 + $0x218] sm:$0xf]
        %v3911 = vld [vmem:[%s3051 + $0x21c] sm:$0xf]
        %v3912 = vld [vmem:[%s3051 + $0x220] sm:$0xf]
        %v3913 = vld [vmem:[%s3051 + $0x224] sm:$0xf]
        %v3914 = vld [vmem:[%s3051 + $0x228] sm:$0xf]
        %v3915 = vld [vmem:[%s3051 + $0x22c] sm:$0xf]
        %v3916 = vld [vmem:[%s3051 + $0x230] sm:$0xf]
        %v3917 = vld [vmem:[%s3051 + $0x234] sm:$0xf]
        %v3918 = vld [vmem:[%s3051 + $0x238] sm:$0xf]
        %v3919 = vld [vmem:[%s3051 + $0x23c] sm:$0xf]
        %v3920 = vld [vmem:[%s3051 + $0x240] sm:$0xf]
        %v3921 = vld [vmem:[%s3051 + $0x244] sm:$0xf]
        %v3922 = vld [vmem:[%s3051 + $0x248] sm:$0xf]
        %v3923 = vld [vmem:[%s3051 + $0x24c] sm:$0xf]
        %v3924 = vld [vmem:[%s3051 + $0x250] sm:$0xf]
        %v3925 = vld [vmem:[%s3051 + $0x254] sm:$0xf]
        %v3926 = vld [vmem:[%s3051 + $0x258] sm:$0xf]
        %v3927 = vld [vmem:[%s3051 + $0x25c] sm:$0xf]
        %v3928 = vld [vmem:[%s3051 + $0x260] sm:$0xf]
        %v3929 = vld [vmem:[%s3051 + $0x264] sm:$0xf]
        %v3930 = vld [vmem:[%s3051 + $0x268] sm:$0xf]
        %v3931 = vld [vmem:[%s3051 + $0x26c] sm:$0xf]
        %v3932 = vld [vmem:[%s3051 + $0x270] sm:$0xf]
        %v3933 = vld [vmem:[%s3051 + $0x274] sm:$0xf]
        %v3934 = vld [vmem:[%s3051 + $0x278] sm:$0xf]
        %v3935 = vld [vmem:[%s3051 + $0x27c] sm:$0xf]
        %v3936 = vld [vmem:[%s3051 + $0x280] sm:$0xf]
        %v3937 = vld [vmem:[%s3051 + $0x284] sm:$0xf]
        %v3938 = vld [vmem:[%s3051 + $0x288] sm:$0xf]
        %v3939 = vld [vmem:[%s3051 + $0x28c] sm:$0xf]
        %v3940 = vld [vmem:[%s3051 + $0x290] sm:$0xf]
        %v3941 = vld [vmem:[%s3051 + $0x294] sm:$0xf]
        %v3942 = vld [vmem:[%s3051 + $0x298] sm:$0xf]
        %v3943 = vld [vmem:[%s3051 + $0x29c] sm:$0xf]
        %v3944 = vld [vmem:[%s3051 + $0x2a0] sm:$0xf]
        %v3945 = vld [vmem:[%s3051 + $0x2a4] sm:$0xf]
        %v3946 = vld [vmem:[%s3051 + $0x2a8] sm:$0xf]
        %v3947 = vld [vmem:[%s3051 + $0x2ac] sm:$0xf]
        %v3948 = vld [vmem:[%s3051 + $0x2b0] sm:$0xf]
        %v3949 = vld [vmem:[%s3051 + $0x2b4] sm:$0xf]
        %v3950 = vld [vmem:[%s3051 + $0x2b8] sm:$0xf]
        %v3951 = vld [vmem:[%s3051 + $0x2bc] sm:$0xf]
        %v3952 = vld [vmem:[%s3051 + $0x2c0] sm:$0xf]
        %v3953 = vld [vmem:[%s3051 + $0x2c4] sm:$0xf]
        %v3954 = vld [vmem:[%s3051 + $0x2c8] sm:$0xf]
        %v3955 = vld [vmem:[%s3051 + $0x2cc] sm:$0xf]
        %v3956 = vld [vmem:[%s3051 + $0x2d0] sm:$0xf]
        %v3957 = vld [vmem:[%s3051 + $0x2d4] sm:$0xf]
        %v3958 = vld [vmem:[%s3051 + $0x2d8] sm:$0xf]
        %v3959 = vld [vmem:[%s3051 + $0x2dc] sm:$0xf]
        %v3960 = vld [vmem:[%s3051 + $0x2e0] sm:$0xf]
        %v3961 = vld [vmem:[%s3051 + $0x2e4] sm:$0xf]
        %v3962 = vld [vmem:[%s3051 + $0x2e8] sm:$0xf]
        %v3963 = vld [vmem:[%s3051 + $0x2ec] sm:$0xf]
        %v3964 = vld [vmem:[%s3051 + $0x2f0] sm:$0xf]
        %v3965 = vld [vmem:[%s3051 + $0x2f4] sm:$0xf]
        %v3966 = vld [vmem:[%s3051 + $0x2f8] sm:$0xf]
        %v3967 = vld [vmem:[%s3051 + $0x2fc] sm:$0xf]
        %v4032 = vunpack.c.l.b16 %v3904
        %v4033 = vunpack.c.l.b16 %v3905
        %v4034 = vunpack.c.l.b16 %v3906
        %v4035 = vunpack.c.l.b16 %v3907
        %v4036 = vunpack.c.l.b16 %v3908
        %v4037 = vunpack.c.l.b16 %v3909
        %v4038 = vunpack.c.l.b16 %v3910
        %v4039 = vunpack.c.l.b16 %v3911
        %v4040 = vunpack.c.l.b16 %v3912
        %v4041 = vunpack.c.l.b16 %v3913
        %v4042 = vunpack.c.l.b16 %v3914
        %v4043 = vunpack.c.l.b16 %v3915
        %v4044 = vunpack.c.l.b16 %v3916
        %v4045 = vunpack.c.l.b16 %v3917
        %v4046 = vunpack.c.l.b16 %v3918
        %v4047 = vunpack.c.l.b16 %v3919
        %v4048 = vunpack.c.l.b16 %v3920
        %v4049 = vunpack.c.l.b16 %v3921
        %v4050 = vunpack.c.l.b16 %v3922
        %v4051 = vunpack.c.l.b16 %v3923
        %v4052 = vunpack.c.l.b16 %v3924
        %v4053 = vunpack.c.l.b16 %v3925
        %v4054 = vunpack.c.l.b16 %v3926
        %v4055 = vunpack.c.l.b16 %v3927
        %v4056 = vunpack.c.l.b16 %v3928
        %v4057 = vunpack.c.l.b16 %v3929
        %v4058 = vunpack.c.l.b16 %v3930
        %v4059 = vunpack.c.l.b16 %v3931
        %v4060 = vunpack.c.l.b16 %v3932
        %v4061 = vunpack.c.l.b16 %v3933
        %v4062 = vunpack.c.l.b16 %v3934
        %v4063 = vunpack.c.l.b16 %v3935
        %v4064 = vunpack.c.l.b16 %v3936
        %v4065 = vunpack.c.l.b16 %v3937
        %v4066 = vunpack.c.l.b16 %v3938
        %v4067 = vunpack.c.l.b16 %v3939
        %v4068 = vunpack.c.l.b16 %v3940
        %v4069 = vunpack.c.l.b16 %v3941
        %v4070 = vunpack.c.l.b16 %v3942
        %v4071 = vunpack.c.l.b16 %v3943
        %v4072 = vunpack.c.l.b16 %v3944
        %v4073 = vunpack.c.l.b16 %v3945
        %v4074 = vunpack.c.l.b16 %v3946
        %v4075 = vunpack.c.l.b16 %v3947
        %v4076 = vunpack.c.l.b16 %v3948
        %v4077 = vunpack.c.l.b16 %v3949
        %v4078 = vunpack.c.l.b16 %v3950
        %v4079 = vunpack.c.l.b16 %v3951
        %v4080 = vunpack.c.l.b16 %v3952
        %v4081 = vunpack.c.l.b16 %v3953
        %v4082 = vunpack.c.l.b16 %v3954
        %v4083 = vunpack.c.l.b16 %v3955
        %v4084 = vunpack.c.l.b16 %v3956
        %v4085 = vunpack.c.l.b16 %v3957
        %v4086 = vunpack.c.l.b16 %v3958
        %v4087 = vunpack.c.l.b16 %v3959
        %v4088 = vunpack.c.l.b16 %v3960
        %v4089 = vunpack.c.l.b16 %v3961
        %v4090 = vunpack.c.l.b16 %v3962
        %v4091 = vunpack.c.l.b16 %v3963
        %v4092 = vunpack.c.l.b16 %v3964
        %v4093 = vunpack.c.l.b16 %v3965
        %v4094 = vunpack.c.l.b16 %v3966
        %v4095 = vunpack.c.l.b16 %v3967
        %v4096 = vpack.c.b16 %v4033, %v4032
        %v4097 = vpack.c.b16 %v4035, %v4034
        %v4098 = vpack.c.b16 %v4037, %v4036
        %v4099 = vpack.c.b16 %v4039, %v4038
        %v4100 = vpack.c.b16 %v4041, %v4040
        %v4101 = vpack.c.b16 %v4043, %v4042
        %v4102 = vpack.c.b16 %v4045, %v4044
        %v4103 = vpack.c.b16 %v4047, %v4046
        %v4104 = vpack.c.b16 %v4049, %v4048
        %v4105 = vpack.c.b16 %v4051, %v4050
        %v4106 = vpack.c.b16 %v4053, %v4052
        %v4107 = vpack.c.b16 %v4055, %v4054
        %v4108 = vpack.c.b16 %v4057, %v4056
        %v4109 = vpack.c.b16 %v4059, %v4058
        %v4110 = vpack.c.b16 %v4061, %v4060
        %v4111 = vpack.c.b16 %v4063, %v4062
        %v4112 = vpack.c.b16 %v4065, %v4064
        %v4113 = vpack.c.b16 %v4067, %v4066
        %v4114 = vpack.c.b16 %v4069, %v4068
        %v4115 = vpack.c.b16 %v4071, %v4070
        %v4116 = vpack.c.b16 %v4073, %v4072
        %v4117 = vpack.c.b16 %v4075, %v4074
        %v4118 = vpack.c.b16 %v4077, %v4076
        %v4119 = vpack.c.b16 %v4079, %v4078
        %v4120 = vpack.c.b16 %v4081, %v4080
        %v4121 = vpack.c.b16 %v4083, %v4082
        %v4122 = vpack.c.b16 %v4085, %v4084
        %v4123 = vpack.c.b16 %v4087, %v4086
        %v4124 = vpack.c.b16 %v4089, %v4088
        %v4125 = vpack.c.b16 %v4091, %v4090
        %v4126 = vpack.c.b16 %v4093, %v4092
        %v4127 = vpack.c.b16 %v4095, %v4094
        %4160 = vmatpush.bf16.msra.mxu0 %v4103
        %4161 = vmatpush.bf16.msra.mxu0 %v4102
        %4162 = vmatpush.bf16.msra.mxu0 %v4101
        %4163 = vmatpush.bf16.msra.mxu0 %v4100
        %4164 = vmatpush.bf16.msra.mxu0 %v4099
        %4165 = vmatpush.bf16.msra.mxu0 %v4098
        %4166 = vmatpush.bf16.msra.mxu0 %v4097
        %4167 = vmatpush.bf16.msra.mxu0 %v4096
        %4168 = vmatmul.bf16.gmra.mxu0 %v3900
        %v4169 = vpop.f32.mrf.mxu0
        %v4170 = vadd.f32 0.0, %v4169
        %v4171 = vpop.f32.mrf.mxu0
        %4172 = vdwg.mxu0
        %4173 = vmatpush.bf16.msra.mxu0 %v4111
        %4174 = vmatpush.bf16.msra.mxu0 %v4110
        %4175 = vmatpush.bf16.msra.mxu0 %v4109
        %4176 = vmatpush.bf16.msra.mxu0 %v4108
        %4177 = vmatpush.bf16.msra.mxu0 %v4107
        %4178 = vmatpush.bf16.msra.mxu0 %v4106
        %4179 = vmatpush.bf16.msra.mxu0 %v4105
        %4180 = vmatpush.bf16.msra.mxu0 %v4104
        %4181 = vmatmul.bf16.gmra.mxu0 %v3901
        %v4182 = vpop.f32.mrf.mxu0
        %v4183 = vadd.f32 %v4170, %v4182
        %v4184 = vpop.f32.mrf.mxu0
        %4185 = vdwg.mxu0
        %4186 = vmatpush.bf16.msra.mxu0 %v4119
        %4187 = vmatpush.bf16.msra.mxu0 %v4118
        %4188 = vmatpush.bf16.msra.mxu0 %v4117
        %4189 = vmatpush.bf16.msra.mxu0 %v4116
        %4190 = vmatpush.bf16.msra.mxu0 %v4115
        %4191 = vmatpush.bf16.msra.mxu0 %v4114
        %4192 = vmatpush.bf16.msra.mxu0 %v4113
        %4193 = vmatpush.bf16.msra.mxu0 %v4112
        %4194 = vmatmul.bf16.gmra.mxu0 %v3902
        %v4195 = vpop.f32.mrf.mxu0
        %v4196 = vadd.f32 %v4183, %v4195
        %v4197 = vpop.f32.mrf.mxu0
        %4198 = vdwg.mxu0
        %4199 = vmatpush.bf16.msra.mxu0 %v4127
        %4200 = vmatpush.bf16.msra.mxu0 %v4126
        %4201 = vmatpush.bf16.msra.mxu0 %v4125
        %4202 = vmatpush.bf16.msra.mxu0 %v4124
        %4203 = vmatpush.bf16.msra.mxu0 %v4123
        %4204 = vmatpush.bf16.msra.mxu0 %v4122
        %4205 = vmatpush.bf16.msra.mxu0 %v4121
        %4206 = vmatpush.bf16.msra.mxu0 %v4120
        %4207 = vmatmul.bf16.gmra.mxu0 %v3903
        %v4208 = vpop.f32.mrf.mxu0
        %v4209 = vadd.f32 %v4196, %v4208
        %v4210 = vpop.f32.mrf.mxu0
        %4211 = vdwg.mxu0
        %v4212 = vadd.f32 %v3783, %v4209
        %v4213 = vld [vmem:[%s2928 + $0x30] sm:$0xff]
        %v4214 = vld [vmem:[%s2928 + $0x38] sm:$0xff]
        %v4215 = vld [vmem:[%s2928 + $0x70] sm:$0xff]
        %v4216 = vld [vmem:[%s2928 + $0x78] sm:$0xff]
        %v4217 = vld [vmem:[%s2928 + $0xb0] sm:$0xff]
        %v4218 = vld [vmem:[%s2928 + $0xb8] sm:$0xff]
        %v4219 = vld [vmem:[%s2928 + $0xf0] sm:$0xff]
        %v4220 = vld [vmem:[%s2928 + $0xf8] sm:$0xff]
        %v4221 = vld [vmem:[%s2937 + $0xc] sm:$0xf]
        %v4223 = vperm.slane %v4221, 0
        %v4224 = vperm.slane %v4221, 1
        %v4225 = vperm.slane %v4221, 2
        %v4226 = vperm.slane %v4221, 3
        %v4239 = vunpack.c.l.b16 %v4213
        %v4240 = vunpack.c.h.b16 %v4213
        %v4241 = vunpack.c.l.b16 %v4214
        %v4242 = vunpack.c.h.b16 %v4214
        %v4243 = vunpack.c.l.b16 %v4215
        %v4244 = vunpack.c.h.b16 %v4215
        %v4245 = vunpack.c.l.b16 %v4216
        %v4246 = vunpack.c.h.b16 %v4216
        %v4247 = vunpack.c.l.b16 %v4217
        %v4248 = vunpack.c.h.b16 %v4217
        %v4249 = vunpack.c.l.b16 %v4218
        %v4250 = vunpack.c.h.b16 %v4218
        %v4251 = vunpack.c.l.b16 %v4219
        %v4252 = vunpack.c.h.b16 %v4219
        %v4253 = vunpack.c.l.b16 %v4220
        %v4254 = vunpack.c.h.b16 %v4220
        %v4255 = vpack.c.b16 %v4243, %v4239
        %v4256 = vpack.c.b16 %v4244, %v4240
        %v4257 = vpack.c.b16 %v4245, %v4241
        %v4258 = vpack.c.b16 %v4246, %v4242
        %v4259 = vpack.c.b16 %v4251, %v4247
        %v4260 = vpack.c.b16 %v4252, %v4248
        %v4261 = vpack.c.b16 %v4253, %v4249
        %v4262 = vpack.c.b16 %v4254, %v4250
        %4271 = vmatpush.bf16.msra.mxu0 0
        %4272 = vmatpush.bf16.msra.mxu0 0
        %4273 = vmatpush.bf16.msra.mxu0 0
        %4274 = vmatpush.bf16.msra.mxu0 0
        %4275 = vmatpush.bf16.msra.mxu0 0
        %4276 = vmatpush.bf16.msra.mxu0 0
        %4277 = vmatpush.bf16.msra.mxu0 %v4259
        %4278 = vmatpush.bf16.msra.mxu0 %v4255
        %4279 = vmatmul.bf16.gmra.mxu0 %v2989
        %v4280 = vpop.f32.mrf.mxu0
        %v4281 = vadd.f32 %v4223, %v4280
        %v4282 = vpop.f32.mrf.mxu0
        %4283 = vdwg.mxu0
        %4284 = vmatpush.bf16.msra.mxu0 0
        %4285 = vmatpush.bf16.msra.mxu0 0
        %4286 = vmatpush.bf16.msra.mxu0 0
        %4287 = vmatpush.bf16.msra.mxu0 0
        %4288 = vmatpush.bf16.msra.mxu0 0
        %4289 = vmatpush.bf16.msra.mxu0 0
        %4290 = vmatpush.bf16.msra.mxu0 %v4260
        %4291 = vmatpush.bf16.msra.mxu0 %v4256
        %4292 = vmatmul.bf16.gmra.mxu0 %v2989
        %v4293 = vpop.f32.mrf.mxu0
        %v4294 = vadd.f32 %v4224, %v4293
        %v4295 = vpop.f32.mrf.mxu0
        %4296 = vdwg.mxu0
        %4297 = vmatpush.bf16.msra.mxu0 0
        %4298 = vmatpush.bf16.msra.mxu0 0
        %4299 = vmatpush.bf16.msra.mxu0 0
        %4300 = vmatpush.bf16.msra.mxu0 0
        %4301 = vmatpush.bf16.msra.mxu0 0
        %4302 = vmatpush.bf16.msra.mxu0 0
        %4303 = vmatpush.bf16.msra.mxu0 %v4261
        %4304 = vmatpush.bf16.msra.mxu0 %v4257
        %4305 = vmatmul.bf16.gmra.mxu0 %v2989
        %v4306 = vpop.f32.mrf.mxu0
        %v4307 = vadd.f32 %v4225, %v4306
        %v4308 = vpop.f32.mrf.mxu0
        %4309 = vdwg.mxu0
        %4310 = vmatpush.bf16.msra.mxu0 0
        %4311 = vmatpush.bf16.msra.mxu0 0
        %4312 = vmatpush.bf16.msra.mxu0 0
        %4313 = vmatpush.bf16.msra.mxu0 0
        %4314 = vmatpush.bf16.msra.mxu0 0
        %4315 = vmatpush.bf16.msra.mxu0 0
        %4316 = vmatpush.bf16.msra.mxu0 %v4262
        %4317 = vmatpush.bf16.msra.mxu0 %v4258
        %4318 = vmatmul.bf16.gmra.mxu0 %v2989
        %v4319 = vpop.f32.mrf.mxu0
        %v4320 = vadd.f32 %v4226, %v4319
        %v4321 = vpop.f32.mrf.mxu0
        %4322 = vdwg.mxu0
        %v4323 = vmax.f32 %v4281, 0.0
        %v4324 = vmax.f32 %v4294, 0.0
        %v4325 = vmax.f32 %v4307, 0.0
        %v4326 = vmax.f32 %v4320, 0.0
        %v4327 = vpack.c.bf16 %v4323, %v4323
        %v4328 = vpack.c.bf16 %v4324, %v4324
        %v4329 = vpack.c.bf16 %v4325, %v4325
        %v4330 = vpack.c.bf16 %v4326, %v4326
        %v4331 = vld [vmem:[%s3051 + $0x300] sm:$0xf]
        %v4332 = vld [vmem:[%s3051 + $0x304] sm:$0xf]
        %v4333 = vld [vmem:[%s3051 + $0x308] sm:$0xf]
        %v4334 = vld [vmem:[%s3051 + $0x30c] sm:$0xf]
        %v4335 = vld [vmem:[%s3051 + $0x310] sm:$0xf]
        %v4336 = vld [vmem:[%s3051 + $0x314] sm:$0xf]
        %v4337 = vld [vmem:[%s3051 + $0x318] sm:$0xf]
        %v4338 = vld [vmem:[%s3051 + $0x31c] sm:$0xf]
        %v4339 = vld [vmem:[%s3051 + $0x320] sm:$0xf]
        %v4340 = vld [vmem:[%s3051 + $0x324] sm:$0xf]
        %v4341 = vld [vmem:[%s3051 + $0x328] sm:$0xf]
        %v4342 = vld [vmem:[%s3051 + $0x32c] sm:$0xf]
        %v4343 = vld [vmem:[%s3051 + $0x330] sm:$0xf]
        %v4344 = vld [vmem:[%s3051 + $0x334] sm:$0xf]
        %v4345 = vld [vmem:[%s3051 + $0x338] sm:$0xf]
        %v4346 = vld [vmem:[%s3051 + $0x33c] sm:$0xf]
        %v4347 = vld [vmem:[%s3051 + $0x340] sm:$0xf]
        %v4348 = vld [vmem:[%s3051 + $0x344] sm:$0xf]
        %v4349 = vld [vmem:[%s3051 + $0x348] sm:$0xf]
        %v4350 = vld [vmem:[%s3051 + $0x34c] sm:$0xf]
        %v4351 = vld [vmem:[%s3051 + $0x350] sm:$0xf]
        %v4352 = vld [vmem:[%s3051 + $0x354] sm:$0xf]
        %v4353 = vld [vmem:[%s3051 + $0x358] sm:$0xf]
        %v4354 = vld [vmem:[%s3051 + $0x35c] sm:$0xf]
        %v4355 = vld [vmem:[%s3051 + $0x360] sm:$0xf]
        %v4356 = vld [vmem:[%s3051 + $0x364] sm:$0xf]
        %v4357 = vld [vmem:[%s3051 + $0x368] sm:$0xf]
        %v4358 = vld [vmem:[%s3051 + $0x36c] sm:$0xf]
        %v4359 = vld [vmem:[%s3051 + $0x370] sm:$0xf]
        %v4360 = vld [vmem:[%s3051 + $0x374] sm:$0xf]
        %v4361 = vld [vmem:[%s3051 + $0x378] sm:$0xf]
        %v4362 = vld [vmem:[%s3051 + $0x37c] sm:$0xf]
        %v4363 = vld [vmem:[%s3051 + $0x380] sm:$0xf]
        %v4364 = vld [vmem:[%s3051 + $0x384] sm:$0xf]
        %v4365 = vld [vmem:[%s3051 + $0x388] sm:$0xf]
        %v4366 = vld [vmem:[%s3051 + $0x38c] sm:$0xf]
        %v4367 = vld [vmem:[%s3051 + $0x390] sm:$0xf]
        %v4368 = vld [vmem:[%s3051 + $0x394] sm:$0xf]
        %v4369 = vld [vmem:[%s3051 + $0x398] sm:$0xf]
        %v4370 = vld [vmem:[%s3051 + $0x39c] sm:$0xf]
        %v4371 = vld [vmem:[%s3051 + $0x3a0] sm:$0xf]
        %v4372 = vld [vmem:[%s3051 + $0x3a4] sm:$0xf]
        %v4373 = vld [vmem:[%s3051 + $0x3a8] sm:$0xf]
        %v4374 = vld [vmem:[%s3051 + $0x3ac] sm:$0xf]
        %v4375 = vld [vmem:[%s3051 + $0x3b0] sm:$0xf]
        %v4376 = vld [vmem:[%s3051 + $0x3b4] sm:$0xf]
        %v4377 = vld [vmem:[%s3051 + $0x3b8] sm:$0xf]
        %v4378 = vld [vmem:[%s3051 + $0x3bc] sm:$0xf]
        %v4379 = vld [vmem:[%s3051 + $0x3c0] sm:$0xf]
        %v4380 = vld [vmem:[%s3051 + $0x3c4] sm:$0xf]
        %v4381 = vld [vmem:[%s3051 + $0x3c8] sm:$0xf]
        %v4382 = vld [vmem:[%s3051 + $0x3cc] sm:$0xf]
        %v4383 = vld [vmem:[%s3051 + $0x3d0] sm:$0xf]
        %v4384 = vld [vmem:[%s3051 + $0x3d4] sm:$0xf]
        %v4385 = vld [vmem:[%s3051 + $0x3d8] sm:$0xf]
        %v4386 = vld [vmem:[%s3051 + $0x3dc] sm:$0xf]
        %v4387 = vld [vmem:[%s3051 + $0x3e0] sm:$0xf]
        %v4388 = vld [vmem:[%s3051 + $0x3e4] sm:$0xf]
        %v4389 = vld [vmem:[%s3051 + $0x3e8] sm:$0xf]
        %v4390 = vld [vmem:[%s3051 + $0x3ec] sm:$0xf]
        %v4391 = vld [vmem:[%s3051 + $0x3f0] sm:$0xf]
        %v4392 = vld [vmem:[%s3051 + $0x3f4] sm:$0xf]
        %v4393 = vld [vmem:[%s3051 + $0x3f8] sm:$0xf]
        %v4394 = vld [vmem:[%s3051 + $0x3fc] sm:$0xf]
        %v4459 = vunpack.c.l.b16 %v4331
        %v4460 = vunpack.c.l.b16 %v4332
        %v4461 = vunpack.c.l.b16 %v4333
        %v4462 = vunpack.c.l.b16 %v4334
        %v4463 = vunpack.c.l.b16 %v4335
        %v4464 = vunpack.c.l.b16 %v4336
        %v4465 = vunpack.c.l.b16 %v4337
        %v4466 = vunpack.c.l.b16 %v4338
        %v4467 = vunpack.c.l.b16 %v4339
        %v4468 = vunpack.c.l.b16 %v4340
        %v4469 = vunpack.c.l.b16 %v4341
        %v4470 = vunpack.c.l.b16 %v4342
        %v4471 = vunpack.c.l.b16 %v4343
        %v4472 = vunpack.c.l.b16 %v4344
        %v4473 = vunpack.c.l.b16 %v4345
        %v4474 = vunpack.c.l.b16 %v4346
        %v4475 = vunpack.c.l.b16 %v4347
        %v4476 = vunpack.c.l.b16 %v4348
        %v4477 = vunpack.c.l.b16 %v4349
        %v4478 = vunpack.c.l.b16 %v4350
        %v4479 = vunpack.c.l.b16 %v4351
        %v4480 = vunpack.c.l.b16 %v4352
        %v4481 = vunpack.c.l.b16 %v4353
        %v4482 = vunpack.c.l.b16 %v4354
        %v4483 = vunpack.c.l.b16 %v4355
        %v4484 = vunpack.c.l.b16 %v4356
        %v4485 = vunpack.c.l.b16 %v4357
        %v4486 = vunpack.c.l.b16 %v4358
        %v4487 = vunpack.c.l.b16 %v4359
        %v4488 = vunpack.c.l.b16 %v4360
        %v4489 = vunpack.c.l.b16 %v4361
        %v4490 = vunpack.c.l.b16 %v4362
        %v4491 = vunpack.c.l.b16 %v4363
        %v4492 = vunpack.c.l.b16 %v4364
        %v4493 = vunpack.c.l.b16 %v4365
        %v4494 = vunpack.c.l.b16 %v4366
        %v4495 = vunpack.c.l.b16 %v4367
        %v4496 = vunpack.c.l.b16 %v4368
        %v4497 = vunpack.c.l.b16 %v4369
        %v4498 = vunpack.c.l.b16 %v4370
        %v4499 = vunpack.c.l.b16 %v4371
        %v4500 = vunpack.c.l.b16 %v4372
        %v4501 = vunpack.c.l.b16 %v4373
        %v4502 = vunpack.c.l.b16 %v4374
        %v4503 = vunpack.c.l.b16 %v4375
        %v4504 = vunpack.c.l.b16 %v4376
        %v4505 = vunpack.c.l.b16 %v4377
        %v4506 = vunpack.c.l.b16 %v4378
        %v4507 = vunpack.c.l.b16 %v4379
        %v4508 = vunpack.c.l.b16 %v4380
        %v4509 = vunpack.c.l.b16 %v4381
        %v4510 = vunpack.c.l.b16 %v4382
        %v4511 = vunpack.c.l.b16 %v4383
        %v4512 = vunpack.c.l.b16 %v4384
        %v4513 = vunpack.c.l.b16 %v4385
        %v4514 = vunpack.c.l.b16 %v4386
        %v4515 = vunpack.c.l.b16 %v4387
        %v4516 = vunpack.c.l.b16 %v4388
        %v4517 = vunpack.c.l.b16 %v4389
        %v4518 = vunpack.c.l.b16 %v4390
        %v4519 = vunpack.c.l.b16 %v4391
        %v4520 = vunpack.c.l.b16 %v4392
        %v4521 = vunpack.c.l.b16 %v4393
        %v4522 = vunpack.c.l.b16 %v4394
        %v4523 = vpack.c.b16 %v4460, %v4459
        %v4524 = vpack.c.b16 %v4462, %v4461
        %v4525 = vpack.c.b16 %v4464, %v4463
        %v4526 = vpack.c.b16 %v4466, %v4465
        %v4527 = vpack.c.b16 %v4468, %v4467
        %v4528 = vpack.c.b16 %v4470, %v4469
        %v4529 = vpack.c.b16 %v4472, %v4471
        %v4530 = vpack.c.b16 %v4474, %v4473
        %v4531 = vpack.c.b16 %v4476, %v4475
        %v4532 = vpack.c.b16 %v4478, %v4477
        %v4533 = vpack.c.b16 %v4480, %v4479
        %v4534 = vpack.c.b16 %v4482, %v4481
        %v4535 = vpack.c.b16 %v4484, %v4483
        %v4536 = vpack.c.b16 %v4486, %v4485
        %v4537 = vpack.c.b16 %v4488, %v4487
        %v4538 = vpack.c.b16 %v4490, %v4489
        %v4539 = vpack.c.b16 %v4492, %v4491
        %v4540 = vpack.c.b16 %v4494, %v4493
        %v4541 = vpack.c.b16 %v4496, %v4495
        %v4542 = vpack.c.b16 %v4498, %v4497
        %v4543 = vpack.c.b16 %v4500, %v4499
        %v4544 = vpack.c.b16 %v4502, %v4501
        %v4545 = vpack.c.b16 %v4504, %v4503
        %v4546 = vpack.c.b16 %v4506, %v4505
        %v4547 = vpack.c.b16 %v4508, %v4507
        %v4548 = vpack.c.b16 %v4510, %v4509
        %v4549 = vpack.c.b16 %v4512, %v4511
        %v4550 = vpack.c.b16 %v4514, %v4513
        %v4551 = vpack.c.b16 %v4516, %v4515
        %v4552 = vpack.c.b16 %v4518, %v4517
        %v4553 = vpack.c.b16 %v4520, %v4519
        %v4554 = vpack.c.b16 %v4522, %v4521
        %4587 = vmatpush.bf16.msra.mxu0 %v4530
        %4588 = vmatpush.bf16.msra.mxu0 %v4529
        %4589 = vmatpush.bf16.msra.mxu0 %v4528
        %4590 = vmatpush.bf16.msra.mxu0 %v4527
        %4591 = vmatpush.bf16.msra.mxu0 %v4526
        %4592 = vmatpush.bf16.msra.mxu0 %v4525
        %4593 = vmatpush.bf16.msra.mxu0 %v4524
        %4594 = vmatpush.bf16.msra.mxu0 %v4523
        %4595 = vmatmul.bf16.gmra.mxu0 %v4327
        %v4596 = vpop.f32.mrf.mxu0
        %v4597 = vadd.f32 0.0, %v4596
        %v4598 = vpop.f32.mrf.mxu0
        %4599 = vdwg.mxu0
        %4600 = vmatpush.bf16.msra.mxu0 %v4538
        %4601 = vmatpush.bf16.msra.mxu0 %v4537
        %4602 = vmatpush.bf16.msra.mxu0 %v4536
        %4603 = vmatpush.bf16.msra.mxu0 %v4535
        %4604 = vmatpush.bf16.msra.mxu0 %v4534
        %4605 = vmatpush.bf16.msra.mxu0 %v4533
        %4606 = vmatpush.bf16.msra.mxu0 %v4532
        %4607 = vmatpush.bf16.msra.mxu0 %v4531
        %4608 = vmatmul.bf16.gmra.mxu0 %v4328
        %v4609 = vpop.f32.mrf.mxu0
        %v4610 = vadd.f32 %v4597, %v4609
        %v4611 = vpop.f32.mrf.mxu0
        %4612 = vdwg.mxu0
        %4613 = vmatpush.bf16.msra.mxu0 %v4546
        %4614 = vmatpush.bf16.msra.mxu0 %v4545
        %4615 = vmatpush.bf16.msra.mxu0 %v4544
        %4616 = vmatpush.bf16.msra.mxu0 %v4543
        %4617 = vmatpush.bf16.msra.mxu0 %v4542
        %4618 = vmatpush.bf16.msra.mxu0 %v4541
        %4619 = vmatpush.bf16.msra.mxu0 %v4540
        %4620 = vmatpush.bf16.msra.mxu0 %v4539
        %4621 = vmatmul.bf16.gmra.mxu0 %v4329
        %v4622 = vpop.f32.mrf.mxu0
        %v4623 = vadd.f32 %v4610, %v4622
        %v4624 = vpop.f32.mrf.mxu0
        %4625 = vdwg.mxu0
        %4626 = vmatpush.bf16.msra.mxu0 %v4554
        %4627 = vmatpush.bf16.msra.mxu0 %v4553
        %4628 = vmatpush.bf16.msra.mxu0 %v4552
        %4629 = vmatpush.bf16.msra.mxu0 %v4551
        %4630 = vmatpush.bf16.msra.mxu0 %v4550
        %4631 = vmatpush.bf16.msra.mxu0 %v4549
        %4632 = vmatpush.bf16.msra.mxu0 %v4548
        %4633 = vmatpush.bf16.msra.mxu0 %v4547
        %4634 = vmatmul.bf16.gmra.mxu0 %v4330
        %v4635 = vpop.f32.mrf.mxu0
        %v4636 = vadd.f32 %v4623, %v4635
        %v4637 = vpop.f32.mrf.mxu0
        %4638 = vdwg.mxu0
        %v4639 = vadd.f32 %v4212, %v4636
        %v4640 = vadd.f32 %v2926, %v4639
        %v4641 = vperm.slane %v2556, 6
        %v4642 = vadd.f32 %v4640, %v4641
        %v4643 = vsel %vm456, %v4642, 0.0
        %4644 = vadd.xlane.f32.xlu0 %v4643
        %v4645 = vpop.xlane.xlu0 %4644
        %v4646 = vmul.f32 %v4645, %v792
        %v4647 = vsub.f32 %v4642, %v4646
        %v4648 = vmul.f32 %v4647, %v4647
        %v4649 = vsel %vm456, %v4648, 0.0
        %4650 = vadd.xlane.f32.xlu0 %v4649
        %v4651 = vpop.xlane.xlu0 %4650
        %v4652 = vmul.f32 %v4651, %v792
        %v4653 = vadd.f32 %v4652, 1e-05
        %v4654 = vrsqrt.pop %v4653
        %v4655 = vmul.f32 %v4654, %v4653
        %v4656 = vmul.f32 %v4655, %v4654
        %v4657 = vmul.f32 0.5, %v4656
        %v4658 = vsub.f32 1.5, %v4657
        %v4659 = vmul.f32 %v4654, %v4658
        %vm4660 = vweird.f32 %v4653
        %vm4661 = vweird.f32 %v4654
        %vm4662 = vmor %vm4660, %vm4661
        %v4663 = vsel %vm4662, %v4654, %v4659
        %v4664 = vmul.f32 %v4647, %v4663
        %v4665 = vperm.slane %v2556, 7
        %v4666 = vmul.f32 %v4664, %v4665
        %v4667 = vperm.slane %v2557, 0
        %v4668 = vadd.f32 %v4666, %v4667
        %v4669 = vpack.c.bf16 %v4668, %v4668
        %v4670 = vld [vmem:[%s7] sm:$0xf]
        %v4671 = vld [vmem:[%s7 + $0x4] sm:$0xf]
        %v4672 = vld [vmem:[%s7 + $0x8] sm:$0xf]
        %v4673 = vld [vmem:[%s7 + $0xc] sm:$0xf]
        %v4674 = vld [vmem:[%s8] sm:$0x1]
        %v4676 = vperm.slane %v4674, 0
        %v4682 = vunpack.c.l.b16 %v4670
        %v4683 = vunpack.c.l.b16 %v4671
        %v4684 = vunpack.c.l.b16 %v4672
        %v4685 = vunpack.c.l.b16 %v4673
        %v4686 = vpack.c.b16 %v4683, %v4682
        %v4687 = vpack.c.b16 %v4685, %v4684
        %v4691 = vsel %vm456, %v4669, 0
        %4693 = vmatpush.bf16.msra.mxu0 0
        %4694 = vmatpush.bf16.msra.mxu0 0
        %4695 = vmatpush.bf16.msra.mxu0 0
        %4696 = vmatpush.bf16.msra.mxu0 0
        %4697 = vmatpush.bf16.msra.mxu0 0
        %4698 = vmatpush.bf16.msra.mxu0 0
        %4699 = vmatpush.bf16.msra.mxu0 %v4687
        %4700 = vmatpush.bf16.msra.mxu0 %v4686
        %4701 = vmatmul.bf16.gmra.mxu0 %v4691
        %v4702 = vpop.f32.mrf.mxu0
        %v4703 = vadd.f32 %v4676, %v4702
        %v4704 = vpop.f32.mrf.mxu0
        %4705 = vdwg.mxu0
        %4706 = vst [vmem:[%s323] sm:$0xff] %v4703
        %s4707 = sand.u32 %s225, 1
        %s4708 = scalar_lea.sflag [#allocation3], %s4707
        %s4709 = sand.u32 %s225, 1
        %s4710 = smul.addr %s4709, 8
        %s4711 = scalar_lea.vmem [#allocation2], %s4710
        // Predicated region
        $region57: #{model_forward.1} parent=55 // pred_check
          %p4712 = pneg %p235
        $region58: #{model_forward.1} parent=55 // pred_check_branch
          %4714 = sbr.rel (%p4712) target = $region60
        $region59: #{model_forward.1} parent=55 // pred_region
          %4716 = vsyncadd %s4708, 0
          %s4717 = smul.addr %s23, 8
          %s4718 = scalar_lea.hbm %s9, %s4717
          %s4720 = sshll.u32 %s4711, 4
          %s4721 = int_to_ptr.vmem [resolvable:$true] %s4720
          %s4722 = sshll.u32 %s4718, 4
          %s4723 = int_to_ptr.hbm [resolvable:$true] %s4722
          %4725 = dma.vmem_to_hbm [thread:$0]  %s4721, 128, %s4723, %s4708
        $region60: #{model_forward.1} parent=55 // pred_fallthru
          _
      $region56: #{model_forward.1} parent=5 // pred_fallthru
        _
      %p4726 = scmp.le.s32.totalorder 2, %s18
      // Predicated region
      $region61: #{model_forward.1} parent=5 // pred_check
        %p4727 = pneg %p4726
      $region62: #{model_forward.1} parent=5 // pred_check_branch
        %4729 = sbr.rel (%p4727) target = $region64
      $region63: #{model_forward.1} parent=5 // pred_region
        %s4730 = ssub.s32 %s18, 2
        // Predicated region
        $region65: #{model_forward.1} parent=63 // pred_check
          %p4731 = pneg %p241
        $region66: #{model_forward.1} parent=63 // pred_check_branch
          %4733 = sbr.rel (%p4731) target = $region68
        $region67: #{model_forward.1} parent=63 // pred_region
          %s4734 = sand.u32 %s226, 1
          %s4735 = scalar_lea.sflag [#allocation3], %s4734
          %s4736 = sand.u32 %s226, 1
          %s4737 = smul.addr %s4736, 8
          %s4738 = scalar_lea.vmem [#allocation2], %s4737
          %4740 = dma.done %s4735, 128
        $region68: #{model_forward.1} parent=63 // pred_fallthru
          _
      $region64: #{model_forward.1} parent=5 // pred_fallthru
        _
    $region6: #{model_forward.1} parent=1 // loop_footer
      %s22 = sadd.s32 1, %s18
    $region7: #{model_forward.1} parent=1 // loop_footer_branch
      %17 = sbr.rel target = $region3
    $region8: #{model_forward.1} parent=1 // loop_exit
      _
    %4741 = vsyncpa [#allocation3], 1
    %s4742 = scalar_lea.sflag [#allocation3], 1
    %4743 = vsyncpa %s4742, 1

</llo_original>
